<compile_context>
chip_gen: v6e
topology: v6e:2x2x1
jax: 0.10.0
libtpu: 0.0.40
codegen_flags: <defaults>
</compile_context>

<pallas_src>
import jax
import jax.numpy as jnp
from jax.experimental import pallas as pl
from jax.experimental.pallas import tpu as pltpu


def _round_up(x, m):
    return ((x + m - 1) // m) * m


def _make_kernel(TH, H, W, nH, Cpi, Cpo, use_proj):
    THW = TH * W
    M1 = (TH + 2) * W

    def _body(x_ref, w1_ref, b1_ref, w2_ref, b2_ref, ws_ref, bs_ref, o_ref):
        xw = x_ref[0]                                              # (TH+4, W+2, Cpi) bf16

        # ---- conv1: kw taps fused onto the lane axis (K = 3*Cpi), kh = row slice.
        xcat = jnp.concatenate(
            [xw[:, 0:W], xw[:, 1:W + 1], xw[:, 2:W + 2]], axis=-1)  # (TH+4, W, 3*Cpi)
        acc1 = jnp.dot(xcat[0:TH + 2].reshape(M1, 3 * Cpi), w1_ref[0],
                       preferred_element_type=jnp.float32)
        acc1 = acc1 + jnp.dot(xcat[1:TH + 3].reshape(M1, 3 * Cpi), w1_ref[1],
                              preferred_element_type=jnp.float32)
        acc1 = acc1 + jnp.dot(xcat[2:TH + 4].reshape(M1, 3 * Cpi), w1_ref[2],
                              preferred_element_type=jnp.float32)
        # BN1 scale folded into w1; bias add + ReLU only.
        y = jnp.maximum(acc1 + b1_ref[...], 0.0).reshape(TH + 2, W, Cpo)

        # Zero conv1-output rows outside the image so conv2 sees true zero padding.
        r0 = (pl.program_id(0) % nH) * TH
        row_img = r0 - 1 + jax.lax.broadcasted_iota(jnp.int32, (TH + 2, W), 0)
        rowmask = jnp.logical_and(row_img >= 0, row_img < H).astype(jnp.float32)
        yb = (y * rowmask[:, :, None]).astype(jnp.bfloat16)        # (TH+2, W, Cpo)

        # ---- conv2: same lane fusion (K = 3*Cpo); kh via shifted row ranges,
        #      first tap assigns (no zero init), no zero-row buffer materialized.
        zcol = jnp.zeros((TH + 2, 1, Cpo), jnp.bfloat16)
        ypw = jnp.concatenate([zcol, yb, zcol], axis=1)            # (TH+2, W+2, Cpo)
        ycat = jnp.concatenate(
            [ypw[:, 0:W], ypw[:, 1:W + 1], ypw[:, 2:W + 2]], axis=-1)  # (TH+2, W, 3*Cpo)
        acc2 = jnp.dot(ycat[0:TH].reshape(THW, 3 * Cpo), w2_ref[0],
                       preferred_element_type=jnp.float32)
        acc2 = acc2 + jnp.dot(ycat[1:TH + 1].reshape(THW, 3 * Cpo), w2_ref[1],
                              preferred_element_type=jnp.float32)
        acc2 = acc2 + jnp.dot(ycat[2:TH + 2].reshape(THW, 3 * Cpo), w2_ref[2],
                              preferred_element_type=jnp.float32)
        f = acc2 + b2_ref[...]                                     # BN2 (scale folded)

        # ---- shortcut: un-shifted center of the x window (image rows r0..r0+TH-1).
        xc = xw[2:TH + 2, 1:W + 1, :].reshape(THW, Cpi)
        if use_proj:
            sc = jnp.dot(xc, ws_ref[...], preferred_element_type=jnp.float32) + bs_ref[...]
        else:
            sc = xc.astype(jnp.float32)                            # identity shortcut

        o_ref[0] = jnp.maximum(f + sc, 0.0).reshape(TH, W, Cpo).astype(o_ref.dtype)

    if use_proj:
        def kernel(x, w1, b1, w2, b2, ws, bs, o):
            _body(x, w1, b1, w2, b2, ws, bs, o)
    else:
        def kernel(x, w1, b1, w2, b2, o):
            _body(x, w1, b1, w2, b2, None, None, o)
    return kernel


def _fold_bn(bn, C, Cp, eps=1e-5):
    """Eval-mode BN -> per-channel (scale, bias), zero-padded to Cp lanes."""
    scale = (bn["gamma"] / jnp.sqrt(bn["var"] + eps)).astype(jnp.float32)
    bias = (bn["beta"] - bn["mean"] * scale).astype(jnp.float32)
    s = jnp.zeros((Cp,), jnp.float32).at[:C].set(scale)
    b = jnp.zeros((1, Cp), jnp.float32).at[0, :C].set(bias)
    return s, b


def residual_block_pallas(x_nchw, params, *, row_tile=8):
    """x_nchw: (N, Cin, H, W) float32 (PyTorch layout).  Returns (N, Cout, H, W)."""
    N, Cin, H, W = x_nchw.shape
    Cout = params["w1"].shape[0]
    use_proj = "ws" in params
    assert params.get("stride", 1) == 1, "only stride=1 is implemented"
    assert params.get("groups", 1) == 1, "only groups=1 is implemented"
    if not use_proj:
        assert Cin == Cout, "identity shortcut requires in_channels == out_channels"

    Cpi = _round_up(Cin, 128)      # lane-dense padded channel counts
    Cpo = _round_up(Cout, 128)
    TH = min(row_tile, H)          # output rows per grid step
    nH = pl.cdiv(H, TH)
    Hp = nH * TH

    # ---- layout plumbing (XLA): NCHW -> NHWC bf16, pad W by 1, H by 2 (+ row-tile
    #      overhang), channels to a 128-lane tile, then cut H into overlapping row
    #      tiles with a 2-row halo each side (fused 3x3->3x3 needs 2 input halo rows).
    x_nhwc = jnp.transpose(x_nchw, (0, 2, 3, 1)).astype(jnp.bfloat16)
    xp = jnp.pad(x_nhwc, ((0, 0), (2, 2 + Hp - H), (1, 1), (0, Cpi - Cin)))
    x_tiles = jnp.stack([xp[:, h * TH:h * TH + TH + 4] for h in range(nH)], axis=1)
    x_tiles = x_tiles.reshape(N * nH, TH + 4, W + 2, Cpi)

    # ---- weight packing: BN scales folded into the matmul weights (biases stay adds).
    #      Tap order matches the in-kernel lane fusion: K index = kw*C + c, kh-major.
    s1, b1 = _fold_bn(params["bn1"], Cout, Cpo)
    s2, b2 = _fold_bn(params["bn2"], Cout, Cpo)
    w1t = jnp.transpose(params["w1"], (2, 3, 1, 0)).astype(jnp.float32)   # (3,3,Cin,Cout)
    w1p = jnp.zeros((3, 3, Cpi, Cpo), jnp.float32).at[:, :, :Cin, :Cout].set(w1t)
    w1p = (w1p * s1).reshape(3, 3 * Cpi, Cpo).astype(jnp.bfloat16)
    w2t = jnp.transpose(params["w2"], (2, 3, 1, 0)).astype(jnp.float32)   # (3,3,Cout,Cout)
    w2p = jnp.zeros((3, 3, Cpo, Cpo), jnp.float32).at[:, :, :Cout, :Cout].set(w2t)
    w2p = (w2p * s2).reshape(3, 3 * Cpo, Cpo).astype(jnp.bfloat16)

    args = [x_tiles, w1p, b1, w2p, b2]
    in_specs = [
        pl.BlockSpec((1, TH + 4, W + 2, Cpi), lambda g: (g, 0, 0, 0)),
        pl.BlockSpec((3, 3 * Cpi, Cpo), lambda g: (0, 0, 0)),
        pl.BlockSpec((1, Cpo), lambda g: (0, 0)),
        pl.BlockSpec((3, 3 * Cpo, Cpo), lambda g: (0, 0, 0)),
        pl.BlockSpec((1, Cpo), lambda g: (0, 0)),
    ]
    if use_proj:
        ss, bs = _fold_bn(params["bns"], Cout, Cpo)
        ws = params["ws"][:, :, 0, 0].astype(jnp.float32)                 # (Cout, Cin)
        wsp = jnp.zeros((Cpi, Cpo), jnp.float32).at[:Cin, :Cout].set(ws.T)
        wsp = (wsp * ss).astype(jnp.bfloat16)
        args += [wsp, bs]
        in_specs += [
            pl.BlockSpec((Cpi, Cpo), lambda g: (0, 0)),
            pl.BlockSpec((1, Cpo), lambda g: (0, 0)),
        ]

    flops = int(2 * N * nH * Cpo * ((TH + 2) * W * 9 * Cpi + TH * W * 9 * Cpo
                                    + (TH * W * Cpi if use_proj else 0)))
    bytes_accessed = int(x_tiles.size * 2 + w1p.size * 2 + w2p.size * 2
                         + (Cpi * Cpo * 2 if use_proj else 0)
                         + N * Hp * W * Cpo * 2)

    kernel = _make_kernel(TH, H, W, nH, Cpi, Cpo, use_proj)
    out = pl.pallas_call(
        kernel,
        out_shape=jax.ShapeDtypeStruct((N * nH, TH, W, Cpo), jnp.bfloat16),
        grid=(N * nH,),
        in_specs=in_specs,
        out_specs=pl.BlockSpec((1, TH, W, Cpo), lambda g: (g, 0, 0, 0)),
        compiler_params=pltpu.CompilerParams(
            dimension_semantics=("parallel",),
            vmem_limit_bytes=32 * 1024 * 1024),
        cost_estimate=pl.CostEstimate(flops=flops, transcendentals=0,
                                      bytes_accessed=bytes_accessed),
    )(*args)

    # layout plumbing back: (N*nH, TH, W, Cpo) -> NCHW, drop channel/row padding
    out = out.reshape(N, Hp, W, Cpo)[:, :H, :, :Cout]
    return jnp.transpose(out, (0, 3, 1, 2)).astype(x_nchw.dtype)


# --------------------- deterministic parameter init ---------------------

def init_params(key, in_channels, out_channels, stride=1, groups=1):
    assert stride == 1, "this Pallas kernel implements stride=1 only"
    assert groups == 1, "this Pallas kernel implements groups=1 only"
    ks = jax.random.split(key, 6)

    def bn_init(k):
        a, b, c, d = jax.random.split(k, 4)
        return dict(
            gamma=jax.random.uniform(a, (out_channels,), minval=0.5, maxval=1.5),
            beta=jax.random.normal(b, (out_channels,)) * 0.1,
            mean=jax.random.normal(c, (out_channels,)) * 0.1,
            var=jax.random.uniform(d, (out_channels,), minval=0.5, maxval=1.5),
        )

    p = dict(
        w1=jax.random.normal(ks[0], (out_channels, in_channels, 3, 3)) * 0.2,
        bn1=bn_init(ks[1]),
        w2=jax.random.normal(ks[2], (out_channels, out_channels, 3, 3)) * 0.2,
        bn2=bn_init(ks[3]),
        stride=stride,
        groups=groups,
    )
    if stride != 1 or in_channels != out_channels:
        p["ws"] = jax.random.normal(ks[4], (out_channels, in_channels, 1, 1)) * 0.2
        p["bns"] = bn_init(ks[5])
    return p


# --------------------- pure-JAX f32 reference (for checking) ---------------------

def residual_block_ref(x, params):
    def conv(x, w, pad):
        return jax.lax.conv_general_dilated(
            x, w, (1, 1), ((pad, pad), (pad, pad)),
            dimension_numbers=("NCHW", "OIHW", "NCHW"))

    def bn(x, b):
        s = b["gamma"] / jnp.sqrt(b["var"] + 1e-5)
        o = b["beta"] - b["mean"] * s
        return x * s[None, :, None, None] + o[None, :, None, None]

    y = jnp.maximum(bn(conv(x, params["w1"], 1), params["bn1"]), 0.0)
    y = bn(conv(y, params["w2"], 1), params["bn2"])
    if "ws" in params:
        sc = bn(conv(x, params["ws"], 0), params["bns"])
    else:
        sc = x
    return jnp.maximum(y + sc, 0.0)


if __name__ == "__main__":
    key = jax.random.PRNGKey(0)
    kx, kp1, kp2, kx3 = jax.random.split(key, 4)

    # Tolerances sized for bf16 matmul operands / bf16 output vs f32 reference.
    ATOL, RTOL = 1.5e-1, 5e-2

    # Case 1: identity shortcut; H split into two row tiles (exercises the halo path).
    x = jax.random.normal(kx, (2, 4, 16, 16), jnp.float32)
    p = init_params(kp1, 4, 4)
    out = residual_block_pallas(x, p, row_tile=8)
    jax.block_until_ready(out)
    ref = residual_block_ref(x, p)
    assert out.shape == (2, 4, 16, 16)
    assert jnp.allclose(out, ref, atol=ATOL, rtol=RTOL), float(jnp.max(jnp.abs(out - ref)))

    # Case 2: projection shortcut (1x1 conv + BN, in_channels != out_channels).
    p2 = init_params(kp2, 4, 8)
    out2 = residual_block_pallas(x, p2, row_tile=8)
    jax.block_until_ready(out2)
    ref2 = residual_block_ref(x, p2)
    assert out2.shape == (2, 8, 16, 16)
    assert jnp.allclose(out2, ref2, atol=ATOL, rtol=RTOL), float(jnp.max(jnp.abs(out2 - ref2)))

    # Case 3: H not a multiple of the row tile (exercises the overhang row mask).
    x3 = jax.random.normal(kx3, (1, 4, 10, 16), jnp.float32)
    out3 = residual_block_pallas(x3, p, row_tile=8)
    jax.block_until_ready(out3)
    ref3 = residual_block_ref(x3, p)
    assert out3.shape == (1, 4, 10, 16)
    assert jnp.allclose(out3, ref3, atol=ATOL, rtol=RTOL), float(jnp.max(jnp.abs(out3 - ref3)))

    print("KERNEL_OK")
</pallas_src>

<mosaic_0001>
module attributes {stable_mosaic.version = 11 : i64} {
  func.func @kernel(%arg0: i32, %arg1: memref<1x12x18x128xbf16, #tpu.memory_space<vmem>>, %arg2: memref<3x384x128xbf16, #tpu.memory_space<vmem>>, %arg3: memref<1x128xf32, #tpu.memory_space<vmem>>, %arg4: memref<3x384x128xbf16, #tpu.memory_space<vmem>>, %arg5: memref<1x128xf32, #tpu.memory_space<vmem>>, %arg6: memref<1x8x16x128xbf16, #tpu.memory_space<vmem>>) attributes {dimension_semantics = [#tpu.dimension_semantics<parallel>], iteration_bounds = array<i64: 4>, scalar_prefetch = 0 : i64, scratch_operands = 0 : i64, tpu.core_type = #tpu.core_type<tc>, window_params = [{transform_indices = @transform_0, window_bounds = array<i64: 1, 12, 18, 128>}, {pipeline_mode = #tpu.pipeline_mode<synchronous>, transform_indices = @transform_1, window_bounds = array<i64: 3, 384, 128>}, {pipeline_mode = #tpu.pipeline_mode<synchronous>, transform_indices = @transform_2, window_bounds = array<i64: 1, 128>}, {pipeline_mode = #tpu.pipeline_mode<synchronous>, transform_indices = @transform_3, window_bounds = array<i64: 3, 384, 128>}, {pipeline_mode = #tpu.pipeline_mode<synchronous>, transform_indices = @transform_4, window_bounds = array<i64: 1, 128>}, {transform_indices = @transform_5, window_bounds = array<i64: 1, 8, 16, 128>}]} {
    %c0 = arith.constant 0 : index
    %c0_0 = arith.constant 0 : index
    %c0_1 = arith.constant 0 : index
    %c0_2 = arith.constant 0 : index
    %0 = vector.load %arg1[%c0, %c0_0, %c0_1, %c0_2] : memref<1x12x18x128xbf16, #tpu.memory_space<vmem>>, vector<1x12x18x128xbf16>
    %1 = vector.shape_cast %0 : vector<1x12x18x128xbf16> to vector<12x18x128xbf16>
    %2 = vector.extract_strided_slice %1 {offsets = [0, 0, 0], sizes = [12, 16, 128], strides = [1, 1, 1]} : vector<12x18x128xbf16> to vector<12x16x128xbf16>
    %3 = vector.extract_strided_slice %1 {offsets = [0, 1, 0], sizes = [12, 16, 128], strides = [1, 1, 1]} : vector<12x18x128xbf16> to vector<12x16x128xbf16>
    %4 = vector.extract_strided_slice %1 {offsets = [0, 2, 0], sizes = [12, 16, 128], strides = [1, 1, 1]} : vector<12x18x128xbf16> to vector<12x16x128xbf16>
    %5 = tpu.concatenate %2, %3, %4 in 2 : vector<12x16x128xbf16>, vector<12x16x128xbf16>, vector<12x16x128xbf16> -> vector<12x16x384xbf16>
    %6 = vector.extract_strided_slice %5 {offsets = [0, 0, 0], sizes = [10, 16, 384], strides = [1, 1, 1]} : vector<12x16x384xbf16> to vector<10x16x384xbf16>
    %7 = vector.shape_cast %6 : vector<10x16x384xbf16> to vector<160x384xbf16>
    %c0_3 = arith.constant 0 : index
    %c0_4 = arith.constant 0 : index
    %c0_5 = arith.constant 0 : index
    %8 = vector.load %arg2[%c0_3, %c0_4, %c0_5] : memref<3x384x128xbf16, #tpu.memory_space<vmem>>, vector<1x384x128xbf16>
    %9 = vector.shape_cast %8 : vector<1x384x128xbf16> to vector<384x128xbf16>
    %cst = arith.constant dense<0.000000e+00> : vector<160x128xf32>
    %10 = tpu.matmul %7, %9, %cst {dimension_numbers = #tpu.dot_dimension_numbers<[1], [0], [0], [1], [0, 0, 1, 1], [], []>} : vector<160x384xbf16>, vector<384x128xbf16>, vector<160x128xf32> -> vector<160x128xf32>
    %11 = vector.extract_strided_slice %5 {offsets = [1, 0, 0], sizes = [10, 16, 384], strides = [1, 1, 1]} : vector<12x16x384xbf16> to vector<10x16x384xbf16>
    %12 = vector.shape_cast %11 : vector<10x16x384xbf16> to vector<160x384xbf16>
    %c1 = arith.constant 1 : index
    %c0_6 = arith.constant 0 : index
    %c0_7 = arith.constant 0 : index
    %13 = vector.load %arg2[%c1, %c0_6, %c0_7] : memref<3x384x128xbf16, #tpu.memory_space<vmem>>, vector<1x384x128xbf16>
    %14 = vector.shape_cast %13 : vector<1x384x128xbf16> to vector<384x128xbf16>
    %cst_8 = arith.constant dense<0.000000e+00> : vector<160x128xf32>
    %15 = tpu.matmul %12, %14, %cst_8 {dimension_numbers = #tpu.dot_dimension_numbers<[1], [0], [0], [1], [0, 0, 1, 1], [], []>} : vector<160x384xbf16>, vector<384x128xbf16>, vector<160x128xf32> -> vector<160x128xf32>
    %16 = arith.addf %10, %15 : vector<160x128xf32>
    %17 = vector.extract_strided_slice %5 {offsets = [2, 0, 0], sizes = [10, 16, 384], strides = [1, 1, 1]} : vector<12x16x384xbf16> to vector<10x16x384xbf16>
    %18 = vector.shape_cast %17 : vector<10x16x384xbf16> to vector<160x384xbf16>
    %c2 = arith.constant 2 : index
    %c0_9 = arith.constant 0 : index
    %c0_10 = arith.constant 0 : index
    %19 = vector.load %arg2[%c2, %c0_9, %c0_10] : memref<3x384x128xbf16, #tpu.memory_space<vmem>>, vector<1x384x128xbf16>
    %20 = vector.shape_cast %19 : vector<1x384x128xbf16> to vector<384x128xbf16>
    %cst_11 = arith.constant dense<0.000000e+00> : vector<160x128xf32>
    %21 = tpu.matmul %18, %20, %cst_11 {dimension_numbers = #tpu.dot_dimension_numbers<[1], [0], [0], [1], [0, 0, 1, 1], [], []>} : vector<160x384xbf16>, vector<384x128xbf16>, vector<160x128xf32> -> vector<160x128xf32>
    %22 = arith.addf %16, %21 : vector<160x128xf32>
    %c0_12 = arith.constant 0 : index
    %c0_13 = arith.constant 0 : index
    %23 = vector.load %arg3[%c0_12, %c0_13] : memref<1x128xf32, #tpu.memory_space<vmem>>, vector<1x128xf32>
    %24 = vector.broadcast %23 : vector<1x128xf32> to vector<160x128xf32>
    %25 = arith.addf %22, %24 : vector<160x128xf32>
    %cst_14 = arith.constant 0.000000e+00 : f32
    %26 = vector.broadcast %cst_14 : f32 to vector<160x128xf32>
    %27 = arith.maximumf %25, %26 : vector<160x128xf32>
    %28 = vector.shape_cast %27 : vector<160x128xf32> to vector<10x16x128xf32>
    %c2_i32 = arith.constant 2 : i32
    %c0_i32 = arith.constant 0 : i32
    %29 = arith.cmpi eq, %c2_i32, %c0_i32 : i32
    %c1_i32 = arith.constant 1 : i32
    %30 = arith.select %29, %c1_i32, %c2_i32 : i32
    %31 = arith.remsi %arg0, %30 : i32
    %c0_i32_15 = arith.constant 0 : i32
    %32 = arith.cmpi ne, %31, %c0_i32_15 : i32
    %c0_i32_16 = arith.constant 0 : i32
    %33 = arith.cmpi slt, %31, %c0_i32_16 : i32
    %c0_i32_17 = arith.constant 0 : i32
    %34 = arith.cmpi slt, %30, %c0_i32_17 : i32
    %35 = arith.xori %33, %34 : i1
    %36 = arith.andi %35, %32 : i1
    %37 = arith.addi %31, %30 : i32
    %38 = arith.select %36, %37, %31 : i32
    %c8_i32 = arith.constant 8 : i32
    %39 = arith.muli %38, %c8_i32 : i32
    %c1_i32_18 = arith.constant 1 : i32
    %40 = arith.subi %39, %c1_i32_18 : i32
    %41 = tpu.iota {dimensions = array<i32: 0>} : vector<10x16xi32>
    %42 = vector.broadcast %40 : i32 to vector<10x16xi32>
    %43 = arith.addi %42, %41 : vector<10x16xi32>
    %c0_i32_19 = arith.constant 0 : i32
    %44 = vector.broadcast %c0_i32_19 : i32 to vector<10x16xi32>
    %45 = arith.cmpi sge, %43, %44 : vector<10x16xi32>
    %c16_i32 = arith.constant 16 : i32
    %46 = vector.broadcast %c16_i32 : i32 to vector<10x16xi32>
    %47 = arith.cmpi slt, %43, %46 : vector<10x16xi32>
    %48 = arith.andi %45, %47 : vector<10x16xi1>
    %49 = arith.extui %48 : vector<10x16xi1> to vector<10x16xi32>
    %50 = arith.sitofp %49 : vector<10x16xi32> to vector<10x16xf32>
    %51 = vector.shape_cast %50 : vector<10x16xf32> to vector<10x16x1xf32>
    %52 = vector.broadcast %51 : vector<10x16x1xf32> to vector<10x16x128xf32>
    %53 = arith.mulf %28, %52 : vector<10x16x128xf32>
    %54 = arith.truncf %53 : vector<10x16x128xf32> to vector<10x16x128xbf16>
    %cst_20 = arith.constant 0.000000e+00 : bf16
    %55 = vector.broadcast %cst_20 : bf16 to vector<10x1x128xbf16>
    %56 = tpu.concatenate %55, %54, %55 in 1 : vector<10x1x128xbf16>, vector<10x16x128xbf16>, vector<10x1x128xbf16> -> vector<10x18x128xbf16>
    %57 = vector.extract_strided_slice %56 {offsets = [0, 0, 0], sizes = [10, 16, 128], strides = [1, 1, 1]} : vector<10x18x128xbf16> to vector<10x16x128xbf16>
    %58 = vector.extract_strided_slice %56 {offsets = [0, 1, 0], sizes = [10, 16, 128], strides = [1, 1, 1]} : vector<10x18x128xbf16> to vector<10x16x128xbf16>
    %59 = vector.extract_strided_slice %56 {offsets = [0, 2, 0], sizes = [10, 16, 128], strides = [1, 1, 1]} : vector<10x18x128xbf16> to vector<10x16x128xbf16>
    %60 = tpu.concatenate %57, %58, %59 in 2 : vector<10x16x128xbf16>, vector<10x16x128xbf16>, vector<10x16x128xbf16> -> vector<10x16x384xbf16>
    %61 = vector.extract_strided_slice %60 {offsets = [0, 0, 0], sizes = [8, 16, 384], strides = [1, 1, 1]} : vector<10x16x384xbf16> to vector<8x16x384xbf16>
    %62 = vector.shape_cast %61 : vector<8x16x384xbf16> to vector<128x384xbf16>
    %c0_21 = arith.constant 0 : index
    %c0_22 = arith.constant 0 : index
    %c0_23 = arith.constant 0 : index
    %63 = vector.load %arg4[%c0_21, %c0_22, %c0_23] : memref<3x384x128xbf16, #tpu.memory_space<vmem>>, vector<1x384x128xbf16>
    %64 = vector.shape_cast %63 : vector<1x384x128xbf16> to vector<384x128xbf16>
    %cst_24 = arith.constant dense<0.000000e+00> : vector<128x128xf32>
    %65 = tpu.matmul %62, %64, %cst_24 {dimension_numbers = #tpu.dot_dimension_numbers<[1], [0], [0], [1], [0, 0, 1, 1], [], []>} : vector<128x384xbf16>, vector<384x128xbf16>, vector<128x128xf32> -> vector<128x128xf32>
    %66 = vector.extract_strided_slice %60 {offsets = [1, 0, 0], sizes = [8, 16, 384], strides = [1, 1, 1]} : vector<10x16x384xbf16> to vector<8x16x384xbf16>
    %67 = vector.shape_cast %66 : vector<8x16x384xbf16> to vector<128x384xbf16>
    %c1_25 = arith.constant 1 : index
    %c0_26 = arith.constant 0 : index
    %c0_27 = arith.constant 0 : index
    %68 = vector.load %arg4[%c1_25, %c0_26, %c0_27] : memref<3x384x128xbf16, #tpu.memory_space<vmem>>, vector<1x384x128xbf16>
    %69 = vector.shape_cast %68 : vector<1x384x128xbf16> to vector<384x128xbf16>
    %cst_28 = arith.constant dense<0.000000e+00> : vector<128x128xf32>
    %70 = tpu.matmul %67, %69, %cst_28 {dimension_numbers = #tpu.dot_dimension_numbers<[1], [0], [0], [1], [0, 0, 1, 1], [], []>} : vector<128x384xbf16>, vector<384x128xbf16>, vector<128x128xf32> -> vector<128x128xf32>
    %71 = arith.addf %65, %70 : vector<128x128xf32>
    %72 = vector.extract_strided_slice %60 {offsets = [2, 0, 0], sizes = [8, 16, 384], strides = [1, 1, 1]} : vector<10x16x384xbf16> to vector<8x16x384xbf16>
    %73 = vector.shape_cast %72 : vector<8x16x384xbf16> to vector<128x384xbf16>
    %c2_29 = arith.constant 2 : index
    %c0_30 = arith.constant 0 : index
    %c0_31 = arith.constant 0 : index
    %74 = vector.load %arg4[%c2_29, %c0_30, %c0_31] : memref<3x384x128xbf16, #tpu.memory_space<vmem>>, vector<1x384x128xbf16>
    %75 = vector.shape_cast %74 : vector<1x384x128xbf16> to vector<384x128xbf16>
    %cst_32 = arith.constant dense<0.000000e+00> : vector<128x128xf32>
    %76 = tpu.matmul %73, %75, %cst_32 {dimension_numbers = #tpu.dot_dimension_numbers<[1], [0], [0], [1], [0, 0, 1, 1], [], []>} : vector<128x384xbf16>, vector<384x128xbf16>, vector<128x128xf32> -> vector<128x128xf32>
    %77 = arith.addf %71, %76 : vector<128x128xf32>
    %c0_33 = arith.constant 0 : index
    %c0_34 = arith.constant 0 : index
    %78 = vector.load %arg5[%c0_33, %c0_34] : memref<1x128xf32, #tpu.memory_space<vmem>>, vector<1x128xf32>
    %79 = vector.broadcast %78 : vector<1x128xf32> to vector<128x128xf32>
    %80 = arith.addf %77, %79 : vector<128x128xf32>
    %81 = vector.extract_strided_slice %1 {offsets = [2, 1, 0], sizes = [8, 16, 128], strides = [1, 1, 1]} : vector<12x18x128xbf16> to vector<8x16x128xbf16>
    %82 = vector.shape_cast %81 : vector<8x16x128xbf16> to vector<128x128xbf16>
    %83 = arith.extf %82 : vector<128x128xbf16> to vector<128x128xf32>
    %84 = arith.addf %80, %83 : vector<128x128xf32>
    %cst_35 = arith.constant 0.000000e+00 : f32
    %85 = vector.broadcast %cst_35 : f32 to vector<128x128xf32>
    %86 = arith.maximumf %84, %85 : vector<128x128xf32>
    %87 = vector.shape_cast %86 : vector<128x128xf32> to vector<8x16x128xf32>
    %88 = arith.truncf %87 : vector<8x16x128xf32> to vector<8x16x128xbf16>
    %c0_36 = arith.constant 0 : index
    %c0_37 = arith.constant 0 : index
    %c0_38 = arith.constant 0 : index
    %c0_39 = arith.constant 0 : index
    %89 = vector.load %arg6[%c0_36, %c0_37, %c0_38, %c0_39] : memref<1x8x16x128xbf16, #tpu.memory_space<vmem>>, vector<1x8x16x128xbf16>
    %90 = vector.shape_cast %89 : vector<1x8x16x128xbf16> to vector<8x16x128xbf16>
    %91 = vector.shape_cast %88 : vector<8x16x128xbf16> to vector<1x8x16x128xbf16>
    tpu.vector_store %arg6[%c0_36, %c0_37, %c0_38, %c0_39], %91 {strides = array<i32>} : memref<1x8x16x128xbf16, #tpu.memory_space<vmem>>, vector<1x8x16x128xbf16>,
    return
  }
  func.func @transform_0(%arg0: i32) -> (i32, i32, i32, i32) {
    %c0_i32 = arith.constant 0 : i32
    %c0_i32_0 = arith.constant 0 : i32
    %c0_i32_1 = arith.constant 0 : i32
    %c0_i32_2 = arith.constant 0 : i32
    return %arg0, %c0_i32, %c0_i32_0, %c0_i32_1 : i32, i32, i32, i32
  }
  func.func @transform_1(%arg0: i32) -> (i32, i32, i32) {
    %c0_i32 = arith.constant 0 : i32
    %c0_i32_0 = arith.constant 0 : i32
    %c0_i32_1 = arith.constant 0 : i32
    %c0_i32_2 = arith.constant 0 : i32
    return %c0_i32, %c0_i32_0, %c0_i32_1 : i32, i32, i32
  }
  func.func @transform_2(%arg0: i32) -> (i32, i32) {
    %c0_i32 = arith.constant 0 : i32
    %c0_i32_0 = arith.constant 0 : i32
    %c0_i32_1 = arith.constant 0 : i32
    return %c0_i32, %c0_i32_0 : i32, i32
  }
  func.func @transform_3(%arg0: i32) -> (i32, i32, i32) {
    %c0_i32 = arith.constant 0 : i32
    %c0_i32_0 = arith.constant 0 : i32
    %c0_i32_1 = arith.constant 0 : i32
    %c0_i32_2 = arith.constant 0 : i32
    return %c0_i32, %c0_i32_0, %c0_i32_1 : i32, i32, i32
  }
  func.func @transform_4(%arg0: i32) -> (i32, i32) {
    %c0_i32 = arith.constant 0 : i32
    %c0_i32_0 = arith.constant 0 : i32
    %c0_i32_1 = arith.constant 0 : i32
    return %c0_i32, %c0_i32_0 : i32, i32
  }
  func.func @transform_5(%arg0: i32) -> (i32, i32, i32, i32) {
    %c0_i32 = arith.constant 0 : i32
    %c0_i32_0 = arith.constant 0 : i32
    %c0_i32_1 = arith.constant 0 : i32
    %c0_i32_2 = arith.constant 0 : i32
    return %arg0, %c0_i32, %c0_i32_0, %c0_i32_1 : i32, i32, i32, i32
  }
}

</mosaic_0001>

<llo_original>
// kernel: tpu_custom_call.1
$region0: #{tpu_custom_call.1}
  #allocation0 [shape = 'u32[]', space=smem, size = 0x4, offset = 0x4, fixed_abs, tag = 'smem constant byte address 0x4 - core index']
  #allocation1 [shape = 'u32[144,128]{1,0:T(1,128)}', space=vmem, size = 0x12000, scoped, tag = 'internal scratch']
  %s0 = inlined_call_operand.vmem [shape: bf16[4,12,18,128], index: 0, kind: input, shape index: {}]
  %s1 = inlined_call_operand.vmem [shape: bf16[3,384,128], index: 1, kind: input, shape index: {}]
  %s2 = inlined_call_operand.vmem [shape: f32[1,128], index: 2, kind: input, shape index: {}]
  %s3 = inlined_call_operand.hbm [shape: bf16[3,384,128], index: 3, kind: input, shape index: {}]
  %s4 = inlined_call_operand.vmem [shape: f32[1,128], index: 4, kind: input, shape index: {}]
  %s5 = inlined_call_operand.hbm [shape: bf16[4,8,16,128], index: 5, kind: output, shape index: {}]
  %s6 = sld [smem:[#allocation0]]
  $region57: #{tpu_custom_call.1} parent=0
    _
  %s8 = ssub.s32 1, %s6
  %s9 = scalar_select 0, %s8, %s6
  $region1: #{tpu_custom_call.1} parent=0
    #allocation2 [shape = 'u8[294912]{0}', space=vmem, size = 0x48000, scoped, tag = 'input window, operand 3, single buffered']
    #allocation3 [shape = 's32[2]{0}', space=sflag, size = 0x8, scoped, tag = 'scoped memory for tpu_custom_call.1']
    #allocation4 [shape = 's32[2]{0}', space=sflag, size = 0x8, scoped, tag = 'scoped memory for tpu_custom_call.1']
    #allocation5 [shape = 'u8[65536]{0}', space=vmem, size = 0x10000, scoped, tag = 'output window, operand 0']
    %10 = vsyncpa [#allocation3], 0
    %11 = vsyncpa [#allocation4], 0
    %s12 = scalar_lea.sflag [#allocation4], 1
    %13 = vsyncpa %s12, 0
    loop: start=0, step=1, limit=6
    $region2: #{tpu_custom_call.1} parent=1 // loop_pre_header
      _
    $region3: #{tpu_custom_call.1} parent=1 // loop_header
      %s15 = sphi 0, %s19
      %p16 = scmp.ge.s32.totalorder %s15, 6
      %s25 = sphi 0, %s27
      %s28 = sphi 0, %s25
      %s29 = sphi 0, %s28
      %s45 = sphi 0, %s29
      %s49 = sphi 0, %s49
      %s51 = sphi 0, %s49
      %s52 = sphi 0, %s51
      %s66 = sphi 0, %s52
      %s70 = sphi 0, %s70
      %s72 = sphi 0, %s70
      %s73 = sphi 0, %s72
      %s87 = sphi 0, %s73
      %s91 = sphi 0, %s91
      %s93 = sphi 0, %s91
      %s94 = sphi 0, %s93
      %s108 = sphi 0, %s94
      %s112 = sphi 0, %s112
      %s114 = sphi 0, %s112
      %s115 = sphi 0, %s114
      %s129 = sphi 0, %s115
      %s135 = sphi 0, %s137
      %s138 = sphi 0, %s135
      %s139 = sphi 0, %s138
      %s155 = sphi 0, %s139
    $region4: #{tpu_custom_call.1} parent=1 // loop_header_branch
      %18 = sbr.rel (%p16) target = $region8
    $region5: #{tpu_custom_call.1} parent=1 // loop_body
      %s20 = ssub.s32 %s15, 1
      %s21 = ssub.s32 %s15, 2
      %s22 = sadd.s32 %s15, 1
      %s23 = ssub.s32 %s15, %s22
      %p24 = scmp.eq.s32.totalorder %s23, 0
      %s26 = sadd.s32 %s25, 1
      %s27 = scalar_select %p24, %s25, %s26
      %p30 = pneg %p24
      %p31 = scmp.eq.s32.totalorder %s15, 3
      %p32 = por %p30, %p31
      %p33 = scmp.ne.s32.totalorder %s25, %s28
      %p34 = scmp.eq.s32.totalorder %s15, 0
      %p35 = por %p33, %p34
      %p36 = scmp.ne.s32.totalorder %s25, %s28
      %p37 = scmp.eq.s32.totalorder %s20, 3
      %p38 = por %p36, %p37
      %p39 = scmp.ne.s32.totalorder %s28, %s29
      %p40 = scmp.eq.s32.totalorder %s20, 0
      %p41 = por %p39, %p40
      %p42 = scmp.ne.s32.totalorder %s28, %s29
      %p43 = scmp.eq.s32.totalorder %s21, 3
      %p44 = por %p42, %p43
      %p46 = scmp.ne.s32.totalorder %s29, %s45
      %p47 = scmp.eq.s32.totalorder %s21, 0
      %p48 = por %p46, %p47
      %s50 = sadd.s32 %s49, 1
      %p53 = scmp.eq.s32.totalorder %s15, 3
      %p54 = scmp.ne.s32.totalorder %s49, %s51
      %p55 = scmp.eq.s32.totalorder %s15, 0
      %p56 = por %p54, %p55
      %p57 = scmp.ne.s32.totalorder %s49, %s51
      %p58 = scmp.eq.s32.totalorder %s20, 3
      %p59 = por %p57, %p58
      %p60 = scmp.ne.s32.totalorder %s51, %s52
      %p61 = scmp.eq.s32.totalorder %s20, 0
      %p62 = por %p60, %p61
      %p63 = scmp.ne.s32.totalorder %s51, %s52
      %p64 = scmp.eq.s32.totalorder %s21, 3
      %p65 = por %p63, %p64
      %p67 = scmp.ne.s32.totalorder %s52, %s66
      %p68 = scmp.eq.s32.totalorder %s21, 0
      %p69 = por %p67, %p68
      %s71 = sadd.s32 %s70, 1
      %p74 = scmp.eq.s32.totalorder %s15, 3
      %p75 = scmp.ne.s32.totalorder %s70, %s72
      %p76 = scmp.eq.s32.totalorder %s15, 0
      %p77 = por %p75, %p76
      %p78 = scmp.ne.s32.totalorder %s70, %s72
      %p79 = scmp.eq.s32.totalorder %s20, 3
      %p80 = por %p78, %p79
      %p81 = scmp.ne.s32.totalorder %s72, %s73
      %p82 = scmp.eq.s32.totalorder %s20, 0
      %p83 = por %p81, %p82
      %p84 = scmp.ne.s32.totalorder %s72, %s73
      %p85 = scmp.eq.s32.totalorder %s21, 3
      %p86 = por %p84, %p85
      %p88 = scmp.ne.s32.totalorder %s73, %s87
      %p89 = scmp.eq.s32.totalorder %s21, 0
      %p90 = por %p88, %p89
      %s92 = sadd.s32 %s91, 1
      %p95 = scmp.eq.s32.totalorder %s15, 3
      %p96 = scmp.ne.s32.totalorder %s91, %s93
      %p97 = scmp.eq.s32.totalorder %s15, 0
      %p98 = por %p96, %p97
      %p99 = scmp.ne.s32.totalorder %s91, %s93
      %p100 = scmp.eq.s32.totalorder %s20, 3
      %p101 = por %p99, %p100
      %p102 = scmp.ne.s32.totalorder %s93, %s94
      %p103 = scmp.eq.s32.totalorder %s20, 0
      %p104 = por %p102, %p103
      %p105 = scmp.ne.s32.totalorder %s93, %s94
      %p106 = scmp.eq.s32.totalorder %s21, 3
      %p107 = por %p105, %p106
      %p109 = scmp.ne.s32.totalorder %s94, %s108
      %p110 = scmp.eq.s32.totalorder %s21, 0
      %p111 = por %p109, %p110
      %s113 = sadd.s32 %s112, 1
      %p116 = scmp.eq.s32.totalorder %s15, 3
      %p117 = scmp.ne.s32.totalorder %s112, %s114
      %p118 = scmp.eq.s32.totalorder %s15, 0
      %p119 = por %p117, %p118
      %p120 = scmp.ne.s32.totalorder %s112, %s114
      %p121 = scmp.eq.s32.totalorder %s20, 3
      %p122 = por %p120, %p121
      %p123 = scmp.ne.s32.totalorder %s114, %s115
      %p124 = scmp.eq.s32.totalorder %s20, 0
      %p125 = por %p123, %p124
      %p126 = scmp.ne.s32.totalorder %s114, %s115
      %p127 = scmp.eq.s32.totalorder %s21, 3
      %p128 = por %p126, %p127
      %p130 = scmp.ne.s32.totalorder %s115, %s129
      %p131 = scmp.eq.s32.totalorder %s21, 0
      %p132 = por %p130, %p131
      %s133 = ssub.s32 %s15, %s22
      %p134 = scmp.eq.s32.totalorder %s133, 0
      %s136 = sadd.s32 %s135, 1
      %s137 = scalar_select %p134, %s135, %s136
      %p140 = pneg %p134
      %p141 = scmp.eq.s32.totalorder %s15, 3
      %p142 = por %p140, %p141
      %p143 = scmp.ne.s32.totalorder %s135, %s138
      %p144 = scmp.eq.s32.totalorder %s15, 0
      %p145 = por %p143, %p144
      %p146 = scmp.ne.s32.totalorder %s135, %s138
      %p147 = scmp.eq.s32.totalorder %s20, 3
      %p148 = por %p146, %p147
      %p149 = scmp.ne.s32.totalorder %s138, %s139
      %p150 = scmp.eq.s32.totalorder %s20, 0
      %p151 = por %p149, %p150
      %p152 = scmp.ne.s32.totalorder %s138, %s139
      %p153 = scmp.eq.s32.totalorder %s21, 3
      %p154 = por %p152, %p153
      %p156 = scmp.ne.s32.totalorder %s139, %s155
      %p157 = scmp.eq.s32.totalorder %s21, 0
      %p158 = por %p156, %p157
      %p159 = scmp.le.s32.totalorder 1, %s15
      %p160 = scmp.lt.s32.totalorder %s15, 5
      %p161 = pnand %p159, %p160
      %p162 = pneg %p161
      // Predicated region
      $region9: #{tpu_custom_call.1} parent=5 // pred_check
        _
      $region10: #{tpu_custom_call.1} parent=5 // pred_check_branch
        %164 = sbr.rel (%p161) target = $region12
      $region11: #{tpu_custom_call.1} parent=5 // pred_region
        %s165 = ssub.s32 %s15, 1
        // Predicated region
        $region13: #{tpu_custom_call.1} parent=11 // pred_check
          %p166 = pneg %p62
        $region14: #{tpu_custom_call.1} parent=11 // pred_check_branch
          %168 = sbr.rel (%p166) target = $region16
        $region15: #{tpu_custom_call.1} parent=11 // pred_region
          _
        $region16: #{tpu_custom_call.1} parent=11 // pred_fallthru
          _
        // Predicated region
        $region17: #{tpu_custom_call.1} parent=11 // pred_check
          %p169 = pneg %p83
        $region18: #{tpu_custom_call.1} parent=11 // pred_check_branch
          %171 = sbr.rel (%p169) target = $region20
        $region19: #{tpu_custom_call.1} parent=11 // pred_region
          _
        $region20: #{tpu_custom_call.1} parent=11 // pred_fallthru
          _
        // Predicated region
        $region21: #{tpu_custom_call.1} parent=11 // pred_check
          %p172 = pneg %p104
        $region22: #{tpu_custom_call.1} parent=11 // pred_check_branch
          %174 = sbr.rel (%p172) target = $region24
        $region23: #{tpu_custom_call.1} parent=11 // pred_region
          %s176 = ssub.s32 9216, 9216
          %177 = vsyncadd [#allocation3], %s176
          %s178 = sshll.u32 [#allocation2], 4
          %s179 = int_to_ptr.vmem [resolvable:$true] %s178
          %184 = dma.hbm_to_vmem [thread:$0]  %s3, 9216, %s179, [#allocation3], 64, 64, 4
        $region24: #{tpu_custom_call.1} parent=11 // pred_fallthru
          _
        // Predicated region
        $region25: #{tpu_custom_call.1} parent=11 // pred_check
          %p185 = pneg %p125
        $region26: #{tpu_custom_call.1} parent=11 // pred_check_branch
          %187 = sbr.rel (%p185) target = $region28
        $region27: #{tpu_custom_call.1} parent=11 // pred_region
          _
        $region28: #{tpu_custom_call.1} parent=11 // pred_fallthru
          _
      $region12: #{tpu_custom_call.1} parent=5 // pred_fallthru
        _
      %p188 = scmp.lt.s32.totalorder %s15, 4
      // Predicated region
      $region29: #{tpu_custom_call.1} parent=5 // pred_check
        %p189 = pneg %p188
      $region30: #{tpu_custom_call.1} parent=5 // pred_check_branch
        %191 = sbr.rel (%p189) target = $region32
      $region31: #{tpu_custom_call.1} parent=5 // pred_region
        // Predicated region
        $region33: #{tpu_custom_call.1} parent=31 // pred_check
          %p192 = pneg %p35
        $region34: #{tpu_custom_call.1} parent=31 // pred_check_branch
          %194 = sbr.rel (%p192) target = $region36
        $region35: #{tpu_custom_call.1} parent=31 // pred_region
          %p195 = scmp.lt.s32.totalorder %s15, 3
          %s196 = scalar_select %p195, %s15, 3
          %s197 = smul.addr %s196, 36
          %s198 = smul.addr %s197, 4
          %s199 = scalar_lea.vmem %s0, %s198
        $region36: #{tpu_custom_call.1} parent=31 // pred_fallthru
          _
      $region32: #{tpu_custom_call.1} parent=5 // pred_fallthru
        _
      %p200 = scmp.le.s32.totalorder 1, %s15
      %p201 = scmp.lt.s32.totalorder %s15, 5
      %p202 = pnand %p200, %p201
      %p203 = pneg %p202
      // Predicated region
      $region37: #{tpu_custom_call.1} parent=5 // pred_check
        _
      $region38: #{tpu_custom_call.1} parent=5 // pred_check_branch
        %205 = sbr.rel (%p202) target = $region40
      $region39: #{tpu_custom_call.1} parent=5 // pred_region
        %s206 = ssub.s32 %s15, 1
        // Predicated region
        $region41: #{tpu_custom_call.1} parent=39 // pred_check
          %p207 = pneg %p104
        $region42: #{tpu_custom_call.1} parent=39 // pred_check_branch
          %209 = sbr.rel (%p207) target = $region44
        $region43: #{tpu_custom_call.1} parent=39 // pred_region
          %210 = dma.done [#allocation3], 9216
        $region44: #{tpu_custom_call.1} parent=39 // pred_fallthru
          _
        %p211 = scmp.lt.s32.totalorder %s20, 3
        %s212 = scalar_select %p211, %s20, 3
        %s213 = smul.addr %s212, 36
        %s214 = smul.addr %s213, 4
        %s215 = scalar_lea.vmem %s0, %s214
        %p216 = pneg %p41
        %p217 = pneg %p38
        %p218 = pneg %p62
        %p219 = pneg %p59
        %p220 = pneg %p83
        %p221 = pneg %p80
        %p222 = pneg %p104
        %p223 = pneg %p101
        %p224 = pneg %p125
        %p225 = pneg %p122
        %p226 = pneg %p151
        %p227 = pneg %p148
        %s228 = sand.u32 %s138, 1
        %s229 = scalar_lea.sflag [#allocation4], %s228
        %s230 = sand.u32 %s138, 1
        %s231 = smul.addr %s230, 64
        %s232 = scalar_lea.vmem [#allocation5], %s231
        %p233 = scmp.lt.s32.totalorder %s20, 3
        %s234 = scalar_select %p233, %s20, 3
        %s235 = smul.addr %s234, 36
        %s236 = smul.addr %s235, 4
        %s237 = scalar_lea.vmem %s0, %s236
        %v239 = vld [vmem:[%s237] sm:$0xf]
        %v240 = vld [vmem:[%s237 + $0x4] sm:$0xf]
        %v241 = vld [vmem:[%s237 + $0x8] sm:$0x1]
        %v242 = vld [vmem:[%s237 + $0xc] sm:$0xf]
        %v243 = vld [vmem:[%s237 + $0x10] sm:$0xf]
        %v244 = vld [vmem:[%s237 + $0x14] sm:$0x1]
        %v245 = vld [vmem:[%s237 + $0x18] sm:$0xf]
        %v246 = vld [vmem:[%s237 + $0x1c] sm:$0xf]
        %v247 = vld [vmem:[%s237 + $0x20] sm:$0x1]
        %v248 = vld [vmem:[%s237 + $0x24] sm:$0xf]
        %v249 = vld [vmem:[%s237 + $0x28] sm:$0xf]
        %v250 = vld [vmem:[%s237 + $0x2c] sm:$0x1]
        %v251 = vld [vmem:[%s237 + $0x30] sm:$0xf]
        %v252 = vld [vmem:[%s237 + $0x34] sm:$0xf]
        %v253 = vld [vmem:[%s237 + $0x38] sm:$0x1]
        %v254 = vld [vmem:[%s237 + $0x3c] sm:$0xf]
        %v255 = vld [vmem:[%s237 + $0x40] sm:$0xf]
        %v256 = vld [vmem:[%s237 + $0x44] sm:$0x1]
        %v257 = vld [vmem:[%s237 + $0x48] sm:$0xf]
        %v258 = vld [vmem:[%s237 + $0x4c] sm:$0xf]
        %v259 = vld [vmem:[%s237 + $0x50] sm:$0x1]
        %v260 = vld [vmem:[%s237 + $0x54] sm:$0xf]
        %v261 = vld [vmem:[%s237 + $0x58] sm:$0xf]
        %v262 = vld [vmem:[%s237 + $0x5c] sm:$0x1]
        %v263 = vld [vmem:[%s237 + $0x60] sm:$0xf]
        %v264 = vld [vmem:[%s237 + $0x64] sm:$0xf]
        %v265 = vld [vmem:[%s237 + $0x68] sm:$0x1]
        %v266 = vld [vmem:[%s237 + $0x6c] sm:$0xf]
        %v267 = vld [vmem:[%s237 + $0x70] sm:$0xf]
        %v268 = vld [vmem:[%s237 + $0x74] sm:$0x1]
        %v269 = vld [vmem:[%s237 + $0x78] sm:$0xf]
        %v270 = vld [vmem:[%s237 + $0x7c] sm:$0xf]
        %v271 = vld [vmem:[%s237 + $0x80] sm:$0x1]
        %v272 = vld [vmem:[%s237 + $0x84] sm:$0xf]
        %v273 = vld [vmem:[%s237 + $0x88] sm:$0xf]
        %v274 = vld [vmem:[%s237 + $0x8c] sm:$0x1]
        %v299 = vunpack.c.l.b16 %v239
        %v300 = vunpack.c.l.b16 %v240
        %v301 = vunpack.c.l.b16 %v242
        %v302 = vunpack.c.l.b16 %v243
        %v303 = vunpack.c.l.b16 %v245
        %v304 = vunpack.c.l.b16 %v246
        %v305 = vunpack.c.l.b16 %v248
        %v306 = vunpack.c.l.b16 %v249
        %v307 = vunpack.c.l.b16 %v251
        %v308 = vunpack.c.l.b16 %v252
        %v309 = vunpack.c.l.b16 %v254
        %v310 = vunpack.c.l.b16 %v255
        %v311 = vunpack.c.l.b16 %v257
        %v312 = vunpack.c.l.b16 %v258
        %v313 = vunpack.c.l.b16 %v260
        %v314 = vunpack.c.l.b16 %v261
        %v315 = vunpack.c.l.b16 %v263
        %v316 = vunpack.c.l.b16 %v264
        %v317 = vunpack.c.l.b16 %v266
        %v318 = vunpack.c.l.b16 %v267
        %v319 = vunpack.c.l.b16 %v269
        %v320 = vunpack.c.l.b16 %v270
        %v321 = vunpack.c.l.b16 %v272
        %v322 = vunpack.c.l.b16 %v273
        %v323 = vpack.c.b16 %v300, %v299
        %v324 = vpack.c.b16 %v302, %v301
        %v325 = vpack.c.b16 %v304, %v303
        %v326 = vpack.c.b16 %v306, %v305
        %v327 = vpack.c.b16 %v308, %v307
        %v328 = vpack.c.b16 %v310, %v309
        %v329 = vpack.c.b16 %v312, %v311
        %v330 = vpack.c.b16 %v314, %v313
        %v331 = vpack.c.b16 %v316, %v315
        %v332 = vpack.c.b16 %v318, %v317
        %v333 = vpack.c.b16 %v320, %v319
        %v334 = vpack.c.b16 %v322, %v321
        %v359 = vunpack.c.l.b16 %v241
        %v360 = vunpack.c.l.b16 %v244
        %v361 = vunpack.c.l.b16 %v247
        %v362 = vunpack.c.l.b16 %v250
        %v363 = vunpack.c.l.b16 %v253
        %v364 = vunpack.c.l.b16 %v256
        %v365 = vunpack.c.l.b16 %v259
        %v366 = vunpack.c.l.b16 %v262
        %v367 = vunpack.c.l.b16 %v265
        %v368 = vunpack.c.l.b16 %v268
        %v369 = vunpack.c.l.b16 %v271
        %v370 = vunpack.c.l.b16 %v274
        %v371 = vpack.c.b16 %v359, %v359
        %v372 = vpack.c.b16 %v360, %v360
        %v373 = vpack.c.b16 %v361, %v361
        %v374 = vpack.c.b16 %v362, %v362
        %v375 = vpack.c.b16 %v363, %v363
        %v376 = vpack.c.b16 %v364, %v364
        %v377 = vpack.c.b16 %v365, %v365
        %v378 = vpack.c.b16 %v366, %v366
        %v379 = vpack.c.b16 %v367, %v367
        %v380 = vpack.c.b16 %v368, %v368
        %v381 = vpack.c.b16 %v369, %v369
        %v382 = vpack.c.b16 %v370, %v370
        %vm383 = vsmask.f32 7424
        %v385 = vshrl.u32 %v323, 16
        %v387 = vshll.u32 %v323, 16
        %v389 = vrot.slane %v387, 1
        %v390 = vor.u32 %v385, %v389
        %v392 = vshll.u32 %v371, 16
        %v394 = vrot.slane %v392, 1
        %v395 = vsel %vm383, %v390, %v394
        %v397 = vshrl.u32 %v324, 16
        %v399 = vshll.u32 %v324, 16
        %v401 = vrot.slane %v399, 1
        %v402 = vor.u32 %v397, %v401
        %v404 = vshll.u32 %v372, 16
        %v406 = vrot.slane %v404, 1
        %v407 = vsel %vm383, %v402, %v406
        %v409 = vshrl.u32 %v325, 16
        %v411 = vshll.u32 %v325, 16
        %v413 = vrot.slane %v411, 1
        %v414 = vor.u32 %v409, %v413
        %v416 = vshll.u32 %v373, 16
        %v418 = vrot.slane %v416, 1
        %v419 = vsel %vm383, %v414, %v418
        %v421 = vshrl.u32 %v326, 16
        %v423 = vshll.u32 %v326, 16
        %v425 = vrot.slane %v423, 1
        %v426 = vor.u32 %v421, %v425
        %v428 = vshll.u32 %v374, 16
        %v430 = vrot.slane %v428, 1
        %v431 = vsel %vm383, %v426, %v430
        %v433 = vshrl.u32 %v327, 16
        %v435 = vshll.u32 %v327, 16
        %v437 = vrot.slane %v435, 1
        %v438 = vor.u32 %v433, %v437
        %v440 = vshll.u32 %v375, 16
        %v442 = vrot.slane %v440, 1
        %v443 = vsel %vm383, %v438, %v442
        %v445 = vshrl.u32 %v328, 16
        %v447 = vshll.u32 %v328, 16
        %v449 = vrot.slane %v447, 1
        %v450 = vor.u32 %v445, %v449
        %v452 = vshll.u32 %v376, 16
        %v454 = vrot.slane %v452, 1
        %v455 = vsel %vm383, %v450, %v454
        %v457 = vshrl.u32 %v329, 16
        %v459 = vshll.u32 %v329, 16
        %v461 = vrot.slane %v459, 1
        %v462 = vor.u32 %v457, %v461
        %v464 = vshll.u32 %v377, 16
        %v466 = vrot.slane %v464, 1
        %v467 = vsel %vm383, %v462, %v466
        %v469 = vshrl.u32 %v330, 16
        %v471 = vshll.u32 %v330, 16
        %v473 = vrot.slane %v471, 1
        %v474 = vor.u32 %v469, %v473
        %v476 = vshll.u32 %v378, 16
        %v478 = vrot.slane %v476, 1
        %v479 = vsel %vm383, %v474, %v478
        %v481 = vshrl.u32 %v331, 16
        %v483 = vshll.u32 %v331, 16
        %v485 = vrot.slane %v483, 1
        %v486 = vor.u32 %v481, %v485
        %v488 = vshll.u32 %v379, 16
        %v490 = vrot.slane %v488, 1
        %v491 = vsel %vm383, %v486, %v490
        %v493 = vshrl.u32 %v332, 16
        %v495 = vshll.u32 %v332, 16
        %v497 = vrot.slane %v495, 1
        %v498 = vor.u32 %v493, %v497
        %v500 = vshll.u32 %v380, 16
        %v502 = vrot.slane %v500, 1
        %v503 = vsel %vm383, %v498, %v502
        %v505 = vshrl.u32 %v333, 16
        %v507 = vshll.u32 %v333, 16
        %v509 = vrot.slane %v507, 1
        %v510 = vor.u32 %v505, %v509
        %v512 = vshll.u32 %v381, 16
        %v514 = vrot.slane %v512, 1
        %v515 = vsel %vm383, %v510, %v514
        %v517 = vshrl.u32 %v334, 16
        %v519 = vshll.u32 %v334, 16
        %v521 = vrot.slane %v519, 1
        %v522 = vor.u32 %v517, %v521
        %v524 = vshll.u32 %v382, 16
        %v526 = vrot.slane %v524, 1
        %v527 = vsel %vm383, %v522, %v526
        %vm540 = vcmask 1046528
        %v541 = vrot.slane %v323, 1
        %v542 = vrot.slane %v371, 1
        %v543 = vsel %vm540, %v541, %v542
        %v544 = vrot.slane %v324, 1
        %v545 = vrot.slane %v372, 1
        %v546 = vsel %vm540, %v544, %v545
        %v547 = vrot.slane %v325, 1
        %v548 = vrot.slane %v373, 1
        %v549 = vsel %vm540, %v547, %v548
        %v550 = vrot.slane %v326, 1
        %v551 = vrot.slane %v374, 1
        %v552 = vsel %vm540, %v550, %v551
        %v553 = vrot.slane %v327, 1
        %v554 = vrot.slane %v375, 1
        %v555 = vsel %vm540, %v553, %v554
        %v556 = vrot.slane %v328, 1
        %v557 = vrot.slane %v376, 1
        %v558 = vsel %vm540, %v556, %v557
        %v559 = vrot.slane %v329, 1
        %v560 = vrot.slane %v377, 1
        %v561 = vsel %vm540, %v559, %v560
        %v562 = vrot.slane %v330, 1
        %v563 = vrot.slane %v378, 1
        %v564 = vsel %vm540, %v562, %v563
        %v565 = vrot.slane %v331, 1
        %v566 = vrot.slane %v379, 1
        %v567 = vsel %vm540, %v565, %v566
        %v568 = vrot.slane %v332, 1
        %v569 = vrot.slane %v380, 1
        %v570 = vsel %vm540, %v568, %v569
        %v571 = vrot.slane %v333, 1
        %v572 = vrot.slane %v381, 1
        %v573 = vsel %vm540, %v571, %v572
        %v574 = vrot.slane %v334, 1
        %v575 = vrot.slane %v382, 1
        %v576 = vsel %vm540, %v574, %v575
        %v589 = vld [vmem:[%s1] sm:$0xf]
        %v590 = vld [vmem:[%s1 + $0x4] sm:$0xf]
        %v591 = vld [vmem:[%s1 + $0x8] sm:$0xf]
        %v592 = vld [vmem:[%s1 + $0xc] sm:$0xf]
        %v593 = vld [vmem:[%s1 + $0x10] sm:$0xf]
        %v594 = vld [vmem:[%s1 + $0x14] sm:$0xf]
        %v595 = vld [vmem:[%s1 + $0x18] sm:$0xf]
        %v596 = vld [vmem:[%s1 + $0x1c] sm:$0xf]
        %v597 = vld [vmem:[%s1 + $0x20] sm:$0xf]
        %v598 = vld [vmem:[%s1 + $0x24] sm:$0xf]
        %v599 = vld [vmem:[%s1 + $0x28] sm:$0xf]
        %v600 = vld [vmem:[%s1 + $0x2c] sm:$0xf]
        %v601 = vld [vmem:[%s1 + $0x30] sm:$0xf]
        %v602 = vld [vmem:[%s1 + $0x34] sm:$0xf]
        %v603 = vld [vmem:[%s1 + $0x38] sm:$0xf]
        %v604 = vld [vmem:[%s1 + $0x3c] sm:$0xf]
        %v605 = vld [vmem:[%s1 + $0x40] sm:$0xf]
        %v606 = vld [vmem:[%s1 + $0x44] sm:$0xf]
        %v607 = vld [vmem:[%s1 + $0x48] sm:$0xf]
        %v608 = vld [vmem:[%s1 + $0x4c] sm:$0xf]
        %v609 = vld [vmem:[%s1 + $0x50] sm:$0xf]
        %v610 = vld [vmem:[%s1 + $0x54] sm:$0xf]
        %v611 = vld [vmem:[%s1 + $0x58] sm:$0xf]
        %v612 = vld [vmem:[%s1 + $0x5c] sm:$0xf]
        %v613 = vld [vmem:[%s1 + $0x60] sm:$0xf]
        %v614 = vld [vmem:[%s1 + $0x64] sm:$0xf]
        %v615 = vld [vmem:[%s1 + $0x68] sm:$0xf]
        %v616 = vld [vmem:[%s1 + $0x6c] sm:$0xf]
        %v617 = vld [vmem:[%s1 + $0x70] sm:$0xf]
        %v618 = vld [vmem:[%s1 + $0x74] sm:$0xf]
        %v619 = vld [vmem:[%s1 + $0x78] sm:$0xf]
        %v620 = vld [vmem:[%s1 + $0x7c] sm:$0xf]
        %v621 = vld [vmem:[%s1 + $0x80] sm:$0xf]
        %v622 = vld [vmem:[%s1 + $0x84] sm:$0xf]
        %v623 = vld [vmem:[%s1 + $0x88] sm:$0xf]
        %v624 = vld [vmem:[%s1 + $0x8c] sm:$0xf]
        %v625 = vld [vmem:[%s1 + $0x90] sm:$0xf]
        %v626 = vld [vmem:[%s1 + $0x94] sm:$0xf]
        %v627 = vld [vmem:[%s1 + $0x98] sm:$0xf]
        %v628 = vld [vmem:[%s1 + $0x9c] sm:$0xf]
        %v629 = vld [vmem:[%s1 + $0xa0] sm:$0xf]
        %v630 = vld [vmem:[%s1 + $0xa4] sm:$0xf]
        %v631 = vld [vmem:[%s1 + $0xa8] sm:$0xf]
        %v632 = vld [vmem:[%s1 + $0xac] sm:$0xf]
        %v633 = vld [vmem:[%s1 + $0xb0] sm:$0xf]
        %v634 = vld [vmem:[%s1 + $0xb4] sm:$0xf]
        %v635 = vld [vmem:[%s1 + $0xb8] sm:$0xf]
        %v636 = vld [vmem:[%s1 + $0xbc] sm:$0xf]
        %s637 = scalar_lea.vmem %s1, 192
        %v638 = vld [vmem:[%s637] sm:$0xf]
        %v639 = vld [vmem:[%s637 + $0x4] sm:$0xf]
        %v640 = vld [vmem:[%s637 + $0x8] sm:$0xf]
        %v641 = vld [vmem:[%s637 + $0xc] sm:$0xf]
        %v642 = vld [vmem:[%s637 + $0x10] sm:$0xf]
        %v643 = vld [vmem:[%s637 + $0x14] sm:$0xf]
        %v644 = vld [vmem:[%s637 + $0x18] sm:$0xf]
        %v645 = vld [vmem:[%s637 + $0x1c] sm:$0xf]
        %v646 = vld [vmem:[%s637 + $0x20] sm:$0xf]
        %v647 = vld [vmem:[%s637 + $0x24] sm:$0xf]
        %v648 = vld [vmem:[%s637 + $0x28] sm:$0xf]
        %v649 = vld [vmem:[%s637 + $0x2c] sm:$0xf]
        %v650 = vld [vmem:[%s637 + $0x30] sm:$0xf]
        %v651 = vld [vmem:[%s637 + $0x34] sm:$0xf]
        %v652 = vld [vmem:[%s637 + $0x38] sm:$0xf]
        %v653 = vld [vmem:[%s637 + $0x3c] sm:$0xf]
        %v654 = vld [vmem:[%s637 + $0x40] sm:$0xf]
        %v655 = vld [vmem:[%s637 + $0x44] sm:$0xf]
        %v656 = vld [vmem:[%s637 + $0x48] sm:$0xf]
        %v657 = vld [vmem:[%s637 + $0x4c] sm:$0xf]
        %v658 = vld [vmem:[%s637 + $0x50] sm:$0xf]
        %v659 = vld [vmem:[%s637 + $0x54] sm:$0xf]
        %v660 = vld [vmem:[%s637 + $0x58] sm:$0xf]
        %v661 = vld [vmem:[%s637 + $0x5c] sm:$0xf]
        %v662 = vld [vmem:[%s637 + $0x60] sm:$0xf]
        %v663 = vld [vmem:[%s637 + $0x64] sm:$0xf]
        %v664 = vld [vmem:[%s637 + $0x68] sm:$0xf]
        %v665 = vld [vmem:[%s637 + $0x6c] sm:$0xf]
        %v666 = vld [vmem:[%s637 + $0x70] sm:$0xf]
        %v667 = vld [vmem:[%s637 + $0x74] sm:$0xf]
        %v668 = vld [vmem:[%s637 + $0x78] sm:$0xf]
        %v669 = vld [vmem:[%s637 + $0x7c] sm:$0xf]
        %v670 = vld [vmem:[%s637 + $0x80] sm:$0xf]
        %v671 = vld [vmem:[%s637 + $0x84] sm:$0xf]
        %v672 = vld [vmem:[%s637 + $0x88] sm:$0xf]
        %v673 = vld [vmem:[%s637 + $0x8c] sm:$0xf]
        %v674 = vld [vmem:[%s637 + $0x90] sm:$0xf]
        %v675 = vld [vmem:[%s637 + $0x94] sm:$0xf]
        %v676 = vld [vmem:[%s637 + $0x98] sm:$0xf]
        %v677 = vld [vmem:[%s637 + $0x9c] sm:$0xf]
        %v678 = vld [vmem:[%s637 + $0xa0] sm:$0xf]
        %v679 = vld [vmem:[%s637 + $0xa4] sm:$0xf]
        %v680 = vld [vmem:[%s637 + $0xa8] sm:$0xf]
        %v681 = vld [vmem:[%s637 + $0xac] sm:$0xf]
        %v682 = vld [vmem:[%s637 + $0xb0] sm:$0xf]
        %v683 = vld [vmem:[%s637 + $0xb4] sm:$0xf]
        %v684 = vld [vmem:[%s637 + $0xb8] sm:$0xf]
        %v685 = vld [vmem:[%s637 + $0xbc] sm:$0xf]
        %v734 = vunpack.c.l.b16 %v638
        %v735 = vunpack.c.l.b16 %v639
        %v736 = vunpack.c.l.b16 %v640
        %v737 = vunpack.c.l.b16 %v641
        %v738 = vunpack.c.l.b16 %v642
        %v739 = vunpack.c.l.b16 %v643
        %v740 = vunpack.c.l.b16 %v644
        %v741 = vunpack.c.l.b16 %v645
        %v742 = vunpack.c.l.b16 %v646
        %v743 = vunpack.c.l.b16 %v647
        %v744 = vunpack.c.l.b16 %v648
        %v745 = vunpack.c.l.b16 %v649
        %v746 = vunpack.c.l.b16 %v650
        %v747 = vunpack.c.l.b16 %v651
        %v748 = vunpack.c.l.b16 %v652
        %v749 = vunpack.c.l.b16 %v653
        %v750 = vunpack.c.l.b16 %v654
        %v751 = vunpack.c.l.b16 %v655
        %v752 = vunpack.c.l.b16 %v656
        %v753 = vunpack.c.l.b16 %v657
        %v754 = vunpack.c.l.b16 %v658
        %v755 = vunpack.c.l.b16 %v659
        %v756 = vunpack.c.l.b16 %v660
        %v757 = vunpack.c.l.b16 %v661
        %v758 = vunpack.c.l.b16 %v662
        %v759 = vunpack.c.l.b16 %v663
        %v760 = vunpack.c.l.b16 %v664
        %v761 = vunpack.c.l.b16 %v665
        %v762 = vunpack.c.l.b16 %v666
        %v763 = vunpack.c.l.b16 %v667
        %v764 = vunpack.c.l.b16 %v668
        %v765 = vunpack.c.l.b16 %v669
        %v766 = vunpack.c.l.b16 %v670
        %v767 = vunpack.c.l.b16 %v671
        %v768 = vunpack.c.l.b16 %v672
        %v769 = vunpack.c.l.b16 %v673
        %v770 = vunpack.c.l.b16 %v674
        %v771 = vunpack.c.l.b16 %v675
        %v772 = vunpack.c.l.b16 %v676
        %v773 = vunpack.c.l.b16 %v677
        %v774 = vunpack.c.l.b16 %v678
        %v775 = vunpack.c.l.b16 %v679
        %v776 = vunpack.c.l.b16 %v680
        %v777 = vunpack.c.l.b16 %v681
        %v778 = vunpack.c.l.b16 %v682
        %v779 = vunpack.c.l.b16 %v683
        %v780 = vunpack.c.l.b16 %v684
        %v781 = vunpack.c.l.b16 %v685
        %v782 = vpack.c.b16 %v735, %v734
        %v783 = vpack.c.b16 %v737, %v736
        %v784 = vpack.c.b16 %v739, %v738
        %v785 = vpack.c.b16 %v741, %v740
        %v786 = vpack.c.b16 %v743, %v742
        %v787 = vpack.c.b16 %v745, %v744
        %v788 = vpack.c.b16 %v747, %v746
        %v789 = vpack.c.b16 %v749, %v748
        %v790 = vpack.c.b16 %v751, %v750
        %v791 = vpack.c.b16 %v753, %v752
        %v792 = vpack.c.b16 %v755, %v754
        %v793 = vpack.c.b16 %v757, %v756
        %v794 = vpack.c.b16 %v759, %v758
        %v795 = vpack.c.b16 %v761, %v760
        %v796 = vpack.c.b16 %v763, %v762
        %v797 = vpack.c.b16 %v765, %v764
        %v798 = vpack.c.b16 %v767, %v766
        %v799 = vpack.c.b16 %v769, %v768
        %v800 = vpack.c.b16 %v771, %v770
        %v801 = vpack.c.b16 %v773, %v772
        %v802 = vpack.c.b16 %v775, %v774
        %v803 = vpack.c.b16 %v777, %v776
        %v804 = vpack.c.b16 %v779, %v778
        %v805 = vpack.c.b16 %v781, %v780
        %830 = vmatprep.subr.bf16.mxu0 0
        %831 = vmatpush1.bf16.msra.mxu0 %v789
        %832 = vmatprep.subr.bf16.mxu0 0
        %833 = vmatpush1.bf16.msra.mxu0 %v788
        %834 = vmatprep.subr.bf16.mxu0 0
        %835 = vmatpush1.bf16.msra.mxu0 %v787
        %836 = vmatprep.subr.bf16.mxu0 0
        %837 = vmatpush1.bf16.msra.mxu0 %v786
        %838 = vmatprep.subr.bf16.mxu0 0
        %839 = vmatpush1.bf16.msra.mxu0 %v785
        %840 = vmatprep.subr.bf16.mxu0 0
        %841 = vmatpush1.bf16.msra.mxu0 %v784
        %842 = vmatprep.subr.bf16.mxu0 0
        %843 = vmatpush1.bf16.msra.mxu0 %v783
        %844 = vmatprep.subr.bf16.mxu0 0
        %845 = vmatpush1.bf16.msra.mxu0 %v782
        %846 = vmatprep.subr.bf16.mxu0 0
        %847 = vmatpush2.bf16.msra.mxu0 %v797
        %848 = vmatprep.subr.bf16.mxu0 0
        %849 = vmatpush2.bf16.msra.mxu0 %v796
        %850 = vmatprep.subr.bf16.mxu0 0
        %851 = vmatpush2.bf16.msra.mxu0 %v795
        %852 = vmatprep.subr.bf16.mxu0 0
        %853 = vmatpush2.bf16.msra.mxu0 %v794
        %854 = vmatprep.subr.bf16.mxu0 0
        %855 = vmatpush2.bf16.msra.mxu0 %v793
        %856 = vmatprep.subr.bf16.mxu0 0
        %857 = vmatpush2.bf16.msra.mxu0 %v792
        %858 = vmatprep.subr.bf16.mxu0 0
        %859 = vmatpush2.bf16.msra.mxu0 %v791
        %860 = vmatprep.subr.bf16.mxu0 0
        %861 = vmatpush2.bf16.msra.mxu0 %v790
        %862 = vmatprep.mubr.bf16.mxu0 %v407
        %863 = vmatmul.mubr.bf16.gmra.mxu0 %v324
        %v864 = vpop.f32.mrf.mxu0
        %v865 = vadd.f32 0.0, %v864
        %v866 = vpop.f32.mrf.mxu0
        %v867 = vpop.f32.mrf.mxu0
        %v868 = vadd.f32 0.0, %v867
        %v869 = vpop.f32.mrf.mxu0
        %870 = vmatprep.mubr.bf16.mxu0 %v419
        %871 = vmatmul.mubr.bf16.gmra.mxu0 %v325
        %v872 = vpop.f32.mrf.mxu0
        %v873 = vadd.f32 0.0, %v872
        %v874 = vpop.f32.mrf.mxu0
        %v875 = vpop.f32.mrf.mxu0
        %v876 = vadd.f32 0.0, %v875
        %v877 = vpop.f32.mrf.mxu0
        %878 = vmatprep.mubr.bf16.mxu0 %v431
        %879 = vmatmul.mubr.bf16.gmra.mxu0 %v326
        %v880 = vpop.f32.mrf.mxu0
        %v881 = vadd.f32 0.0, %v880
        %v882 = vpop.f32.mrf.mxu0
        %v883 = vpop.f32.mrf.mxu0
        %v884 = vadd.f32 0.0, %v883
        %v885 = vpop.f32.mrf.mxu0
        %886 = vmatprep.mubr.bf16.mxu0 %v443
        %887 = vmatmul.mubr.bf16.gmra.mxu0 %v327
        %v888 = vpop.f32.mrf.mxu0
        %v889 = vadd.f32 0.0, %v888
        %v890 = vpop.f32.mrf.mxu0
        %v891 = vpop.f32.mrf.mxu0
        %v892 = vadd.f32 0.0, %v891
        %v893 = vpop.f32.mrf.mxu0
        %894 = vmatprep.mubr.bf16.mxu0 %v455
        %895 = vmatmul.mubr.bf16.gmra.mxu0 %v328
        %v896 = vpop.f32.mrf.mxu0
        %v897 = vadd.f32 0.0, %v896
        %v898 = vpop.f32.mrf.mxu0
        %v899 = vpop.f32.mrf.mxu0
        %v900 = vadd.f32 0.0, %v899
        %v901 = vpop.f32.mrf.mxu0
        %902 = vmatprep.mubr.bf16.mxu0 %v467
        %903 = vmatmul.mubr.bf16.gmra.mxu0 %v329
        %v904 = vpop.f32.mrf.mxu0
        %v905 = vadd.f32 0.0, %v904
        %v906 = vpop.f32.mrf.mxu0
        %v907 = vpop.f32.mrf.mxu0
        %v908 = vadd.f32 0.0, %v907
        %v909 = vpop.f32.mrf.mxu0
        %910 = vmatprep.mubr.bf16.mxu0 %v479
        %911 = vmatmul.mubr.bf16.gmra.mxu0 %v330
        %v912 = vpop.f32.mrf.mxu0
        %v913 = vadd.f32 0.0, %v912
        %v914 = vpop.f32.mrf.mxu0
        %v915 = vpop.f32.mrf.mxu0
        %v916 = vadd.f32 0.0, %v915
        %v917 = vpop.f32.mrf.mxu0
        %918 = vmatprep.mubr.bf16.mxu0 %v491
        %919 = vmatmul.mubr.bf16.gmra.mxu0 %v331
        %v920 = vpop.f32.mrf.mxu0
        %v921 = vadd.f32 0.0, %v920
        %v922 = vpop.f32.mrf.mxu0
        %v923 = vpop.f32.mrf.mxu0
        %v924 = vadd.f32 0.0, %v923
        %v925 = vpop.f32.mrf.mxu0
        %926 = vmatprep.mubr.bf16.mxu0 %v503
        %927 = vmatmul.mubr.bf16.gmra.mxu0 %v332
        %v928 = vpop.f32.mrf.mxu0
        %v929 = vadd.f32 0.0, %v928
        %v930 = vpop.f32.mrf.mxu0
        %v931 = vpop.f32.mrf.mxu0
        %v932 = vadd.f32 0.0, %v931
        %v933 = vpop.f32.mrf.mxu0
        %934 = vmatprep.mubr.bf16.mxu0 %v515
        %935 = vmatmul.mubr.bf16.gmra.mxu0 %v333
        %v936 = vpop.f32.mrf.mxu0
        %v937 = vadd.f32 0.0, %v936
        %v938 = vpop.f32.mrf.mxu0
        %v939 = vpop.f32.mrf.mxu0
        %v940 = vadd.f32 0.0, %v939
        %v941 = vpop.f32.mrf.mxu0
        %942 = vdwg.mxu0
        %943 = vmatprep.subr.bf16.mxu0 0
        %944 = vmatpush1.bf16.msra.mxu0 %v805
        %945 = vmatprep.subr.bf16.mxu0 0
        %946 = vmatpush1.bf16.msra.mxu0 %v804
        %947 = vmatprep.subr.bf16.mxu0 0
        %948 = vmatpush1.bf16.msra.mxu0 %v803
        %949 = vmatprep.subr.bf16.mxu0 0
        %950 = vmatpush1.bf16.msra.mxu0 %v802
        %951 = vmatprep.subr.bf16.mxu0 0
        %952 = vmatpush1.bf16.msra.mxu0 %v801
        %953 = vmatprep.subr.bf16.mxu0 0
        %954 = vmatpush1.bf16.msra.mxu0 %v800
        %955 = vmatprep.subr.bf16.mxu0 0
        %956 = vmatpush1.bf16.msra.mxu0 %v799
        %957 = vmatprep.subr.bf16.mxu0 0
        %958 = vmatpush1.bf16.msra.mxu0 %v798
        %959 = vmatprep.subr.bf16.mxu0 0
        %960 = vmatpush2.bf16.msra.mxu0 0
        %961 = vmatprep.subr.bf16.mxu0 0
        %962 = vmatpush2.bf16.msra.mxu0 0
        %963 = vmatprep.subr.bf16.mxu0 0
        %964 = vmatpush2.bf16.msra.mxu0 0
        %965 = vmatprep.subr.bf16.mxu0 0
        %966 = vmatpush2.bf16.msra.mxu0 0
        %967 = vmatprep.subr.bf16.mxu0 0
        %968 = vmatpush2.bf16.msra.mxu0 0
        %969 = vmatprep.subr.bf16.mxu0 0
        %970 = vmatpush2.bf16.msra.mxu0 0
        %971 = vmatprep.subr.bf16.mxu0 0
        %972 = vmatpush2.bf16.msra.mxu0 0
        %973 = vmatprep.subr.bf16.mxu0 0
        %974 = vmatpush2.bf16.msra.mxu0 0
        %975 = vmatprep.mubr.bf16.mxu0 0
        %976 = vmatmul.mubr.bf16.gmra.mxu0 %v546
        %v977 = vpop.f32.mrf.mxu0
        %v978 = vadd.f32 %v865, %v977
        %v979 = vpop.f32.mrf.mxu0
        %v980 = vpop.f32.mrf.mxu0
        %v981 = vadd.f32 %v868, %v980
        %v982 = vpop.f32.mrf.mxu0
        %983 = vmatprep.mubr.bf16.mxu0 0
        %984 = vmatmul.mubr.bf16.gmra.mxu0 %v549
        %v985 = vpop.f32.mrf.mxu0
        %v986 = vadd.f32 %v873, %v985
        %v987 = vpop.f32.mrf.mxu0
        %v988 = vpop.f32.mrf.mxu0
        %v989 = vadd.f32 %v876, %v988
        %v990 = vpop.f32.mrf.mxu0
        %991 = vmatprep.mubr.bf16.mxu0 0
        %992 = vmatmul.mubr.bf16.gmra.mxu0 %v552
        %v993 = vpop.f32.mrf.mxu0
        %v994 = vadd.f32 %v881, %v993
        %v995 = vpop.f32.mrf.mxu0
        %v996 = vpop.f32.mrf.mxu0
        %v997 = vadd.f32 %v884, %v996
        %v998 = vpop.f32.mrf.mxu0
        %999 = vmatprep.mubr.bf16.mxu0 0
        %1000 = vmatmul.mubr.bf16.gmra.mxu0 %v555
        %v1001 = vpop.f32.mrf.mxu0
        %v1002 = vadd.f32 %v889, %v1001
        %v1003 = vpop.f32.mrf.mxu0
        %v1004 = vpop.f32.mrf.mxu0
        %v1005 = vadd.f32 %v892, %v1004
        %v1006 = vpop.f32.mrf.mxu0
        %1007 = vmatprep.mubr.bf16.mxu0 0
        %1008 = vmatmul.mubr.bf16.gmra.mxu0 %v558
        %v1009 = vpop.f32.mrf.mxu0
        %v1010 = vadd.f32 %v897, %v1009
        %v1011 = vpop.f32.mrf.mxu0
        %v1012 = vpop.f32.mrf.mxu0
        %v1013 = vadd.f32 %v900, %v1012
        %v1014 = vpop.f32.mrf.mxu0
        %1015 = vmatprep.mubr.bf16.mxu0 0
        %1016 = vmatmul.mubr.bf16.gmra.mxu0 %v561
        %v1017 = vpop.f32.mrf.mxu0
        %v1018 = vadd.f32 %v905, %v1017
        %v1019 = vpop.f32.mrf.mxu0
        %v1020 = vpop.f32.mrf.mxu0
        %v1021 = vadd.f32 %v908, %v1020
        %v1022 = vpop.f32.mrf.mxu0
        %1023 = vmatprep.mubr.bf16.mxu0 0
        %1024 = vmatmul.mubr.bf16.gmra.mxu0 %v564
        %v1025 = vpop.f32.mrf.mxu0
        %v1026 = vadd.f32 %v913, %v1025
        %v1027 = vpop.f32.mrf.mxu0
        %v1028 = vpop.f32.mrf.mxu0
        %v1029 = vadd.f32 %v916, %v1028
        %v1030 = vpop.f32.mrf.mxu0
        %1031 = vmatprep.mubr.bf16.mxu0 0
        %1032 = vmatmul.mubr.bf16.gmra.mxu0 %v567
        %v1033 = vpop.f32.mrf.mxu0
        %v1034 = vadd.f32 %v921, %v1033
        %v1035 = vpop.f32.mrf.mxu0
        %v1036 = vpop.f32.mrf.mxu0
        %v1037 = vadd.f32 %v924, %v1036
        %v1038 = vpop.f32.mrf.mxu0
        %1039 = vmatprep.mubr.bf16.mxu0 0
        %1040 = vmatmul.mubr.bf16.gmra.mxu0 %v570
        %v1041 = vpop.f32.mrf.mxu0
        %v1042 = vadd.f32 %v929, %v1041
        %v1043 = vpop.f32.mrf.mxu0
        %v1044 = vpop.f32.mrf.mxu0
        %v1045 = vadd.f32 %v932, %v1044
        %v1046 = vpop.f32.mrf.mxu0
        %1047 = vmatprep.mubr.bf16.mxu0 0
        %1048 = vmatmul.mubr.bf16.gmra.mxu0 %v573
        %v1049 = vpop.f32.mrf.mxu0
        %v1050 = vadd.f32 %v937, %v1049
        %v1051 = vpop.f32.mrf.mxu0
        %v1052 = vpop.f32.mrf.mxu0
        %v1053 = vadd.f32 %v940, %v1052
        %v1054 = vpop.f32.mrf.mxu0
        %1055 = vdwg.mxu0
        %v1104 = vunpack.c.l.b16 %v589
        %v1105 = vunpack.c.l.b16 %v590
        %v1106 = vunpack.c.l.b16 %v591
        %v1107 = vunpack.c.l.b16 %v592
        %v1108 = vunpack.c.l.b16 %v593
        %v1109 = vunpack.c.l.b16 %v594
        %v1110 = vunpack.c.l.b16 %v595
        %v1111 = vunpack.c.l.b16 %v596
        %v1112 = vunpack.c.l.b16 %v597
        %v1113 = vunpack.c.l.b16 %v598
        %v1114 = vunpack.c.l.b16 %v599
        %v1115 = vunpack.c.l.b16 %v600
        %v1116 = vunpack.c.l.b16 %v601
        %v1117 = vunpack.c.l.b16 %v602
        %v1118 = vunpack.c.l.b16 %v603
        %v1119 = vunpack.c.l.b16 %v604
        %v1120 = vunpack.c.l.b16 %v605
        %v1121 = vunpack.c.l.b16 %v606
        %v1122 = vunpack.c.l.b16 %v607
        %v1123 = vunpack.c.l.b16 %v608
        %v1124 = vunpack.c.l.b16 %v609
        %v1125 = vunpack.c.l.b16 %v610
        %v1126 = vunpack.c.l.b16 %v611
        %v1127 = vunpack.c.l.b16 %v612
        %v1128 = vunpack.c.l.b16 %v613
        %v1129 = vunpack.c.l.b16 %v614
        %v1130 = vunpack.c.l.b16 %v615
        %v1131 = vunpack.c.l.b16 %v616
        %v1132 = vunpack.c.l.b16 %v617
        %v1133 = vunpack.c.l.b16 %v618
        %v1134 = vunpack.c.l.b16 %v619
        %v1135 = vunpack.c.l.b16 %v620
        %v1136 = vunpack.c.l.b16 %v621
        %v1137 = vunpack.c.l.b16 %v622
        %v1138 = vunpack.c.l.b16 %v623
        %v1139 = vunpack.c.l.b16 %v624
        %v1140 = vunpack.c.l.b16 %v625
        %v1141 = vunpack.c.l.b16 %v626
        %v1142 = vunpack.c.l.b16 %v627
        %v1143 = vunpack.c.l.b16 %v628
        %v1144 = vunpack.c.l.b16 %v629
        %v1145 = vunpack.c.l.b16 %v630
        %v1146 = vunpack.c.l.b16 %v631
        %v1147 = vunpack.c.l.b16 %v632
        %v1148 = vunpack.c.l.b16 %v633
        %v1149 = vunpack.c.l.b16 %v634
        %v1150 = vunpack.c.l.b16 %v635
        %v1151 = vunpack.c.l.b16 %v636
        %v1152 = vpack.c.b16 %v1105, %v1104
        %v1153 = vpack.c.b16 %v1107, %v1106
        %v1154 = vpack.c.b16 %v1109, %v1108
        %v1155 = vpack.c.b16 %v1111, %v1110
        %v1156 = vpack.c.b16 %v1113, %v1112
        %v1157 = vpack.c.b16 %v1115, %v1114
        %v1158 = vpack.c.b16 %v1117, %v1116
        %v1159 = vpack.c.b16 %v1119, %v1118
        %v1160 = vpack.c.b16 %v1121, %v1120
        %v1161 = vpack.c.b16 %v1123, %v1122
        %v1162 = vpack.c.b16 %v1125, %v1124
        %v1163 = vpack.c.b16 %v1127, %v1126
        %v1164 = vpack.c.b16 %v1129, %v1128
        %v1165 = vpack.c.b16 %v1131, %v1130
        %v1166 = vpack.c.b16 %v1133, %v1132
        %v1167 = vpack.c.b16 %v1135, %v1134
        %v1168 = vpack.c.b16 %v1137, %v1136
        %v1169 = vpack.c.b16 %v1139, %v1138
        %v1170 = vpack.c.b16 %v1141, %v1140
        %v1171 = vpack.c.b16 %v1143, %v1142
        %v1172 = vpack.c.b16 %v1145, %v1144
        %v1173 = vpack.c.b16 %v1147, %v1146
        %v1174 = vpack.c.b16 %v1149, %v1148
        %v1175 = vpack.c.b16 %v1151, %v1150
        %1200 = vmatprep.subr.bf16.mxu0 0
        %1201 = vmatpush1.bf16.msra.mxu0 %v1159
        %1202 = vmatprep.subr.bf16.mxu0 0
        %1203 = vmatpush1.bf16.msra.mxu0 %v1158
        %1204 = vmatprep.subr.bf16.mxu0 0
        %1205 = vmatpush1.bf16.msra.mxu0 %v1157
        %1206 = vmatprep.subr.bf16.mxu0 0
        %1207 = vmatpush1.bf16.msra.mxu0 %v1156
        %1208 = vmatprep.subr.bf16.mxu0 0
        %1209 = vmatpush1.bf16.msra.mxu0 %v1155
        %1210 = vmatprep.subr.bf16.mxu0 0
        %1211 = vmatpush1.bf16.msra.mxu0 %v1154
        %1212 = vmatprep.subr.bf16.mxu0 0
        %1213 = vmatpush1.bf16.msra.mxu0 %v1153
        %1214 = vmatprep.subr.bf16.mxu0 0
        %1215 = vmatpush1.bf16.msra.mxu0 %v1152
        %1216 = vmatprep.subr.bf16.mxu0 0
        %1217 = vmatpush2.bf16.msra.mxu0 %v1167
        %1218 = vmatprep.subr.bf16.mxu0 0
        %1219 = vmatpush2.bf16.msra.mxu0 %v1166
        %1220 = vmatprep.subr.bf16.mxu0 0
        %1221 = vmatpush2.bf16.msra.mxu0 %v1165
        %1222 = vmatprep.subr.bf16.mxu0 0
        %1223 = vmatpush2.bf16.msra.mxu0 %v1164
        %1224 = vmatprep.subr.bf16.mxu0 0
        %1225 = vmatpush2.bf16.msra.mxu0 %v1163
        %1226 = vmatprep.subr.bf16.mxu0 0
        %1227 = vmatpush2.bf16.msra.mxu0 %v1162
        %1228 = vmatprep.subr.bf16.mxu0 0
        %1229 = vmatpush2.bf16.msra.mxu0 %v1161
        %1230 = vmatprep.subr.bf16.mxu0 0
        %1231 = vmatpush2.bf16.msra.mxu0 %v1160
        %1232 = vmatprep.mubr.bf16.mxu0 %v395
        %1233 = vmatmul.mubr.bf16.gmra.mxu0 %v323
        %v1234 = vpop.f32.mrf.mxu0
        %v1235 = vadd.f32 %v978, %v1234
        %v1236 = vpop.f32.mrf.mxu0
        %v1237 = vpop.f32.mrf.mxu0
        %v1238 = vadd.f32 %v981, %v1237
        %v1239 = vpop.f32.mrf.mxu0
        %1240 = vmatprep.mubr.bf16.mxu0 %v407
        %1241 = vmatmul.mubr.bf16.gmra.mxu0 %v324
        %v1242 = vpop.f32.mrf.mxu0
        %v1243 = vadd.f32 %v986, %v1242
        %v1244 = vpop.f32.mrf.mxu0
        %v1245 = vpop.f32.mrf.mxu0
        %v1246 = vadd.f32 %v989, %v1245
        %v1247 = vpop.f32.mrf.mxu0
        %1248 = vmatprep.mubr.bf16.mxu0 %v419
        %1249 = vmatmul.mubr.bf16.gmra.mxu0 %v325
        %v1250 = vpop.f32.mrf.mxu0
        %v1251 = vadd.f32 %v994, %v1250
        %v1252 = vpop.f32.mrf.mxu0
        %v1253 = vpop.f32.mrf.mxu0
        %v1254 = vadd.f32 %v997, %v1253
        %v1255 = vpop.f32.mrf.mxu0
        %1256 = vmatprep.mubr.bf16.mxu0 %v431
        %1257 = vmatmul.mubr.bf16.gmra.mxu0 %v326
        %v1258 = vpop.f32.mrf.mxu0
        %v1259 = vadd.f32 %v1002, %v1258
        %v1260 = vpop.f32.mrf.mxu0
        %v1261 = vpop.f32.mrf.mxu0
        %v1262 = vadd.f32 %v1005, %v1261
        %v1263 = vpop.f32.mrf.mxu0
        %1264 = vmatprep.mubr.bf16.mxu0 %v443
        %1265 = vmatmul.mubr.bf16.gmra.mxu0 %v327
        %v1266 = vpop.f32.mrf.mxu0
        %v1267 = vadd.f32 %v1010, %v1266
        %v1268 = vpop.f32.mrf.mxu0
        %v1269 = vpop.f32.mrf.mxu0
        %v1270 = vadd.f32 %v1013, %v1269
        %v1271 = vpop.f32.mrf.mxu0
        %1272 = vmatprep.mubr.bf16.mxu0 %v455
        %1273 = vmatmul.mubr.bf16.gmra.mxu0 %v328
        %v1274 = vpop.f32.mrf.mxu0
        %v1275 = vadd.f32 %v1018, %v1274
        %v1276 = vpop.f32.mrf.mxu0
        %v1277 = vpop.f32.mrf.mxu0
        %v1278 = vadd.f32 %v1021, %v1277
        %v1279 = vpop.f32.mrf.mxu0
        %1280 = vmatprep.mubr.bf16.mxu0 %v467
        %1281 = vmatmul.mubr.bf16.gmra.mxu0 %v329
        %v1282 = vpop.f32.mrf.mxu0
        %v1283 = vadd.f32 %v1026, %v1282
        %v1284 = vpop.f32.mrf.mxu0
        %v1285 = vpop.f32.mrf.mxu0
        %v1286 = vadd.f32 %v1029, %v1285
        %v1287 = vpop.f32.mrf.mxu0
        %1288 = vmatprep.mubr.bf16.mxu0 %v479
        %1289 = vmatmul.mubr.bf16.gmra.mxu0 %v330
        %v1290 = vpop.f32.mrf.mxu0
        %v1291 = vadd.f32 %v1034, %v1290
        %v1292 = vpop.f32.mrf.mxu0
        %v1293 = vpop.f32.mrf.mxu0
        %v1294 = vadd.f32 %v1037, %v1293
        %v1295 = vpop.f32.mrf.mxu0
        %1296 = vmatprep.mubr.bf16.mxu0 %v491
        %1297 = vmatmul.mubr.bf16.gmra.mxu0 %v331
        %v1298 = vpop.f32.mrf.mxu0
        %v1299 = vadd.f32 %v1042, %v1298
        %v1300 = vpop.f32.mrf.mxu0
        %v1301 = vpop.f32.mrf.mxu0
        %v1302 = vadd.f32 %v1045, %v1301
        %v1303 = vpop.f32.mrf.mxu0
        %1304 = vmatprep.mubr.bf16.mxu0 %v503
        %1305 = vmatmul.mubr.bf16.gmra.mxu0 %v332
        %v1306 = vpop.f32.mrf.mxu0
        %v1307 = vadd.f32 %v1050, %v1306
        %v1308 = vpop.f32.mrf.mxu0
        %v1309 = vpop.f32.mrf.mxu0
        %v1310 = vadd.f32 %v1053, %v1309
        %v1311 = vpop.f32.mrf.mxu0
        %1312 = vdwg.mxu0
        %1313 = vmatprep.subr.bf16.mxu0 0
        %1314 = vmatpush1.bf16.msra.mxu0 %v1175
        %1315 = vmatprep.subr.bf16.mxu0 0
        %1316 = vmatpush1.bf16.msra.mxu0 %v1174
        %1317 = vmatprep.subr.bf16.mxu0 0
        %1318 = vmatpush1.bf16.msra.mxu0 %v1173
        %1319 = vmatprep.subr.bf16.mxu0 0
        %1320 = vmatpush1.bf16.msra.mxu0 %v1172
        %1321 = vmatprep.subr.bf16.mxu0 0
        %1322 = vmatpush1.bf16.msra.mxu0 %v1171
        %1323 = vmatprep.subr.bf16.mxu0 0
        %1324 = vmatpush1.bf16.msra.mxu0 %v1170
        %1325 = vmatprep.subr.bf16.mxu0 0
        %1326 = vmatpush1.bf16.msra.mxu0 %v1169
        %1327 = vmatprep.subr.bf16.mxu0 0
        %1328 = vmatpush1.bf16.msra.mxu0 %v1168
        %1329 = vmatprep.subr.bf16.mxu0 0
        %1330 = vmatpush2.bf16.msra.mxu0 0
        %1331 = vmatprep.subr.bf16.mxu0 0
        %1332 = vmatpush2.bf16.msra.mxu0 0
        %1333 = vmatprep.subr.bf16.mxu0 0
        %1334 = vmatpush2.bf16.msra.mxu0 0
        %1335 = vmatprep.subr.bf16.mxu0 0
        %1336 = vmatpush2.bf16.msra.mxu0 0
        %1337 = vmatprep.subr.bf16.mxu0 0
        %1338 = vmatpush2.bf16.msra.mxu0 0
        %1339 = vmatprep.subr.bf16.mxu0 0
        %1340 = vmatpush2.bf16.msra.mxu0 0
        %1341 = vmatprep.subr.bf16.mxu0 0
        %1342 = vmatpush2.bf16.msra.mxu0 0
        %1343 = vmatprep.subr.bf16.mxu0 0
        %1344 = vmatpush2.bf16.msra.mxu0 0
        %1345 = vmatprep.mubr.bf16.mxu0 0
        %1346 = vmatmul.mubr.bf16.gmra.mxu0 %v543
        %v1347 = vpop.f32.mrf.mxu0
        %v1348 = vadd.f32 %v1235, %v1347
        %v1349 = vpop.f32.mrf.mxu0
        %v1350 = vpop.f32.mrf.mxu0
        %v1351 = vadd.f32 %v1238, %v1350
        %v1352 = vpop.f32.mrf.mxu0
        %1353 = vmatprep.mubr.bf16.mxu0 0
        %1354 = vmatmul.mubr.bf16.gmra.mxu0 %v546
        %v1355 = vpop.f32.mrf.mxu0
        %v1356 = vadd.f32 %v1243, %v1355
        %v1357 = vpop.f32.mrf.mxu0
        %v1358 = vpop.f32.mrf.mxu0
        %v1359 = vadd.f32 %v1246, %v1358
        %v1360 = vpop.f32.mrf.mxu0
        %1361 = vmatprep.mubr.bf16.mxu0 0
        %1362 = vmatmul.mubr.bf16.gmra.mxu0 %v549
        %v1363 = vpop.f32.mrf.mxu0
        %v1364 = vadd.f32 %v1251, %v1363
        %v1365 = vpop.f32.mrf.mxu0
        %v1366 = vpop.f32.mrf.mxu0
        %v1367 = vadd.f32 %v1254, %v1366
        %v1368 = vpop.f32.mrf.mxu0
        %1369 = vmatprep.mubr.bf16.mxu0 0
        %1370 = vmatmul.mubr.bf16.gmra.mxu0 %v552
        %v1371 = vpop.f32.mrf.mxu0
        %v1372 = vadd.f32 %v1259, %v1371
        %v1373 = vpop.f32.mrf.mxu0
        %v1374 = vpop.f32.mrf.mxu0
        %v1375 = vadd.f32 %v1262, %v1374
        %v1376 = vpop.f32.mrf.mxu0
        %1377 = vmatprep.mubr.bf16.mxu0 0
        %1378 = vmatmul.mubr.bf16.gmra.mxu0 %v555
        %v1379 = vpop.f32.mrf.mxu0
        %v1380 = vadd.f32 %v1267, %v1379
        %v1381 = vpop.f32.mrf.mxu0
        %v1382 = vpop.f32.mrf.mxu0
        %v1383 = vadd.f32 %v1270, %v1382
        %v1384 = vpop.f32.mrf.mxu0
        %1385 = vmatprep.mubr.bf16.mxu0 0
        %1386 = vmatmul.mubr.bf16.gmra.mxu0 %v558
        %v1387 = vpop.f32.mrf.mxu0
        %v1388 = vadd.f32 %v1275, %v1387
        %v1389 = vpop.f32.mrf.mxu0
        %v1390 = vpop.f32.mrf.mxu0
        %v1391 = vadd.f32 %v1278, %v1390
        %v1392 = vpop.f32.mrf.mxu0
        %1393 = vmatprep.mubr.bf16.mxu0 0
        %1394 = vmatmul.mubr.bf16.gmra.mxu0 %v561
        %v1395 = vpop.f32.mrf.mxu0
        %v1396 = vadd.f32 %v1283, %v1395
        %v1397 = vpop.f32.mrf.mxu0
        %v1398 = vpop.f32.mrf.mxu0
        %v1399 = vadd.f32 %v1286, %v1398
        %v1400 = vpop.f32.mrf.mxu0
        %1401 = vmatprep.mubr.bf16.mxu0 0
        %1402 = vmatmul.mubr.bf16.gmra.mxu0 %v564
        %v1403 = vpop.f32.mrf.mxu0
        %v1404 = vadd.f32 %v1291, %v1403
        %v1405 = vpop.f32.mrf.mxu0
        %v1406 = vpop.f32.mrf.mxu0
        %v1407 = vadd.f32 %v1294, %v1406
        %v1408 = vpop.f32.mrf.mxu0
        %1409 = vmatprep.mubr.bf16.mxu0 0
        %1410 = vmatmul.mubr.bf16.gmra.mxu0 %v567
        %v1411 = vpop.f32.mrf.mxu0
        %v1412 = vadd.f32 %v1299, %v1411
        %v1413 = vpop.f32.mrf.mxu0
        %v1414 = vpop.f32.mrf.mxu0
        %v1415 = vadd.f32 %v1302, %v1414
        %v1416 = vpop.f32.mrf.mxu0
        %1417 = vmatprep.mubr.bf16.mxu0 0
        %1418 = vmatmul.mubr.bf16.gmra.mxu0 %v570
        %v1419 = vpop.f32.mrf.mxu0
        %v1420 = vadd.f32 %v1307, %v1419
        %v1421 = vpop.f32.mrf.mxu0
        %v1422 = vpop.f32.mrf.mxu0
        %v1423 = vadd.f32 %v1310, %v1422
        %v1424 = vpop.f32.mrf.mxu0
        %1425 = vdwg.mxu0
        %s1426 = scalar_lea.vmem %s1, 384
        %v1427 = vld [vmem:[%s1426] sm:$0xf]
        %v1428 = vld [vmem:[%s1426 + $0x4] sm:$0xf]
        %v1429 = vld [vmem:[%s1426 + $0x8] sm:$0xf]
        %v1430 = vld [vmem:[%s1426 + $0xc] sm:$0xf]
        %v1431 = vld [vmem:[%s1426 + $0x10] sm:$0xf]
        %v1432 = vld [vmem:[%s1426 + $0x14] sm:$0xf]
        %v1433 = vld [vmem:[%s1426 + $0x18] sm:$0xf]
        %v1434 = vld [vmem:[%s1426 + $0x1c] sm:$0xf]
        %v1435 = vld [vmem:[%s1426 + $0x20] sm:$0xf]
        %v1436 = vld [vmem:[%s1426 + $0x24] sm:$0xf]
        %v1437 = vld [vmem:[%s1426 + $0x28] sm:$0xf]
        %v1438 = vld [vmem:[%s1426 + $0x2c] sm:$0xf]
        %v1439 = vld [vmem:[%s1426 + $0x30] sm:$0xf]
        %v1440 = vld [vmem:[%s1426 + $0x34] sm:$0xf]
        %v1441 = vld [vmem:[%s1426 + $0x38] sm:$0xf]
        %v1442 = vld [vmem:[%s1426 + $0x3c] sm:$0xf]
        %v1443 = vld [vmem:[%s1426 + $0x40] sm:$0xf]
        %v1444 = vld [vmem:[%s1426 + $0x44] sm:$0xf]
        %v1445 = vld [vmem:[%s1426 + $0x48] sm:$0xf]
        %v1446 = vld [vmem:[%s1426 + $0x4c] sm:$0xf]
        %v1447 = vld [vmem:[%s1426 + $0x50] sm:$0xf]
        %v1448 = vld [vmem:[%s1426 + $0x54] sm:$0xf]
        %v1449 = vld [vmem:[%s1426 + $0x58] sm:$0xf]
        %v1450 = vld [vmem:[%s1426 + $0x5c] sm:$0xf]
        %v1451 = vld [vmem:[%s1426 + $0x60] sm:$0xf]
        %v1452 = vld [vmem:[%s1426 + $0x64] sm:$0xf]
        %v1453 = vld [vmem:[%s1426 + $0x68] sm:$0xf]
        %v1454 = vld [vmem:[%s1426 + $0x6c] sm:$0xf]
        %v1455 = vld [vmem:[%s1426 + $0x70] sm:$0xf]
        %v1456 = vld [vmem:[%s1426 + $0x74] sm:$0xf]
        %v1457 = vld [vmem:[%s1426 + $0x78] sm:$0xf]
        %v1458 = vld [vmem:[%s1426 + $0x7c] sm:$0xf]
        %v1459 = vld [vmem:[%s1426 + $0x80] sm:$0xf]
        %v1460 = vld [vmem:[%s1426 + $0x84] sm:$0xf]
        %v1461 = vld [vmem:[%s1426 + $0x88] sm:$0xf]
        %v1462 = vld [vmem:[%s1426 + $0x8c] sm:$0xf]
        %v1463 = vld [vmem:[%s1426 + $0x90] sm:$0xf]
        %v1464 = vld [vmem:[%s1426 + $0x94] sm:$0xf]
        %v1465 = vld [vmem:[%s1426 + $0x98] sm:$0xf]
        %v1466 = vld [vmem:[%s1426 + $0x9c] sm:$0xf]
        %v1467 = vld [vmem:[%s1426 + $0xa0] sm:$0xf]
        %v1468 = vld [vmem:[%s1426 + $0xa4] sm:$0xf]
        %v1469 = vld [vmem:[%s1426 + $0xa8] sm:$0xf]
        %v1470 = vld [vmem:[%s1426 + $0xac] sm:$0xf]
        %v1471 = vld [vmem:[%s1426 + $0xb0] sm:$0xf]
        %v1472 = vld [vmem:[%s1426 + $0xb4] sm:$0xf]
        %v1473 = vld [vmem:[%s1426 + $0xb8] sm:$0xf]
        %v1474 = vld [vmem:[%s1426 + $0xbc] sm:$0xf]
        %v1523 = vunpack.c.l.b16 %v1427
        %v1524 = vunpack.c.l.b16 %v1428
        %v1525 = vunpack.c.l.b16 %v1429
        %v1526 = vunpack.c.l.b16 %v1430
        %v1527 = vunpack.c.l.b16 %v1431
        %v1528 = vunpack.c.l.b16 %v1432
        %v1529 = vunpack.c.l.b16 %v1433
        %v1530 = vunpack.c.l.b16 %v1434
        %v1531 = vunpack.c.l.b16 %v1435
        %v1532 = vunpack.c.l.b16 %v1436
        %v1533 = vunpack.c.l.b16 %v1437
        %v1534 = vunpack.c.l.b16 %v1438
        %v1535 = vunpack.c.l.b16 %v1439
        %v1536 = vunpack.c.l.b16 %v1440
        %v1537 = vunpack.c.l.b16 %v1441
        %v1538 = vunpack.c.l.b16 %v1442
        %v1539 = vunpack.c.l.b16 %v1443
        %v1540 = vunpack.c.l.b16 %v1444
        %v1541 = vunpack.c.l.b16 %v1445
        %v1542 = vunpack.c.l.b16 %v1446
        %v1543 = vunpack.c.l.b16 %v1447
        %v1544 = vunpack.c.l.b16 %v1448
        %v1545 = vunpack.c.l.b16 %v1449
        %v1546 = vunpack.c.l.b16 %v1450
        %v1547 = vunpack.c.l.b16 %v1451
        %v1548 = vunpack.c.l.b16 %v1452
        %v1549 = vunpack.c.l.b16 %v1453
        %v1550 = vunpack.c.l.b16 %v1454
        %v1551 = vunpack.c.l.b16 %v1455
        %v1552 = vunpack.c.l.b16 %v1456
        %v1553 = vunpack.c.l.b16 %v1457
        %v1554 = vunpack.c.l.b16 %v1458
        %v1555 = vunpack.c.l.b16 %v1459
        %v1556 = vunpack.c.l.b16 %v1460
        %v1557 = vunpack.c.l.b16 %v1461
        %v1558 = vunpack.c.l.b16 %v1462
        %v1559 = vunpack.c.l.b16 %v1463
        %v1560 = vunpack.c.l.b16 %v1464
        %v1561 = vunpack.c.l.b16 %v1465
        %v1562 = vunpack.c.l.b16 %v1466
        %v1563 = vunpack.c.l.b16 %v1467
        %v1564 = vunpack.c.l.b16 %v1468
        %v1565 = vunpack.c.l.b16 %v1469
        %v1566 = vunpack.c.l.b16 %v1470
        %v1567 = vunpack.c.l.b16 %v1471
        %v1568 = vunpack.c.l.b16 %v1472
        %v1569 = vunpack.c.l.b16 %v1473
        %v1570 = vunpack.c.l.b16 %v1474
        %v1571 = vpack.c.b16 %v1524, %v1523
        %v1572 = vpack.c.b16 %v1526, %v1525
        %v1573 = vpack.c.b16 %v1528, %v1527
        %v1574 = vpack.c.b16 %v1530, %v1529
        %v1575 = vpack.c.b16 %v1532, %v1531
        %v1576 = vpack.c.b16 %v1534, %v1533
        %v1577 = vpack.c.b16 %v1536, %v1535
        %v1578 = vpack.c.b16 %v1538, %v1537
        %v1579 = vpack.c.b16 %v1540, %v1539
        %v1580 = vpack.c.b16 %v1542, %v1541
        %v1581 = vpack.c.b16 %v1544, %v1543
        %v1582 = vpack.c.b16 %v1546, %v1545
        %v1583 = vpack.c.b16 %v1548, %v1547
        %v1584 = vpack.c.b16 %v1550, %v1549
        %v1585 = vpack.c.b16 %v1552, %v1551
        %v1586 = vpack.c.b16 %v1554, %v1553
        %v1587 = vpack.c.b16 %v1556, %v1555
        %v1588 = vpack.c.b16 %v1558, %v1557
        %v1589 = vpack.c.b16 %v1560, %v1559
        %v1590 = vpack.c.b16 %v1562, %v1561
        %v1591 = vpack.c.b16 %v1564, %v1563
        %v1592 = vpack.c.b16 %v1566, %v1565
        %v1593 = vpack.c.b16 %v1568, %v1567
        %v1594 = vpack.c.b16 %v1570, %v1569
        %1619 = vmatprep.subr.bf16.mxu0 0
        %1620 = vmatpush1.bf16.msra.mxu0 %v1578
        %1621 = vmatprep.subr.bf16.mxu0 0
        %1622 = vmatpush1.bf16.msra.mxu0 %v1577
        %1623 = vmatprep.subr.bf16.mxu0 0
        %1624 = vmatpush1.bf16.msra.mxu0 %v1576
        %1625 = vmatprep.subr.bf16.mxu0 0
        %1626 = vmatpush1.bf16.msra.mxu0 %v1575
        %1627 = vmatprep.subr.bf16.mxu0 0
        %1628 = vmatpush1.bf16.msra.mxu0 %v1574
        %1629 = vmatprep.subr.bf16.mxu0 0
        %1630 = vmatpush1.bf16.msra.mxu0 %v1573
        %1631 = vmatprep.subr.bf16.mxu0 0
        %1632 = vmatpush1.bf16.msra.mxu0 %v1572
        %1633 = vmatprep.subr.bf16.mxu0 0
        %1634 = vmatpush1.bf16.msra.mxu0 %v1571
        %1635 = vmatprep.subr.bf16.mxu0 0
        %1636 = vmatpush2.bf16.msra.mxu0 %v1586
        %1637 = vmatprep.subr.bf16.mxu0 0
        %1638 = vmatpush2.bf16.msra.mxu0 %v1585
        %1639 = vmatprep.subr.bf16.mxu0 0
        %1640 = vmatpush2.bf16.msra.mxu0 %v1584
        %1641 = vmatprep.subr.bf16.mxu0 0
        %1642 = vmatpush2.bf16.msra.mxu0 %v1583
        %1643 = vmatprep.subr.bf16.mxu0 0
        %1644 = vmatpush2.bf16.msra.mxu0 %v1582
        %1645 = vmatprep.subr.bf16.mxu0 0
        %1646 = vmatpush2.bf16.msra.mxu0 %v1581
        %1647 = vmatprep.subr.bf16.mxu0 0
        %1648 = vmatpush2.bf16.msra.mxu0 %v1580
        %1649 = vmatprep.subr.bf16.mxu0 0
        %1650 = vmatpush2.bf16.msra.mxu0 %v1579
        %1651 = vmatprep.mubr.bf16.mxu0 %v419
        %1652 = vmatmul.mubr.bf16.gmra.mxu0 %v325
        %v1653 = vpop.f32.mrf.mxu0
        %v1654 = vadd.f32 0.0, %v1653
        %v1655 = vpop.f32.mrf.mxu0
        %v1656 = vpop.f32.mrf.mxu0
        %v1657 = vadd.f32 0.0, %v1656
        %v1658 = vpop.f32.mrf.mxu0
        %1659 = vmatprep.mubr.bf16.mxu0 %v431
        %1660 = vmatmul.mubr.bf16.gmra.mxu0 %v326
        %v1661 = vpop.f32.mrf.mxu0
        %v1662 = vadd.f32 0.0, %v1661
        %v1663 = vpop.f32.mrf.mxu0
        %v1664 = vpop.f32.mrf.mxu0
        %v1665 = vadd.f32 0.0, %v1664
        %v1666 = vpop.f32.mrf.mxu0
        %1667 = vmatprep.mubr.bf16.mxu0 %v443
        %1668 = vmatmul.mubr.bf16.gmra.mxu0 %v327
        %v1669 = vpop.f32.mrf.mxu0
        %v1670 = vadd.f32 0.0, %v1669
        %v1671 = vpop.f32.mrf.mxu0
        %v1672 = vpop.f32.mrf.mxu0
        %v1673 = vadd.f32 0.0, %v1672
        %v1674 = vpop.f32.mrf.mxu0
        %1675 = vmatprep.mubr.bf16.mxu0 %v455
        %1676 = vmatmul.mubr.bf16.gmra.mxu0 %v328
        %v1677 = vpop.f32.mrf.mxu0
        %v1678 = vadd.f32 0.0, %v1677
        %v1679 = vpop.f32.mrf.mxu0
        %v1680 = vpop.f32.mrf.mxu0
        %v1681 = vadd.f32 0.0, %v1680
        %v1682 = vpop.f32.mrf.mxu0
        %1683 = vmatprep.mubr.bf16.mxu0 %v467
        %1684 = vmatmul.mubr.bf16.gmra.mxu0 %v329
        %v1685 = vpop.f32.mrf.mxu0
        %v1686 = vadd.f32 0.0, %v1685
        %v1687 = vpop.f32.mrf.mxu0
        %v1688 = vpop.f32.mrf.mxu0
        %v1689 = vadd.f32 0.0, %v1688
        %v1690 = vpop.f32.mrf.mxu0
        %1691 = vmatprep.mubr.bf16.mxu0 %v479
        %1692 = vmatmul.mubr.bf16.gmra.mxu0 %v330
        %v1693 = vpop.f32.mrf.mxu0
        %v1694 = vadd.f32 0.0, %v1693
        %v1695 = vpop.f32.mrf.mxu0
        %v1696 = vpop.f32.mrf.mxu0
        %v1697 = vadd.f32 0.0, %v1696
        %v1698 = vpop.f32.mrf.mxu0
        %1699 = vmatprep.mubr.bf16.mxu0 %v491
        %1700 = vmatmul.mubr.bf16.gmra.mxu0 %v331
        %v1701 = vpop.f32.mrf.mxu0
        %v1702 = vadd.f32 0.0, %v1701
        %v1703 = vpop.f32.mrf.mxu0
        %v1704 = vpop.f32.mrf.mxu0
        %v1705 = vadd.f32 0.0, %v1704
        %v1706 = vpop.f32.mrf.mxu0
        %1707 = vmatprep.mubr.bf16.mxu0 %v503
        %1708 = vmatmul.mubr.bf16.gmra.mxu0 %v332
        %v1709 = vpop.f32.mrf.mxu0
        %v1710 = vadd.f32 0.0, %v1709
        %v1711 = vpop.f32.mrf.mxu0
        %v1712 = vpop.f32.mrf.mxu0
        %v1713 = vadd.f32 0.0, %v1712
        %v1714 = vpop.f32.mrf.mxu0
        %1715 = vmatprep.mubr.bf16.mxu0 %v515
        %1716 = vmatmul.mubr.bf16.gmra.mxu0 %v333
        %v1717 = vpop.f32.mrf.mxu0
        %v1718 = vadd.f32 0.0, %v1717
        %v1719 = vpop.f32.mrf.mxu0
        %v1720 = vpop.f32.mrf.mxu0
        %v1721 = vadd.f32 0.0, %v1720
        %v1722 = vpop.f32.mrf.mxu0
        %1723 = vmatprep.mubr.bf16.mxu0 %v527
        %1724 = vmatmul.mubr.bf16.gmra.mxu0 %v334
        %v1725 = vpop.f32.mrf.mxu0
        %v1726 = vadd.f32 0.0, %v1725
        %v1727 = vpop.f32.mrf.mxu0
        %v1728 = vpop.f32.mrf.mxu0
        %v1729 = vadd.f32 0.0, %v1728
        %v1730 = vpop.f32.mrf.mxu0
        %1731 = vdwg.mxu0
        %1732 = vmatprep.subr.bf16.mxu0 0
        %1733 = vmatpush1.bf16.msra.mxu0 %v1594
        %1734 = vmatprep.subr.bf16.mxu0 0
        %1735 = vmatpush1.bf16.msra.mxu0 %v1593
        %1736 = vmatprep.subr.bf16.mxu0 0
        %1737 = vmatpush1.bf16.msra.mxu0 %v1592
        %1738 = vmatprep.subr.bf16.mxu0 0
        %1739 = vmatpush1.bf16.msra.mxu0 %v1591
        %1740 = vmatprep.subr.bf16.mxu0 0
        %1741 = vmatpush1.bf16.msra.mxu0 %v1590
        %1742 = vmatprep.subr.bf16.mxu0 0
        %1743 = vmatpush1.bf16.msra.mxu0 %v1589
        %1744 = vmatprep.subr.bf16.mxu0 0
        %1745 = vmatpush1.bf16.msra.mxu0 %v1588
        %1746 = vmatprep.subr.bf16.mxu0 0
        %1747 = vmatpush1.bf16.msra.mxu0 %v1587
        %1748 = vmatprep.subr.bf16.mxu0 0
        %1749 = vmatpush2.bf16.msra.mxu0 0
        %1750 = vmatprep.subr.bf16.mxu0 0
        %1751 = vmatpush2.bf16.msra.mxu0 0
        %1752 = vmatprep.subr.bf16.mxu0 0
        %1753 = vmatpush2.bf16.msra.mxu0 0
        %1754 = vmatprep.subr.bf16.mxu0 0
        %1755 = vmatpush2.bf16.msra.mxu0 0
        %1756 = vmatprep.subr.bf16.mxu0 0
        %1757 = vmatpush2.bf16.msra.mxu0 0
        %1758 = vmatprep.subr.bf16.mxu0 0
        %1759 = vmatpush2.bf16.msra.mxu0 0
        %1760 = vmatprep.subr.bf16.mxu0 0
        %1761 = vmatpush2.bf16.msra.mxu0 0
        %1762 = vmatprep.subr.bf16.mxu0 0
        %1763 = vmatpush2.bf16.msra.mxu0 0
        %1764 = vmatprep.mubr.bf16.mxu0 0
        %1765 = vmatmul.mubr.bf16.gmra.mxu0 %v549
        %v1766 = vpop.f32.mrf.mxu0
        %v1767 = vadd.f32 %v1654, %v1766
        %v1768 = vpop.f32.mrf.mxu0
        %v1769 = vpop.f32.mrf.mxu0
        %v1770 = vadd.f32 %v1657, %v1769
        %v1771 = vpop.f32.mrf.mxu0
        %1772 = vmatprep.mubr.bf16.mxu0 0
        %1773 = vmatmul.mubr.bf16.gmra.mxu0 %v552
        %v1774 = vpop.f32.mrf.mxu0
        %v1775 = vadd.f32 %v1662, %v1774
        %v1776 = vpop.f32.mrf.mxu0
        %v1777 = vpop.f32.mrf.mxu0
        %v1778 = vadd.f32 %v1665, %v1777
        %v1779 = vpop.f32.mrf.mxu0
        %1780 = vmatprep.mubr.bf16.mxu0 0
        %1781 = vmatmul.mubr.bf16.gmra.mxu0 %v555
        %v1782 = vpop.f32.mrf.mxu0
        %v1783 = vadd.f32 %v1670, %v1782
        %v1784 = vpop.f32.mrf.mxu0
        %v1785 = vpop.f32.mrf.mxu0
        %v1786 = vadd.f32 %v1673, %v1785
        %v1787 = vpop.f32.mrf.mxu0
        %1788 = vmatprep.mubr.bf16.mxu0 0
        %1789 = vmatmul.mubr.bf16.gmra.mxu0 %v558
        %v1790 = vpop.f32.mrf.mxu0
        %v1791 = vadd.f32 %v1678, %v1790
        %v1792 = vpop.f32.mrf.mxu0
        %v1793 = vpop.f32.mrf.mxu0
        %v1794 = vadd.f32 %v1681, %v1793
        %v1795 = vpop.f32.mrf.mxu0
        %1796 = vmatprep.mubr.bf16.mxu0 0
        %1797 = vmatmul.mubr.bf16.gmra.mxu0 %v561
        %v1798 = vpop.f32.mrf.mxu0
        %v1799 = vadd.f32 %v1686, %v1798
        %v1800 = vpop.f32.mrf.mxu0
        %v1801 = vpop.f32.mrf.mxu0
        %v1802 = vadd.f32 %v1689, %v1801
        %v1803 = vpop.f32.mrf.mxu0
        %1804 = vmatprep.mubr.bf16.mxu0 0
        %1805 = vmatmul.mubr.bf16.gmra.mxu0 %v564
        %v1806 = vpop.f32.mrf.mxu0
        %v1807 = vadd.f32 %v1694, %v1806
        %v1808 = vpop.f32.mrf.mxu0
        %v1809 = vpop.f32.mrf.mxu0
        %v1810 = vadd.f32 %v1697, %v1809
        %v1811 = vpop.f32.mrf.mxu0
        %1812 = vmatprep.mubr.bf16.mxu0 0
        %1813 = vmatmul.mubr.bf16.gmra.mxu0 %v567
        %v1814 = vpop.f32.mrf.mxu0
        %v1815 = vadd.f32 %v1702, %v1814
        %v1816 = vpop.f32.mrf.mxu0
        %v1817 = vpop.f32.mrf.mxu0
        %v1818 = vadd.f32 %v1705, %v1817
        %v1819 = vpop.f32.mrf.mxu0
        %1820 = vmatprep.mubr.bf16.mxu0 0
        %1821 = vmatmul.mubr.bf16.gmra.mxu0 %v570
        %v1822 = vpop.f32.mrf.mxu0
        %v1823 = vadd.f32 %v1710, %v1822
        %v1824 = vpop.f32.mrf.mxu0
        %v1825 = vpop.f32.mrf.mxu0
        %v1826 = vadd.f32 %v1713, %v1825
        %v1827 = vpop.f32.mrf.mxu0
        %1828 = vmatprep.mubr.bf16.mxu0 0
        %1829 = vmatmul.mubr.bf16.gmra.mxu0 %v573
        %v1830 = vpop.f32.mrf.mxu0
        %v1831 = vadd.f32 %v1718, %v1830
        %v1832 = vpop.f32.mrf.mxu0
        %v1833 = vpop.f32.mrf.mxu0
        %v1834 = vadd.f32 %v1721, %v1833
        %v1835 = vpop.f32.mrf.mxu0
        %1836 = vmatprep.mubr.bf16.mxu0 0
        %1837 = vmatmul.mubr.bf16.gmra.mxu0 %v576
        %v1838 = vpop.f32.mrf.mxu0
        %v1839 = vadd.f32 %v1726, %v1838
        %v1840 = vpop.f32.mrf.mxu0
        %v1841 = vpop.f32.mrf.mxu0
        %v1842 = vadd.f32 %v1729, %v1841
        %v1843 = vpop.f32.mrf.mxu0
        %1844 = vdwg.mxu0
        %v1845 = vadd.f32 %v1348, %v1767
        %v1846 = vadd.f32 %v1351, %v1770
        %v1847 = vadd.f32 %v1356, %v1775
        %v1848 = vadd.f32 %v1359, %v1778
        %v1849 = vadd.f32 %v1364, %v1783
        %v1850 = vadd.f32 %v1367, %v1786
        %v1851 = vadd.f32 %v1372, %v1791
        %v1852 = vadd.f32 %v1375, %v1794
        %v1853 = vadd.f32 %v1380, %v1799
        %v1854 = vadd.f32 %v1383, %v1802
        %v1855 = vadd.f32 %v1388, %v1807
        %v1856 = vadd.f32 %v1391, %v1810
        %v1857 = vadd.f32 %v1396, %v1815
        %v1858 = vadd.f32 %v1399, %v1818
        %v1859 = vadd.f32 %v1404, %v1823
        %v1860 = vadd.f32 %v1407, %v1826
        %v1861 = vadd.f32 %v1412, %v1831
        %v1862 = vadd.f32 %v1415, %v1834
        %v1863 = vadd.f32 %v1420, %v1839
        %v1864 = vadd.f32 %v1423, %v1842
        %v1865 = vld [vmem:[%s2] sm:$0x1]
        %v1867 = vlaneseq
        %v1868 = vshrl.u32 %v1867, 7
        %v1869 = vsub.s32 0, %v1868
        %v1870 = vrot.slane %v1865, %v1869
        %v1872 = vadd.f32 %v1845, %v1870
        %v1873 = vadd.f32 %v1846, %v1870
        %v1874 = vadd.f32 %v1847, %v1870
        %v1875 = vadd.f32 %v1848, %v1870
        %v1876 = vadd.f32 %v1849, %v1870
        %v1877 = vadd.f32 %v1850, %v1870
        %v1878 = vadd.f32 %v1851, %v1870
        %v1879 = vadd.f32 %v1852, %v1870
        %v1880 = vadd.f32 %v1853, %v1870
        %v1881 = vadd.f32 %v1854, %v1870
        %v1882 = vadd.f32 %v1855, %v1870
        %v1883 = vadd.f32 %v1856, %v1870
        %v1884 = vadd.f32 %v1857, %v1870
        %v1885 = vadd.f32 %v1858, %v1870
        %v1886 = vadd.f32 %v1859, %v1870
        %v1887 = vadd.f32 %v1860, %v1870
        %v1888 = vadd.f32 %v1861, %v1870
        %v1889 = vadd.f32 %v1862, %v1870
        %v1890 = vadd.f32 %v1863, %v1870
        %v1891 = vadd.f32 %v1864, %v1870
        %v1892 = vmax.f32 %v1872, 0.0
        %v1893 = vmax.f32 %v1873, 0.0
        %v1894 = vmax.f32 %v1874, 0.0
        %v1895 = vmax.f32 %v1875, 0.0
        %v1896 = vmax.f32 %v1876, 0.0
        %v1897 = vmax.f32 %v1877, 0.0
        %v1898 = vmax.f32 %v1878, 0.0
        %v1899 = vmax.f32 %v1879, 0.0
        %v1900 = vmax.f32 %v1880, 0.0
        %v1901 = vmax.f32 %v1881, 0.0
        %v1902 = vmax.f32 %v1882, 0.0
        %v1903 = vmax.f32 %v1883, 0.0
        %v1904 = vmax.f32 %v1884, 0.0
        %v1905 = vmax.f32 %v1885, 0.0
        %v1906 = vmax.f32 %v1886, 0.0
        %v1907 = vmax.f32 %v1887, 0.0
        %v1908 = vmax.f32 %v1888, 0.0
        %v1909 = vmax.f32 %v1889, 0.0
        %v1910 = vmax.f32 %v1890, 0.0
        %v1911 = vmax.f32 %v1891, 0.0
        %p1912 = scmp.lt.s32.totalorder %s20, 0
        %s1913 = ssub.s32 0, %s20
        %s1914 = scalar_select %p1912, %s1913, %s20
        %s1915 = sand.u32 %s1914, 1
        %s1916 = ssub.s32 0, %s1915
        %s1917 = scalar_select %p1912, %s1916, %s1915
        %p1918 = scmp.ne.s32.totalorder %s1917, 0
        %p1919 = scmp.lt.s32.totalorder %s1917, 0
        %p1920 = pnand %p1919, %p1918
        %p1921 = pneg %p1920
        %s1922 = sadd.s32 %s1917, 2
        %s1923 = scalar_select %p1921, %s1922, %s1917
        %s1924 = smul.u32 %s1923, 8
        %s1925 = ssub.s32 %s1924, 1
        %v1926 = vlaneseq
        %v1927 = vshrl.u32 %v1926, 7
        %v1928 = vadd.s32 %v1927, 8
        %v1929 = vstv %s1925
        %v1930 = vadd.s32 %v1929, %v1927
        %v1931 = vadd.s32 %v1929, %v1928
        %vm1932 = vcmp.ge.s32.totalorder %v1930, 0
        %vm1933 = vcmp.ge.s32.totalorder %v1931, 0
        %vm1934 = vcmp.lt.s32.totalorder %v1930, 16
        %vm1935 = vcmp.lt.s32.totalorder %v1931, 16
        %vm1936 = vmand %vm1932, %vm1934
        %vm1937 = vmand %vm1933, %vm1935
        %v1938 = vsel %vm1936, 1, 0
        %v1939 = vsel %vm1937, 1, 0
        %v1940 = vcvt.s32.f32 %v1938
        %v1941 = vcvt.s32.f32 %v1939
        %v1942 = vlaneseq
        %v1943 = vshrl.u32 %v1942, 7
        %v1944 = vsub.s32 0, %v1943
        %v1945 = vrot.slane %v1940, %v1944
        %v1946 = vlaneseq
        %v1947 = vshrl.u32 %v1946, 7
        %v1948 = vsub.s32 1, %v1947
        %v1949 = vrot.slane %v1940, %v1948
        %v1950 = vlaneseq
        %v1951 = vshrl.u32 %v1950, 7
        %v1952 = vsub.s32 2, %v1951
        %v1953 = vrot.slane %v1940, %v1952
        %v1954 = vlaneseq
        %v1955 = vshrl.u32 %v1954, 7
        %v1956 = vsub.s32 3, %v1955
        %v1957 = vrot.slane %v1940, %v1956
        %v1958 = vlaneseq
        %v1959 = vshrl.u32 %v1958, 7
        %v1960 = vsub.s32 4, %v1959
        %v1961 = vrot.slane %v1940, %v1960
        %v1962 = vlaneseq
        %v1963 = vshrl.u32 %v1962, 7
        %v1964 = vsub.s32 5, %v1963
        %v1965 = vrot.slane %v1940, %v1964
        %v1966 = vlaneseq
        %v1967 = vshrl.u32 %v1966, 7
        %v1968 = vsub.s32 6, %v1967
        %v1969 = vrot.slane %v1940, %v1968
        %v1970 = vlaneseq
        %v1971 = vshrl.u32 %v1970, 7
        %v1972 = vsub.s32 7, %v1971
        %v1973 = vrot.slane %v1940, %v1972
        %v1974 = vlaneseq
        %v1975 = vshrl.u32 %v1974, 7
        %v1976 = vsub.s32 0, %v1975
        %v1977 = vrot.slane %v1941, %v1976
        %v1978 = vlaneseq
        %v1979 = vshrl.u32 %v1978, 7
        %v1980 = vsub.s32 1, %v1979
        %v1981 = vrot.slane %v1941, %v1980
        %v1982 = vmul.f32 %v1892, %v1945
        %v1983 = vmul.f32 %v1893, %v1945
        %v1984 = vmul.f32 %v1894, %v1949
        %v1985 = vmul.f32 %v1895, %v1949
        %v1986 = vmul.f32 %v1896, %v1953
        %v1987 = vmul.f32 %v1897, %v1953
        %v1988 = vmul.f32 %v1898, %v1957
        %v1989 = vmul.f32 %v1899, %v1957
        %v1990 = vmul.f32 %v1900, %v1961
        %v1991 = vmul.f32 %v1901, %v1961
        %v1992 = vmul.f32 %v1902, %v1965
        %v1993 = vmul.f32 %v1903, %v1965
        %v1994 = vmul.f32 %v1904, %v1969
        %v1995 = vmul.f32 %v1905, %v1969
        %v1996 = vmul.f32 %v1906, %v1973
        %v1997 = vmul.f32 %v1907, %v1973
        %v1998 = vmul.f32 %v1908, %v1977
        %v1999 = vmul.f32 %v1909, %v1977
        %v2000 = vmul.f32 %v1910, %v1981
        %v2001 = vmul.f32 %v1911, %v1981
        %v2002 = vpack.c.bf16 %v1983, %v1982
        %v2003 = vpack.c.bf16 %v1985, %v1984
        %v2004 = vpack.c.bf16 %v1987, %v1986
        %v2005 = vpack.c.bf16 %v1989, %v1988
        %v2006 = vpack.c.bf16 %v1991, %v1990
        %v2007 = vpack.c.bf16 %v1993, %v1992
        %v2008 = vpack.c.bf16 %v1995, %v1994
        %v2009 = vpack.c.bf16 %v1997, %v1996
        %v2010 = vpack.c.bf16 %v1999, %v1998
        %v2011 = vpack.c.bf16 %v2001, %v2000
        %v2013 = vshrl.u32 %v2002, 16
        %v2015 = vrot.slane %v2013, 7
        %v2016 = vshll.u32 %v2002, 16
        %v2018 = vor.u32 %v2015, %v2016
        %v2020 = vshrl.u32 %v2003, 16
        %v2022 = vrot.slane %v2020, 7
        %v2023 = vshll.u32 %v2003, 16
        %v2025 = vor.u32 %v2022, %v2023
        %v2027 = vshrl.u32 %v2004, 16
        %v2029 = vrot.slane %v2027, 7
        %v2030 = vshll.u32 %v2004, 16
        %v2032 = vor.u32 %v2029, %v2030
        %v2034 = vshrl.u32 %v2005, 16
        %v2036 = vrot.slane %v2034, 7
        %v2037 = vshll.u32 %v2005, 16
        %v2039 = vor.u32 %v2036, %v2037
        %v2041 = vshrl.u32 %v2006, 16
        %v2043 = vrot.slane %v2041, 7
        %v2044 = vshll.u32 %v2006, 16
        %v2046 = vor.u32 %v2043, %v2044
        %v2048 = vshrl.u32 %v2007, 16
        %v2050 = vrot.slane %v2048, 7
        %v2051 = vshll.u32 %v2007, 16
        %v2053 = vor.u32 %v2050, %v2051
        %v2055 = vshrl.u32 %v2008, 16
        %v2057 = vrot.slane %v2055, 7
        %v2058 = vshll.u32 %v2008, 16
        %v2060 = vor.u32 %v2057, %v2058
        %v2062 = vshrl.u32 %v2009, 16
        %v2064 = vrot.slane %v2062, 7
        %v2065 = vshll.u32 %v2009, 16
        %v2067 = vor.u32 %v2064, %v2065
        %v2069 = vshrl.u32 %v2010, 16
        %v2071 = vrot.slane %v2069, 7
        %v2072 = vshll.u32 %v2010, 16
        %v2074 = vor.u32 %v2071, %v2072
        %v2076 = vshrl.u32 %v2011, 16
        %v2078 = vrot.slane %v2076, 7
        %v2079 = vshll.u32 %v2011, 16
        %v2081 = vor.u32 %v2078, %v2079
        %vm2102 = vcmask 1040384
        %vm2103 = vsmask.f32 256
        %vm2104 = vmand %vm2102, %vm2103
        %v2105 = vsel %vm2104, 0, %v2018
        %v2106 = vsel %vm2104, 0, %v2025
        %v2107 = vsel %vm2104, 0, %v2032
        %v2108 = vsel %vm2104, 0, %v2039
        %v2109 = vsel %vm2104, 0, %v2046
        %v2110 = vsel %vm2104, 0, %v2053
        %v2111 = vsel %vm2104, 0, %v2060
        %v2112 = vsel %vm2104, 0, %v2067
        %v2113 = vsel %vm2104, 0, %v2074
        %v2114 = vsel %vm2104, 0, %v2081
        %v2115 = vsel %vm2104, %v2015, 0
        %v2116 = vsel %vm2104, %v2022, 0
        %v2117 = vsel %vm2104, %v2029, 0
        %v2118 = vsel %vm2104, %v2036, 0
        %v2119 = vsel %vm2104, %v2043, 0
        %v2120 = vsel %vm2104, %v2050, 0
        %v2121 = vsel %vm2104, %v2057, 0
        %v2122 = vsel %vm2104, %v2064, 0
        %v2123 = vsel %vm2104, %v2071, 0
        %v2124 = vsel %vm2104, %v2078, 0
        %v2126 = vshrl.u32 %v2105, 16
        %v2128 = vshll.u32 %v2105, 16
        %v2130 = vrot.slane %v2128, 1
        %v2131 = vor.u32 %v2126, %v2130
        %v2133 = vshll.u32 %v2115, 16
        %v2135 = vrot.slane %v2133, 1
        %v2136 = vsel %vm383, %v2131, %v2135
        %v2138 = vshrl.u32 %v2106, 16
        %v2140 = vshll.u32 %v2106, 16
        %v2142 = vrot.slane %v2140, 1
        %v2143 = vor.u32 %v2138, %v2142
        %v2145 = vshll.u32 %v2116, 16
        %v2147 = vrot.slane %v2145, 1
        %v2148 = vsel %vm383, %v2143, %v2147
        %v2150 = vshrl.u32 %v2107, 16
        %v2152 = vshll.u32 %v2107, 16
        %v2154 = vrot.slane %v2152, 1
        %v2155 = vor.u32 %v2150, %v2154
        %v2157 = vshll.u32 %v2117, 16
        %v2159 = vrot.slane %v2157, 1
        %v2160 = vsel %vm383, %v2155, %v2159
        %v2162 = vshrl.u32 %v2108, 16
        %v2164 = vshll.u32 %v2108, 16
        %v2166 = vrot.slane %v2164, 1
        %v2167 = vor.u32 %v2162, %v2166
        %v2169 = vshll.u32 %v2118, 16
        %v2171 = vrot.slane %v2169, 1
        %v2172 = vsel %vm383, %v2167, %v2171
        %v2174 = vshrl.u32 %v2109, 16
        %v2176 = vshll.u32 %v2109, 16
        %v2178 = vrot.slane %v2176, 1
        %v2179 = vor.u32 %v2174, %v2178
        %v2181 = vshll.u32 %v2119, 16
        %v2183 = vrot.slane %v2181, 1
        %v2184 = vsel %vm383, %v2179, %v2183
        %v2186 = vshrl.u32 %v2110, 16
        %v2188 = vshll.u32 %v2110, 16
        %v2190 = vrot.slane %v2188, 1
        %v2191 = vor.u32 %v2186, %v2190
        %v2193 = vshll.u32 %v2120, 16
        %v2195 = vrot.slane %v2193, 1
        %v2196 = vsel %vm383, %v2191, %v2195
        %v2198 = vshrl.u32 %v2111, 16
        %v2200 = vshll.u32 %v2111, 16
        %v2202 = vrot.slane %v2200, 1
        %v2203 = vor.u32 %v2198, %v2202
        %v2205 = vshll.u32 %v2121, 16
        %v2207 = vrot.slane %v2205, 1
        %v2208 = vsel %vm383, %v2203, %v2207
        %v2210 = vshrl.u32 %v2112, 16
        %v2212 = vshll.u32 %v2112, 16
        %v2214 = vrot.slane %v2212, 1
        %v2215 = vor.u32 %v2210, %v2214
        %v2217 = vshll.u32 %v2122, 16
        %v2219 = vrot.slane %v2217, 1
        %v2220 = vsel %vm383, %v2215, %v2219
        %v2222 = vshrl.u32 %v2113, 16
        %v2224 = vshll.u32 %v2113, 16
        %v2226 = vrot.slane %v2224, 1
        %v2227 = vor.u32 %v2222, %v2226
        %v2229 = vshll.u32 %v2123, 16
        %v2231 = vrot.slane %v2229, 1
        %v2232 = vsel %vm383, %v2227, %v2231
        %v2234 = vshrl.u32 %v2114, 16
        %v2236 = vshll.u32 %v2114, 16
        %v2238 = vrot.slane %v2236, 1
        %v2239 = vor.u32 %v2234, %v2238
        %v2241 = vshll.u32 %v2124, 16
        %v2243 = vrot.slane %v2241, 1
        %v2244 = vsel %vm383, %v2239, %v2243
        %v2275 = vrot.slane %v2105, 1
        %v2276 = vrot.slane %v2115, 1
        %v2277 = vsel %vm540, %v2275, %v2276
        %v2278 = vrot.slane %v2106, 1
        %v2279 = vrot.slane %v2116, 1
        %v2280 = vsel %vm540, %v2278, %v2279
        %v2281 = vrot.slane %v2107, 1
        %v2282 = vrot.slane %v2117, 1
        %v2283 = vsel %vm540, %v2281, %v2282
        %v2284 = vrot.slane %v2108, 1
        %v2285 = vrot.slane %v2118, 1
        %v2286 = vsel %vm540, %v2284, %v2285
        %v2287 = vrot.slane %v2109, 1
        %v2288 = vrot.slane %v2119, 1
        %v2289 = vsel %vm540, %v2287, %v2288
        %v2290 = vrot.slane %v2110, 1
        %v2291 = vrot.slane %v2120, 1
        %v2292 = vsel %vm540, %v2290, %v2291
        %v2293 = vrot.slane %v2111, 1
        %v2294 = vrot.slane %v2121, 1
        %v2295 = vsel %vm540, %v2293, %v2294
        %v2296 = vrot.slane %v2112, 1
        %v2297 = vrot.slane %v2122, 1
        %v2298 = vsel %vm540, %v2296, %v2297
        %v2299 = vrot.slane %v2113, 1
        %v2300 = vrot.slane %v2123, 1
        %v2301 = vsel %vm540, %v2299, %v2300
        %v2302 = vrot.slane %v2114, 1
        %v2303 = vrot.slane %v2124, 1
        %v2304 = vsel %vm540, %v2302, %v2303
        %v2315 = vld [vmem:[#allocation2] sm:$0xf]
        %v2316 = vld [vmem:[#allocation2 + $0x4] sm:$0xf]
        %v2317 = vld [vmem:[#allocation2 + $0x8] sm:$0xf]
        %v2318 = vld [vmem:[#allocation2 + $0xc] sm:$0xf]
        %v2319 = vld [vmem:[#allocation2 + $0x10] sm:$0xf]
        %v2320 = vld [vmem:[#allocation2 + $0x14] sm:$0xf]
        %v2321 = vld [vmem:[#allocation2 + $0x18] sm:$0xf]
        %v2322 = vld [vmem:[#allocation2 + $0x1c] sm:$0xf]
        %v2323 = vld [vmem:[#allocation2 + $0x20] sm:$0xf]
        %v2324 = vld [vmem:[#allocation2 + $0x24] sm:$0xf]
        %v2325 = vld [vmem:[#allocation2 + $0x28] sm:$0xf]
        %v2326 = vld [vmem:[#allocation2 + $0x2c] sm:$0xf]
        %v2327 = vld [vmem:[#allocation2 + $0x30] sm:$0xf]
        %v2328 = vld [vmem:[#allocation2 + $0x34] sm:$0xf]
        %v2329 = vld [vmem:[#allocation2 + $0x38] sm:$0xf]
        %v2330 = vld [vmem:[#allocation2 + $0x3c] sm:$0xf]
        %v2331 = vld [vmem:[#allocation2 + $0x40] sm:$0xf]
        %v2332 = vld [vmem:[#allocation2 + $0x44] sm:$0xf]
        %v2333 = vld [vmem:[#allocation2 + $0x48] sm:$0xf]
        %v2334 = vld [vmem:[#allocation2 + $0x4c] sm:$0xf]
        %v2335 = vld [vmem:[#allocation2 + $0x50] sm:$0xf]
        %v2336 = vld [vmem:[#allocation2 + $0x54] sm:$0xf]
        %v2337 = vld [vmem:[#allocation2 + $0x58] sm:$0xf]
        %v2338 = vld [vmem:[#allocation2 + $0x5c] sm:$0xf]
        %v2339 = vld [vmem:[#allocation2 + $0x60] sm:$0xf]
        %v2340 = vld [vmem:[#allocation2 + $0x64] sm:$0xf]
        %v2341 = vld [vmem:[#allocation2 + $0x68] sm:$0xf]
        %v2342 = vld [vmem:[#allocation2 + $0x6c] sm:$0xf]
        %v2343 = vld [vmem:[#allocation2 + $0x70] sm:$0xf]
        %v2344 = vld [vmem:[#allocation2 + $0x74] sm:$0xf]
        %v2345 = vld [vmem:[#allocation2 + $0x78] sm:$0xf]
        %v2346 = vld [vmem:[#allocation2 + $0x7c] sm:$0xf]
        %v2347 = vld [vmem:[#allocation2 + $0x80] sm:$0xf]
        %v2348 = vld [vmem:[#allocation2 + $0x84] sm:$0xf]
        %v2349 = vld [vmem:[#allocation2 + $0x88] sm:$0xf]
        %v2350 = vld [vmem:[#allocation2 + $0x8c] sm:$0xf]
        %v2351 = vld [vmem:[#allocation2 + $0x90] sm:$0xf]
        %v2352 = vld [vmem:[#allocation2 + $0x94] sm:$0xf]
        %v2353 = vld [vmem:[#allocation2 + $0x98] sm:$0xf]
        %v2354 = vld [vmem:[#allocation2 + $0x9c] sm:$0xf]
        %v2355 = vld [vmem:[#allocation2 + $0xa0] sm:$0xf]
        %v2356 = vld [vmem:[#allocation2 + $0xa4] sm:$0xf]
        %v2357 = vld [vmem:[#allocation2 + $0xa8] sm:$0xf]
        %v2358 = vld [vmem:[#allocation2 + $0xac] sm:$0xf]
        %v2359 = vld [vmem:[#allocation2 + $0xb0] sm:$0xf]
        %v2360 = vld [vmem:[#allocation2 + $0xb4] sm:$0xf]
        %v2361 = vld [vmem:[#allocation2 + $0xb8] sm:$0xf]
        %v2362 = vld [vmem:[#allocation2 + $0xbc] sm:$0xf]
        %s2363 = scalar_lea.vmem [#allocation2], 192
        %v2364 = vld [vmem:[%s2363] sm:$0xf]
        %v2365 = vld [vmem:[%s2363 + $0x4] sm:$0xf]
        %v2366 = vld [vmem:[%s2363 + $0x8] sm:$0xf]
        %v2367 = vld [vmem:[%s2363 + $0xc] sm:$0xf]
        %v2368 = vld [vmem:[%s2363 + $0x10] sm:$0xf]
        %v2369 = vld [vmem:[%s2363 + $0x14] sm:$0xf]
        %v2370 = vld [vmem:[%s2363 + $0x18] sm:$0xf]
        %v2371 = vld [vmem:[%s2363 + $0x1c] sm:$0xf]
        %v2372 = vld [vmem:[%s2363 + $0x20] sm:$0xf]
        %v2373 = vld [vmem:[%s2363 + $0x24] sm:$0xf]
        %v2374 = vld [vmem:[%s2363 + $0x28] sm:$0xf]
        %v2375 = vld [vmem:[%s2363 + $0x2c] sm:$0xf]
        %v2376 = vld [vmem:[%s2363 + $0x30] sm:$0xf]
        %v2377 = vld [vmem:[%s2363 + $0x34] sm:$0xf]
        %v2378 = vld [vmem:[%s2363 + $0x38] sm:$0xf]
        %v2379 = vld [vmem:[%s2363 + $0x3c] sm:$0xf]
        %v2380 = vld [vmem:[%s2363 + $0x40] sm:$0xf]
        %v2381 = vld [vmem:[%s2363 + $0x44] sm:$0xf]
        %v2382 = vld [vmem:[%s2363 + $0x48] sm:$0xf]
        %v2383 = vld [vmem:[%s2363 + $0x4c] sm:$0xf]
        %v2384 = vld [vmem:[%s2363 + $0x50] sm:$0xf]
        %v2385 = vld [vmem:[%s2363 + $0x54] sm:$0xf]
        %v2386 = vld [vmem:[%s2363 + $0x58] sm:$0xf]
        %v2387 = vld [vmem:[%s2363 + $0x5c] sm:$0xf]
        %v2388 = vld [vmem:[%s2363 + $0x60] sm:$0xf]
        %v2389 = vld [vmem:[%s2363 + $0x64] sm:$0xf]
        %v2390 = vld [vmem:[%s2363 + $0x68] sm:$0xf]
        %v2391 = vld [vmem:[%s2363 + $0x6c] sm:$0xf]
        %v2392 = vld [vmem:[%s2363 + $0x70] sm:$0xf]
        %v2393 = vld [vmem:[%s2363 + $0x74] sm:$0xf]
        %v2394 = vld [vmem:[%s2363 + $0x78] sm:$0xf]
        %v2395 = vld [vmem:[%s2363 + $0x7c] sm:$0xf]
        %v2396 = vld [vmem:[%s2363 + $0x80] sm:$0xf]
        %v2397 = vld [vmem:[%s2363 + $0x84] sm:$0xf]
        %v2398 = vld [vmem:[%s2363 + $0x88] sm:$0xf]
        %v2399 = vld [vmem:[%s2363 + $0x8c] sm:$0xf]
        %v2400 = vld [vmem:[%s2363 + $0x90] sm:$0xf]
        %v2401 = vld [vmem:[%s2363 + $0x94] sm:$0xf]
        %v2402 = vld [vmem:[%s2363 + $0x98] sm:$0xf]
        %v2403 = vld [vmem:[%s2363 + $0x9c] sm:$0xf]
        %v2404 = vld [vmem:[%s2363 + $0xa0] sm:$0xf]
        %v2405 = vld [vmem:[%s2363 + $0xa4] sm:$0xf]
        %v2406 = vld [vmem:[%s2363 + $0xa8] sm:$0xf]
        %v2407 = vld [vmem:[%s2363 + $0xac] sm:$0xf]
        %v2408 = vld [vmem:[%s2363 + $0xb0] sm:$0xf]
        %v2409 = vld [vmem:[%s2363 + $0xb4] sm:$0xf]
        %v2410 = vld [vmem:[%s2363 + $0xb8] sm:$0xf]
        %v2411 = vld [vmem:[%s2363 + $0xbc] sm:$0xf]
        %v2460 = vunpack.c.l.b16 %v2364
        %v2461 = vunpack.c.l.b16 %v2365
        %v2462 = vunpack.c.l.b16 %v2366
        %v2463 = vunpack.c.l.b16 %v2367
        %v2464 = vunpack.c.l.b16 %v2368
        %v2465 = vunpack.c.l.b16 %v2369
        %v2466 = vunpack.c.l.b16 %v2370
        %v2467 = vunpack.c.l.b16 %v2371
        %v2468 = vunpack.c.l.b16 %v2372
        %v2469 = vunpack.c.l.b16 %v2373
        %v2470 = vunpack.c.l.b16 %v2374
        %v2471 = vunpack.c.l.b16 %v2375
        %v2472 = vunpack.c.l.b16 %v2376
        %v2473 = vunpack.c.l.b16 %v2377
        %v2474 = vunpack.c.l.b16 %v2378
        %v2475 = vunpack.c.l.b16 %v2379
        %v2476 = vunpack.c.l.b16 %v2380
        %v2477 = vunpack.c.l.b16 %v2381
        %v2478 = vunpack.c.l.b16 %v2382
        %v2479 = vunpack.c.l.b16 %v2383
        %v2480 = vunpack.c.l.b16 %v2384
        %v2481 = vunpack.c.l.b16 %v2385
        %v2482 = vunpack.c.l.b16 %v2386
        %v2483 = vunpack.c.l.b16 %v2387
        %v2484 = vunpack.c.l.b16 %v2388
        %v2485 = vunpack.c.l.b16 %v2389
        %v2486 = vunpack.c.l.b16 %v2390
        %v2487 = vunpack.c.l.b16 %v2391
        %v2488 = vunpack.c.l.b16 %v2392
        %v2489 = vunpack.c.l.b16 %v2393
        %v2490 = vunpack.c.l.b16 %v2394
        %v2491 = vunpack.c.l.b16 %v2395
        %v2492 = vunpack.c.l.b16 %v2396
        %v2493 = vunpack.c.l.b16 %v2397
        %v2494 = vunpack.c.l.b16 %v2398
        %v2495 = vunpack.c.l.b16 %v2399
        %v2496 = vunpack.c.l.b16 %v2400
        %v2497 = vunpack.c.l.b16 %v2401
        %v2498 = vunpack.c.l.b16 %v2402
        %v2499 = vunpack.c.l.b16 %v2403
        %v2500 = vunpack.c.l.b16 %v2404
        %v2501 = vunpack.c.l.b16 %v2405
        %v2502 = vunpack.c.l.b16 %v2406
        %v2503 = vunpack.c.l.b16 %v2407
        %v2504 = vunpack.c.l.b16 %v2408
        %v2505 = vunpack.c.l.b16 %v2409
        %v2506 = vunpack.c.l.b16 %v2410
        %v2507 = vunpack.c.l.b16 %v2411
        %v2508 = vpack.c.b16 %v2461, %v2460
        %v2509 = vpack.c.b16 %v2463, %v2462
        %v2510 = vpack.c.b16 %v2465, %v2464
        %v2511 = vpack.c.b16 %v2467, %v2466
        %v2512 = vpack.c.b16 %v2469, %v2468
        %v2513 = vpack.c.b16 %v2471, %v2470
        %v2514 = vpack.c.b16 %v2473, %v2472
        %v2515 = vpack.c.b16 %v2475, %v2474
        %v2516 = vpack.c.b16 %v2477, %v2476
        %v2517 = vpack.c.b16 %v2479, %v2478
        %v2518 = vpack.c.b16 %v2481, %v2480
        %v2519 = vpack.c.b16 %v2483, %v2482
        %v2520 = vpack.c.b16 %v2485, %v2484
        %v2521 = vpack.c.b16 %v2487, %v2486
        %v2522 = vpack.c.b16 %v2489, %v2488
        %v2523 = vpack.c.b16 %v2491, %v2490
        %v2524 = vpack.c.b16 %v2493, %v2492
        %v2525 = vpack.c.b16 %v2495, %v2494
        %v2526 = vpack.c.b16 %v2497, %v2496
        %v2527 = vpack.c.b16 %v2499, %v2498
        %v2528 = vpack.c.b16 %v2501, %v2500
        %v2529 = vpack.c.b16 %v2503, %v2502
        %v2530 = vpack.c.b16 %v2505, %v2504
        %v2531 = vpack.c.b16 %v2507, %v2506
        %2556 = vmatprep.subr.bf16.mxu0 0
        %2557 = vmatpush1.bf16.msra.mxu0 %v2515
        %2558 = vmatprep.subr.bf16.mxu0 0
        %2559 = vmatpush1.bf16.msra.mxu0 %v2514
        %2560 = vmatprep.subr.bf16.mxu0 0
        %2561 = vmatpush1.bf16.msra.mxu0 %v2513
        %2562 = vmatprep.subr.bf16.mxu0 0
        %2563 = vmatpush1.bf16.msra.mxu0 %v2512
        %2564 = vmatprep.subr.bf16.mxu0 0
        %2565 = vmatpush1.bf16.msra.mxu0 %v2511
        %2566 = vmatprep.subr.bf16.mxu0 0
        %2567 = vmatpush1.bf16.msra.mxu0 %v2510
        %2568 = vmatprep.subr.bf16.mxu0 0
        %2569 = vmatpush1.bf16.msra.mxu0 %v2509
        %2570 = vmatprep.subr.bf16.mxu0 0
        %2571 = vmatpush1.bf16.msra.mxu0 %v2508
        %2572 = vmatprep.subr.bf16.mxu0 0
        %2573 = vmatpush2.bf16.msra.mxu0 %v2523
        %2574 = vmatprep.subr.bf16.mxu0 0
        %2575 = vmatpush2.bf16.msra.mxu0 %v2522
        %2576 = vmatprep.subr.bf16.mxu0 0
        %2577 = vmatpush2.bf16.msra.mxu0 %v2521
        %2578 = vmatprep.subr.bf16.mxu0 0
        %2579 = vmatpush2.bf16.msra.mxu0 %v2520
        %2580 = vmatprep.subr.bf16.mxu0 0
        %2581 = vmatpush2.bf16.msra.mxu0 %v2519
        %2582 = vmatprep.subr.bf16.mxu0 0
        %2583 = vmatpush2.bf16.msra.mxu0 %v2518
        %2584 = vmatprep.subr.bf16.mxu0 0
        %2585 = vmatpush2.bf16.msra.mxu0 %v2517
        %2586 = vmatprep.subr.bf16.mxu0 0
        %2587 = vmatpush2.bf16.msra.mxu0 %v2516
        %2588 = vmatprep.mubr.bf16.mxu0 %v2148
        %2589 = vmatmul.mubr.bf16.gmra.mxu0 %v2106
        %v2590 = vpop.f32.mrf.mxu0
        %v2591 = vadd.f32 0.0, %v2590
        %v2592 = vpop.f32.mrf.mxu0
        %v2593 = vpop.f32.mrf.mxu0
        %v2594 = vadd.f32 0.0, %v2593
        %v2595 = vpop.f32.mrf.mxu0
        %2596 = vmatprep.mubr.bf16.mxu0 %v2160
        %2597 = vmatmul.mubr.bf16.gmra.mxu0 %v2107
        %v2598 = vpop.f32.mrf.mxu0
        %v2599 = vadd.f32 0.0, %v2598
        %v2600 = vpop.f32.mrf.mxu0
        %v2601 = vpop.f32.mrf.mxu0
        %v2602 = vadd.f32 0.0, %v2601
        %v2603 = vpop.f32.mrf.mxu0
        %2604 = vmatprep.mubr.bf16.mxu0 %v2172
        %2605 = vmatmul.mubr.bf16.gmra.mxu0 %v2108
        %v2606 = vpop.f32.mrf.mxu0
        %v2607 = vadd.f32 0.0, %v2606
        %v2608 = vpop.f32.mrf.mxu0
        %v2609 = vpop.f32.mrf.mxu0
        %v2610 = vadd.f32 0.0, %v2609
        %v2611 = vpop.f32.mrf.mxu0
        %2612 = vmatprep.mubr.bf16.mxu0 %v2184
        %2613 = vmatmul.mubr.bf16.gmra.mxu0 %v2109
        %v2614 = vpop.f32.mrf.mxu0
        %v2615 = vadd.f32 0.0, %v2614
        %v2616 = vpop.f32.mrf.mxu0
        %v2617 = vpop.f32.mrf.mxu0
        %v2618 = vadd.f32 0.0, %v2617
        %v2619 = vpop.f32.mrf.mxu0
        %2620 = vmatprep.mubr.bf16.mxu0 %v2196
        %2621 = vmatmul.mubr.bf16.gmra.mxu0 %v2110
        %v2622 = vpop.f32.mrf.mxu0
        %v2623 = vadd.f32 0.0, %v2622
        %v2624 = vpop.f32.mrf.mxu0
        %v2625 = vpop.f32.mrf.mxu0
        %v2626 = vadd.f32 0.0, %v2625
        %v2627 = vpop.f32.mrf.mxu0
        %2628 = vmatprep.mubr.bf16.mxu0 %v2208
        %2629 = vmatmul.mubr.bf16.gmra.mxu0 %v2111
        %v2630 = vpop.f32.mrf.mxu0
        %v2631 = vadd.f32 0.0, %v2630
        %v2632 = vpop.f32.mrf.mxu0
        %v2633 = vpop.f32.mrf.mxu0
        %v2634 = vadd.f32 0.0, %v2633
        %v2635 = vpop.f32.mrf.mxu0
        %2636 = vmatprep.mubr.bf16.mxu0 %v2220
        %2637 = vmatmul.mubr.bf16.gmra.mxu0 %v2112
        %v2638 = vpop.f32.mrf.mxu0
        %v2639 = vadd.f32 0.0, %v2638
        %v2640 = vpop.f32.mrf.mxu0
        %v2641 = vpop.f32.mrf.mxu0
        %v2642 = vadd.f32 0.0, %v2641
        %v2643 = vpop.f32.mrf.mxu0
        %2644 = vmatprep.mubr.bf16.mxu0 %v2232
        %2645 = vmatmul.mubr.bf16.gmra.mxu0 %v2113
        %v2646 = vpop.f32.mrf.mxu0
        %v2647 = vadd.f32 0.0, %v2646
        %v2648 = vpop.f32.mrf.mxu0
        %v2649 = vpop.f32.mrf.mxu0
        %v2650 = vadd.f32 0.0, %v2649
        %v2651 = vpop.f32.mrf.mxu0
        %2652 = vdwg.mxu0
        %2653 = vmatprep.subr.bf16.mxu0 0
        %2654 = vmatpush1.bf16.msra.mxu0 %v2531
        %2655 = vmatprep.subr.bf16.mxu0 0
        %2656 = vmatpush1.bf16.msra.mxu0 %v2530
        %2657 = vmatprep.subr.bf16.mxu0 0
        %2658 = vmatpush1.bf16.msra.mxu0 %v2529
        %2659 = vmatprep.subr.bf16.mxu0 0
        %2660 = vmatpush1.bf16.msra.mxu0 %v2528
        %2661 = vmatprep.subr.bf16.mxu0 0
        %2662 = vmatpush1.bf16.msra.mxu0 %v2527
        %2663 = vmatprep.subr.bf16.mxu0 0
        %2664 = vmatpush1.bf16.msra.mxu0 %v2526
        %2665 = vmatprep.subr.bf16.mxu0 0
        %2666 = vmatpush1.bf16.msra.mxu0 %v2525
        %2667 = vmatprep.subr.bf16.mxu0 0
        %2668 = vmatpush1.bf16.msra.mxu0 %v2524
        %2669 = vmatprep.subr.bf16.mxu0 0
        %2670 = vmatpush2.bf16.msra.mxu0 0
        %2671 = vmatprep.subr.bf16.mxu0 0
        %2672 = vmatpush2.bf16.msra.mxu0 0
        %2673 = vmatprep.subr.bf16.mxu0 0
        %2674 = vmatpush2.bf16.msra.mxu0 0
        %2675 = vmatprep.subr.bf16.mxu0 0
        %2676 = vmatpush2.bf16.msra.mxu0 0
        %2677 = vmatprep.subr.bf16.mxu0 0
        %2678 = vmatpush2.bf16.msra.mxu0 0
        %2679 = vmatprep.subr.bf16.mxu0 0
        %2680 = vmatpush2.bf16.msra.mxu0 0
        %2681 = vmatprep.subr.bf16.mxu0 0
        %2682 = vmatpush2.bf16.msra.mxu0 0
        %2683 = vmatprep.subr.bf16.mxu0 0
        %2684 = vmatpush2.bf16.msra.mxu0 0
        %2685 = vmatprep.mubr.bf16.mxu0 0
        %2686 = vmatmul.mubr.bf16.gmra.mxu0 %v2280
        %v2687 = vpop.f32.mrf.mxu0
        %v2688 = vadd.f32 %v2591, %v2687
        %v2689 = vpop.f32.mrf.mxu0
        %v2690 = vpop.f32.mrf.mxu0
        %v2691 = vadd.f32 %v2594, %v2690
        %v2692 = vpop.f32.mrf.mxu0
        %2693 = vmatprep.mubr.bf16.mxu0 0
        %2694 = vmatmul.mubr.bf16.gmra.mxu0 %v2283
        %v2695 = vpop.f32.mrf.mxu0
        %v2696 = vadd.f32 %v2599, %v2695
        %v2697 = vpop.f32.mrf.mxu0
        %v2698 = vpop.f32.mrf.mxu0
        %v2699 = vadd.f32 %v2602, %v2698
        %v2700 = vpop.f32.mrf.mxu0
        %2701 = vmatprep.mubr.bf16.mxu0 0
        %2702 = vmatmul.mubr.bf16.gmra.mxu0 %v2286
        %v2703 = vpop.f32.mrf.mxu0
        %v2704 = vadd.f32 %v2607, %v2703
        %v2705 = vpop.f32.mrf.mxu0
        %v2706 = vpop.f32.mrf.mxu0
        %v2707 = vadd.f32 %v2610, %v2706
        %v2708 = vpop.f32.mrf.mxu0
        %2709 = vmatprep.mubr.bf16.mxu0 0
        %2710 = vmatmul.mubr.bf16.gmra.mxu0 %v2289
        %v2711 = vpop.f32.mrf.mxu0
        %v2712 = vadd.f32 %v2615, %v2711
        %v2713 = vpop.f32.mrf.mxu0
        %v2714 = vpop.f32.mrf.mxu0
        %v2715 = vadd.f32 %v2618, %v2714
        %v2716 = vpop.f32.mrf.mxu0
        %2717 = vmatprep.mubr.bf16.mxu0 0
        %2718 = vmatmul.mubr.bf16.gmra.mxu0 %v2292
        %v2719 = vpop.f32.mrf.mxu0
        %v2720 = vadd.f32 %v2623, %v2719
        %v2721 = vpop.f32.mrf.mxu0
        %v2722 = vpop.f32.mrf.mxu0
        %v2723 = vadd.f32 %v2626, %v2722
        %v2724 = vpop.f32.mrf.mxu0
        %2725 = vmatprep.mubr.bf16.mxu0 0
        %2726 = vmatmul.mubr.bf16.gmra.mxu0 %v2295
        %v2727 = vpop.f32.mrf.mxu0
        %v2728 = vadd.f32 %v2631, %v2727
        %v2729 = vpop.f32.mrf.mxu0
        %v2730 = vpop.f32.mrf.mxu0
        %v2731 = vadd.f32 %v2634, %v2730
        %v2732 = vpop.f32.mrf.mxu0
        %2733 = vmatprep.mubr.bf16.mxu0 0
        %2734 = vmatmul.mubr.bf16.gmra.mxu0 %v2298
        %v2735 = vpop.f32.mrf.mxu0
        %v2736 = vadd.f32 %v2639, %v2735
        %v2737 = vpop.f32.mrf.mxu0
        %v2738 = vpop.f32.mrf.mxu0
        %v2739 = vadd.f32 %v2642, %v2738
        %v2740 = vpop.f32.mrf.mxu0
        %2741 = vmatprep.mubr.bf16.mxu0 0
        %2742 = vmatmul.mubr.bf16.gmra.mxu0 %v2301
        %v2743 = vpop.f32.mrf.mxu0
        %v2744 = vadd.f32 %v2647, %v2743
        %v2745 = vpop.f32.mrf.mxu0
        %v2746 = vpop.f32.mrf.mxu0
        %v2747 = vadd.f32 %v2650, %v2746
        %v2748 = vpop.f32.mrf.mxu0
        %2749 = vdwg.mxu0
        %v2798 = vunpack.c.l.b16 %v2315
        %v2799 = vunpack.c.l.b16 %v2316
        %v2800 = vunpack.c.l.b16 %v2317
        %v2801 = vunpack.c.l.b16 %v2318
        %v2802 = vunpack.c.l.b16 %v2319
        %v2803 = vunpack.c.l.b16 %v2320
        %v2804 = vunpack.c.l.b16 %v2321
        %v2805 = vunpack.c.l.b16 %v2322
        %v2806 = vunpack.c.l.b16 %v2323
        %v2807 = vunpack.c.l.b16 %v2324
        %v2808 = vunpack.c.l.b16 %v2325
        %v2809 = vunpack.c.l.b16 %v2326
        %v2810 = vunpack.c.l.b16 %v2327
        %v2811 = vunpack.c.l.b16 %v2328
        %v2812 = vunpack.c.l.b16 %v2329
        %v2813 = vunpack.c.l.b16 %v2330
        %v2814 = vunpack.c.l.b16 %v2331
        %v2815 = vunpack.c.l.b16 %v2332
        %v2816 = vunpack.c.l.b16 %v2333
        %v2817 = vunpack.c.l.b16 %v2334
        %v2818 = vunpack.c.l.b16 %v2335
        %v2819 = vunpack.c.l.b16 %v2336
        %v2820 = vunpack.c.l.b16 %v2337
        %v2821 = vunpack.c.l.b16 %v2338
        %v2822 = vunpack.c.l.b16 %v2339
        %v2823 = vunpack.c.l.b16 %v2340
        %v2824 = vunpack.c.l.b16 %v2341
        %v2825 = vunpack.c.l.b16 %v2342
        %v2826 = vunpack.c.l.b16 %v2343
        %v2827 = vunpack.c.l.b16 %v2344
        %v2828 = vunpack.c.l.b16 %v2345
        %v2829 = vunpack.c.l.b16 %v2346
        %v2830 = vunpack.c.l.b16 %v2347
        %v2831 = vunpack.c.l.b16 %v2348
        %v2832 = vunpack.c.l.b16 %v2349
        %v2833 = vunpack.c.l.b16 %v2350
        %v2834 = vunpack.c.l.b16 %v2351
        %v2835 = vunpack.c.l.b16 %v2352
        %v2836 = vunpack.c.l.b16 %v2353
        %v2837 = vunpack.c.l.b16 %v2354
        %v2838 = vunpack.c.l.b16 %v2355
        %v2839 = vunpack.c.l.b16 %v2356
        %v2840 = vunpack.c.l.b16 %v2357
        %v2841 = vunpack.c.l.b16 %v2358
        %v2842 = vunpack.c.l.b16 %v2359
        %v2843 = vunpack.c.l.b16 %v2360
        %v2844 = vunpack.c.l.b16 %v2361
        %v2845 = vunpack.c.l.b16 %v2362
        %v2846 = vpack.c.b16 %v2799, %v2798
        %v2847 = vpack.c.b16 %v2801, %v2800
        %v2848 = vpack.c.b16 %v2803, %v2802
        %v2849 = vpack.c.b16 %v2805, %v2804
        %v2850 = vpack.c.b16 %v2807, %v2806
        %v2851 = vpack.c.b16 %v2809, %v2808
        %v2852 = vpack.c.b16 %v2811, %v2810
        %v2853 = vpack.c.b16 %v2813, %v2812
        %v2854 = vpack.c.b16 %v2815, %v2814
        %v2855 = vpack.c.b16 %v2817, %v2816
        %v2856 = vpack.c.b16 %v2819, %v2818
        %v2857 = vpack.c.b16 %v2821, %v2820
        %v2858 = vpack.c.b16 %v2823, %v2822
        %v2859 = vpack.c.b16 %v2825, %v2824
        %v2860 = vpack.c.b16 %v2827, %v2826
        %v2861 = vpack.c.b16 %v2829, %v2828
        %v2862 = vpack.c.b16 %v2831, %v2830
        %v2863 = vpack.c.b16 %v2833, %v2832
        %v2864 = vpack.c.b16 %v2835, %v2834
        %v2865 = vpack.c.b16 %v2837, %v2836
        %v2866 = vpack.c.b16 %v2839, %v2838
        %v2867 = vpack.c.b16 %v2841, %v2840
        %v2868 = vpack.c.b16 %v2843, %v2842
        %v2869 = vpack.c.b16 %v2845, %v2844
        %2894 = vmatprep.subr.bf16.mxu0 0
        %2895 = vmatpush1.bf16.msra.mxu0 %v2853
        %2896 = vmatprep.subr.bf16.mxu0 0
        %2897 = vmatpush1.bf16.msra.mxu0 %v2852
        %2898 = vmatprep.subr.bf16.mxu0 0
        %2899 = vmatpush1.bf16.msra.mxu0 %v2851
        %2900 = vmatprep.subr.bf16.mxu0 0
        %2901 = vmatpush1.bf16.msra.mxu0 %v2850
        %2902 = vmatprep.subr.bf16.mxu0 0
        %2903 = vmatpush1.bf16.msra.mxu0 %v2849
        %2904 = vmatprep.subr.bf16.mxu0 0
        %2905 = vmatpush1.bf16.msra.mxu0 %v2848
        %2906 = vmatprep.subr.bf16.mxu0 0
        %2907 = vmatpush1.bf16.msra.mxu0 %v2847
        %2908 = vmatprep.subr.bf16.mxu0 0
        %2909 = vmatpush1.bf16.msra.mxu0 %v2846
        %2910 = vmatprep.subr.bf16.mxu0 0
        %2911 = vmatpush2.bf16.msra.mxu0 %v2861
        %2912 = vmatprep.subr.bf16.mxu0 0
        %2913 = vmatpush2.bf16.msra.mxu0 %v2860
        %2914 = vmatprep.subr.bf16.mxu0 0
        %2915 = vmatpush2.bf16.msra.mxu0 %v2859
        %2916 = vmatprep.subr.bf16.mxu0 0
        %2917 = vmatpush2.bf16.msra.mxu0 %v2858
        %2918 = vmatprep.subr.bf16.mxu0 0
        %2919 = vmatpush2.bf16.msra.mxu0 %v2857
        %2920 = vmatprep.subr.bf16.mxu0 0
        %2921 = vmatpush2.bf16.msra.mxu0 %v2856
        %2922 = vmatprep.subr.bf16.mxu0 0
        %2923 = vmatpush2.bf16.msra.mxu0 %v2855
        %2924 = vmatprep.subr.bf16.mxu0 0
        %2925 = vmatpush2.bf16.msra.mxu0 %v2854
        %2926 = vmatprep.mubr.bf16.mxu0 %v2136
        %2927 = vmatmul.mubr.bf16.gmra.mxu0 %v2105
        %v2928 = vpop.f32.mrf.mxu0
        %v2929 = vadd.f32 %v2688, %v2928
        %v2930 = vpop.f32.mrf.mxu0
        %v2931 = vpop.f32.mrf.mxu0
        %v2932 = vadd.f32 %v2691, %v2931
        %v2933 = vpop.f32.mrf.mxu0
        %2934 = vmatprep.mubr.bf16.mxu0 %v2148
        %2935 = vmatmul.mubr.bf16.gmra.mxu0 %v2106
        %v2936 = vpop.f32.mrf.mxu0
        %v2937 = vadd.f32 %v2696, %v2936
        %v2938 = vpop.f32.mrf.mxu0
        %v2939 = vpop.f32.mrf.mxu0
        %v2940 = vadd.f32 %v2699, %v2939
        %v2941 = vpop.f32.mrf.mxu0
        %2942 = vmatprep.mubr.bf16.mxu0 %v2160
        %2943 = vmatmul.mubr.bf16.gmra.mxu0 %v2107
        %v2944 = vpop.f32.mrf.mxu0
        %v2945 = vadd.f32 %v2704, %v2944
        %v2946 = vpop.f32.mrf.mxu0
        %v2947 = vpop.f32.mrf.mxu0
        %v2948 = vadd.f32 %v2707, %v2947
        %v2949 = vpop.f32.mrf.mxu0
        %2950 = vmatprep.mubr.bf16.mxu0 %v2172
        %2951 = vmatmul.mubr.bf16.gmra.mxu0 %v2108
        %v2952 = vpop.f32.mrf.mxu0
        %v2953 = vadd.f32 %v2712, %v2952
        %v2954 = vpop.f32.mrf.mxu0
        %v2955 = vpop.f32.mrf.mxu0
        %v2956 = vadd.f32 %v2715, %v2955
        %v2957 = vpop.f32.mrf.mxu0
        %2958 = vmatprep.mubr.bf16.mxu0 %v2184
        %2959 = vmatmul.mubr.bf16.gmra.mxu0 %v2109
        %v2960 = vpop.f32.mrf.mxu0
        %v2961 = vadd.f32 %v2720, %v2960
        %v2962 = vpop.f32.mrf.mxu0
        %v2963 = vpop.f32.mrf.mxu0
        %v2964 = vadd.f32 %v2723, %v2963
        %v2965 = vpop.f32.mrf.mxu0
        %2966 = vmatprep.mubr.bf16.mxu0 %v2196
        %2967 = vmatmul.mubr.bf16.gmra.mxu0 %v2110
        %v2968 = vpop.f32.mrf.mxu0
        %v2969 = vadd.f32 %v2728, %v2968
        %v2970 = vpop.f32.mrf.mxu0
        %v2971 = vpop.f32.mrf.mxu0
        %v2972 = vadd.f32 %v2731, %v2971
        %v2973 = vpop.f32.mrf.mxu0
        %2974 = vmatprep.mubr.bf16.mxu0 %v2208
        %2975 = vmatmul.mubr.bf16.gmra.mxu0 %v2111
        %v2976 = vpop.f32.mrf.mxu0
        %v2977 = vadd.f32 %v2736, %v2976
        %v2978 = vpop.f32.mrf.mxu0
        %v2979 = vpop.f32.mrf.mxu0
        %v2980 = vadd.f32 %v2739, %v2979
        %v2981 = vpop.f32.mrf.mxu0
        %2982 = vmatprep.mubr.bf16.mxu0 %v2220
        %2983 = vmatmul.mubr.bf16.gmra.mxu0 %v2112
        %v2984 = vpop.f32.mrf.mxu0
        %v2985 = vadd.f32 %v2744, %v2984
        %v2986 = vpop.f32.mrf.mxu0
        %v2987 = vpop.f32.mrf.mxu0
        %v2988 = vadd.f32 %v2747, %v2987
        %v2989 = vpop.f32.mrf.mxu0
        %2990 = vdwg.mxu0
        %2991 = vmatprep.subr.bf16.mxu0 0
        %2992 = vmatpush1.bf16.msra.mxu0 %v2869
        %2993 = vmatprep.subr.bf16.mxu0 0
        %2994 = vmatpush1.bf16.msra.mxu0 %v2868
        %2995 = vmatprep.subr.bf16.mxu0 0
        %2996 = vmatpush1.bf16.msra.mxu0 %v2867
        %2997 = vmatprep.subr.bf16.mxu0 0
        %2998 = vmatpush1.bf16.msra.mxu0 %v2866
        %2999 = vmatprep.subr.bf16.mxu0 0
        %3000 = vmatpush1.bf16.msra.mxu0 %v2865
        %3001 = vmatprep.subr.bf16.mxu0 0
        %3002 = vmatpush1.bf16.msra.mxu0 %v2864
        %3003 = vmatprep.subr.bf16.mxu0 0
        %3004 = vmatpush1.bf16.msra.mxu0 %v2863
        %3005 = vmatprep.subr.bf16.mxu0 0
        %3006 = vmatpush1.bf16.msra.mxu0 %v2862
        %3007 = vmatprep.subr.bf16.mxu0 0
        %3008 = vmatpush2.bf16.msra.mxu0 0
        %3009 = vmatprep.subr.bf16.mxu0 0
        %3010 = vmatpush2.bf16.msra.mxu0 0
        %3011 = vmatprep.subr.bf16.mxu0 0
        %3012 = vmatpush2.bf16.msra.mxu0 0
        %3013 = vmatprep.subr.bf16.mxu0 0
        %3014 = vmatpush2.bf16.msra.mxu0 0
        %3015 = vmatprep.subr.bf16.mxu0 0
        %3016 = vmatpush2.bf16.msra.mxu0 0
        %3017 = vmatprep.subr.bf16.mxu0 0
        %3018 = vmatpush2.bf16.msra.mxu0 0
        %3019 = vmatprep.subr.bf16.mxu0 0
        %3020 = vmatpush2.bf16.msra.mxu0 0
        %3021 = vmatprep.subr.bf16.mxu0 0
        %3022 = vmatpush2.bf16.msra.mxu0 0
        %3023 = vmatprep.mubr.bf16.mxu0 0
        %3024 = vmatmul.mubr.bf16.gmra.mxu0 %v2277
        %v3025 = vpop.f32.mrf.mxu0
        %v3026 = vadd.f32 %v2929, %v3025
        %v3027 = vpop.f32.mrf.mxu0
        %v3028 = vpop.f32.mrf.mxu0
        %v3029 = vadd.f32 %v2932, %v3028
        %v3030 = vpop.f32.mrf.mxu0
        %3031 = vmatprep.mubr.bf16.mxu0 0
        %3032 = vmatmul.mubr.bf16.gmra.mxu0 %v2280
        %v3033 = vpop.f32.mrf.mxu0
        %v3034 = vadd.f32 %v2937, %v3033
        %v3035 = vpop.f32.mrf.mxu0
        %v3036 = vpop.f32.mrf.mxu0
        %v3037 = vadd.f32 %v2940, %v3036
        %v3038 = vpop.f32.mrf.mxu0
        %3039 = vmatprep.mubr.bf16.mxu0 0
        %3040 = vmatmul.mubr.bf16.gmra.mxu0 %v2283
        %v3041 = vpop.f32.mrf.mxu0
        %v3042 = vadd.f32 %v2945, %v3041
        %v3043 = vpop.f32.mrf.mxu0
        %v3044 = vpop.f32.mrf.mxu0
        %v3045 = vadd.f32 %v2948, %v3044
        %v3046 = vpop.f32.mrf.mxu0
        %3047 = vmatprep.mubr.bf16.mxu0 0
        %3048 = vmatmul.mubr.bf16.gmra.mxu0 %v2286
        %v3049 = vpop.f32.mrf.mxu0
        %v3050 = vadd.f32 %v2953, %v3049
        %v3051 = vpop.f32.mrf.mxu0
        %v3052 = vpop.f32.mrf.mxu0
        %v3053 = vadd.f32 %v2956, %v3052
        %v3054 = vpop.f32.mrf.mxu0
        %3055 = vmatprep.mubr.bf16.mxu0 0
        %3056 = vmatmul.mubr.bf16.gmra.mxu0 %v2289
        %v3057 = vpop.f32.mrf.mxu0
        %v3058 = vadd.f32 %v2961, %v3057
        %v3059 = vpop.f32.mrf.mxu0
        %v3060 = vpop.f32.mrf.mxu0
        %v3061 = vadd.f32 %v2964, %v3060
        %v3062 = vpop.f32.mrf.mxu0
        %3063 = vmatprep.mubr.bf16.mxu0 0
        %3064 = vmatmul.mubr.bf16.gmra.mxu0 %v2292
        %v3065 = vpop.f32.mrf.mxu0
        %v3066 = vadd.f32 %v2969, %v3065
        %v3067 = vpop.f32.mrf.mxu0
        %v3068 = vpop.f32.mrf.mxu0
        %v3069 = vadd.f32 %v2972, %v3068
        %v3070 = vpop.f32.mrf.mxu0
        %3071 = vmatprep.mubr.bf16.mxu0 0
        %3072 = vmatmul.mubr.bf16.gmra.mxu0 %v2295
        %v3073 = vpop.f32.mrf.mxu0
        %v3074 = vadd.f32 %v2977, %v3073
        %v3075 = vpop.f32.mrf.mxu0
        %v3076 = vpop.f32.mrf.mxu0
        %v3077 = vadd.f32 %v2980, %v3076
        %v3078 = vpop.f32.mrf.mxu0
        %3079 = vmatprep.mubr.bf16.mxu0 0
        %3080 = vmatmul.mubr.bf16.gmra.mxu0 %v2298
        %v3081 = vpop.f32.mrf.mxu0
        %v3082 = vadd.f32 %v2985, %v3081
        %v3083 = vpop.f32.mrf.mxu0
        %v3084 = vpop.f32.mrf.mxu0
        %v3085 = vadd.f32 %v2988, %v3084
        %v3086 = vpop.f32.mrf.mxu0
        %3087 = vdwg.mxu0
        %s3088 = scalar_lea.vmem [#allocation2], 384
        %v3089 = vld [vmem:[%s3088] sm:$0xf]
        %v3090 = vld [vmem:[%s3088 + $0x4] sm:$0xf]
        %v3091 = vld [vmem:[%s3088 + $0x8] sm:$0xf]
        %v3092 = vld [vmem:[%s3088 + $0xc] sm:$0xf]
        %v3093 = vld [vmem:[%s3088 + $0x10] sm:$0xf]
        %v3094 = vld [vmem:[%s3088 + $0x14] sm:$0xf]
        %v3095 = vld [vmem:[%s3088 + $0x18] sm:$0xf]
        %v3096 = vld [vmem:[%s3088 + $0x1c] sm:$0xf]
        %v3097 = vld [vmem:[%s3088 + $0x20] sm:$0xf]
        %v3098 = vld [vmem:[%s3088 + $0x24] sm:$0xf]
        %v3099 = vld [vmem:[%s3088 + $0x28] sm:$0xf]
        %v3100 = vld [vmem:[%s3088 + $0x2c] sm:$0xf]
        %v3101 = vld [vmem:[%s3088 + $0x30] sm:$0xf]
        %v3102 = vld [vmem:[%s3088 + $0x34] sm:$0xf]
        %v3103 = vld [vmem:[%s3088 + $0x38] sm:$0xf]
        %v3104 = vld [vmem:[%s3088 + $0x3c] sm:$0xf]
        %v3105 = vld [vmem:[%s3088 + $0x40] sm:$0xf]
        %v3106 = vld [vmem:[%s3088 + $0x44] sm:$0xf]
        %v3107 = vld [vmem:[%s3088 + $0x48] sm:$0xf]
        %v3108 = vld [vmem:[%s3088 + $0x4c] sm:$0xf]
        %v3109 = vld [vmem:[%s3088 + $0x50] sm:$0xf]
        %v3110 = vld [vmem:[%s3088 + $0x54] sm:$0xf]
        %v3111 = vld [vmem:[%s3088 + $0x58] sm:$0xf]
        %v3112 = vld [vmem:[%s3088 + $0x5c] sm:$0xf]
        %v3113 = vld [vmem:[%s3088 + $0x60] sm:$0xf]
        %v3114 = vld [vmem:[%s3088 + $0x64] sm:$0xf]
        %v3115 = vld [vmem:[%s3088 + $0x68] sm:$0xf]
        %v3116 = vld [vmem:[%s3088 + $0x6c] sm:$0xf]
        %v3117 = vld [vmem:[%s3088 + $0x70] sm:$0xf]
        %v3118 = vld [vmem:[%s3088 + $0x74] sm:$0xf]
        %v3119 = vld [vmem:[%s3088 + $0x78] sm:$0xf]
        %v3120 = vld [vmem:[%s3088 + $0x7c] sm:$0xf]
        %v3121 = vld [vmem:[%s3088 + $0x80] sm:$0xf]
        %v3122 = vld [vmem:[%s3088 + $0x84] sm:$0xf]
        %v3123 = vld [vmem:[%s3088 + $0x88] sm:$0xf]
        %v3124 = vld [vmem:[%s3088 + $0x8c] sm:$0xf]
        %v3125 = vld [vmem:[%s3088 + $0x90] sm:$0xf]
        %v3126 = vld [vmem:[%s3088 + $0x94] sm:$0xf]
        %v3127 = vld [vmem:[%s3088 + $0x98] sm:$0xf]
        %v3128 = vld [vmem:[%s3088 + $0x9c] sm:$0xf]
        %v3129 = vld [vmem:[%s3088 + $0xa0] sm:$0xf]
        %v3130 = vld [vmem:[%s3088 + $0xa4] sm:$0xf]
        %v3131 = vld [vmem:[%s3088 + $0xa8] sm:$0xf]
        %v3132 = vld [vmem:[%s3088 + $0xac] sm:$0xf]
        %v3133 = vld [vmem:[%s3088 + $0xb0] sm:$0xf]
        %v3134 = vld [vmem:[%s3088 + $0xb4] sm:$0xf]
        %v3135 = vld [vmem:[%s3088 + $0xb8] sm:$0xf]
        %v3136 = vld [vmem:[%s3088 + $0xbc] sm:$0xf]
        %v3185 = vunpack.c.l.b16 %v3089
        %v3186 = vunpack.c.l.b16 %v3090
        %v3187 = vunpack.c.l.b16 %v3091
        %v3188 = vunpack.c.l.b16 %v3092
        %v3189 = vunpack.c.l.b16 %v3093
        %v3190 = vunpack.c.l.b16 %v3094
        %v3191 = vunpack.c.l.b16 %v3095
        %v3192 = vunpack.c.l.b16 %v3096
        %v3193 = vunpack.c.l.b16 %v3097
        %v3194 = vunpack.c.l.b16 %v3098
        %v3195 = vunpack.c.l.b16 %v3099
        %v3196 = vunpack.c.l.b16 %v3100
        %v3197 = vunpack.c.l.b16 %v3101
        %v3198 = vunpack.c.l.b16 %v3102
        %v3199 = vunpack.c.l.b16 %v3103
        %v3200 = vunpack.c.l.b16 %v3104
        %v3201 = vunpack.c.l.b16 %v3105
        %v3202 = vunpack.c.l.b16 %v3106
        %v3203 = vunpack.c.l.b16 %v3107
        %v3204 = vunpack.c.l.b16 %v3108
        %v3205 = vunpack.c.l.b16 %v3109
        %v3206 = vunpack.c.l.b16 %v3110
        %v3207 = vunpack.c.l.b16 %v3111
        %v3208 = vunpack.c.l.b16 %v3112
        %v3209 = vunpack.c.l.b16 %v3113
        %v3210 = vunpack.c.l.b16 %v3114
        %v3211 = vunpack.c.l.b16 %v3115
        %v3212 = vunpack.c.l.b16 %v3116
        %v3213 = vunpack.c.l.b16 %v3117
        %v3214 = vunpack.c.l.b16 %v3118
        %v3215 = vunpack.c.l.b16 %v3119
        %v3216 = vunpack.c.l.b16 %v3120
        %v3217 = vunpack.c.l.b16 %v3121
        %v3218 = vunpack.c.l.b16 %v3122
        %v3219 = vunpack.c.l.b16 %v3123
        %v3220 = vunpack.c.l.b16 %v3124
        %v3221 = vunpack.c.l.b16 %v3125
        %v3222 = vunpack.c.l.b16 %v3126
        %v3223 = vunpack.c.l.b16 %v3127
        %v3224 = vunpack.c.l.b16 %v3128
        %v3225 = vunpack.c.l.b16 %v3129
        %v3226 = vunpack.c.l.b16 %v3130
        %v3227 = vunpack.c.l.b16 %v3131
        %v3228 = vunpack.c.l.b16 %v3132
        %v3229 = vunpack.c.l.b16 %v3133
        %v3230 = vunpack.c.l.b16 %v3134
        %v3231 = vunpack.c.l.b16 %v3135
        %v3232 = vunpack.c.l.b16 %v3136
        %v3233 = vpack.c.b16 %v3186, %v3185
        %v3234 = vpack.c.b16 %v3188, %v3187
        %v3235 = vpack.c.b16 %v3190, %v3189
        %v3236 = vpack.c.b16 %v3192, %v3191
        %v3237 = vpack.c.b16 %v3194, %v3193
        %v3238 = vpack.c.b16 %v3196, %v3195
        %v3239 = vpack.c.b16 %v3198, %v3197
        %v3240 = vpack.c.b16 %v3200, %v3199
        %v3241 = vpack.c.b16 %v3202, %v3201
        %v3242 = vpack.c.b16 %v3204, %v3203
        %v3243 = vpack.c.b16 %v3206, %v3205
        %v3244 = vpack.c.b16 %v3208, %v3207
        %v3245 = vpack.c.b16 %v3210, %v3209
        %v3246 = vpack.c.b16 %v3212, %v3211
        %v3247 = vpack.c.b16 %v3214, %v3213
        %v3248 = vpack.c.b16 %v3216, %v3215
        %v3249 = vpack.c.b16 %v3218, %v3217
        %v3250 = vpack.c.b16 %v3220, %v3219
        %v3251 = vpack.c.b16 %v3222, %v3221
        %v3252 = vpack.c.b16 %v3224, %v3223
        %v3253 = vpack.c.b16 %v3226, %v3225
        %v3254 = vpack.c.b16 %v3228, %v3227
        %v3255 = vpack.c.b16 %v3230, %v3229
        %v3256 = vpack.c.b16 %v3232, %v3231
        %3281 = vmatprep.subr.bf16.mxu0 0
        %3282 = vmatpush1.bf16.msra.mxu0 %v3240
        %3283 = vmatprep.subr.bf16.mxu0 0
        %3284 = vmatpush1.bf16.msra.mxu0 %v3239
        %3285 = vmatprep.subr.bf16.mxu0 0
        %3286 = vmatpush1.bf16.msra.mxu0 %v3238
        %3287 = vmatprep.subr.bf16.mxu0 0
        %3288 = vmatpush1.bf16.msra.mxu0 %v3237
        %3289 = vmatprep.subr.bf16.mxu0 0
        %3290 = vmatpush1.bf16.msra.mxu0 %v3236
        %3291 = vmatprep.subr.bf16.mxu0 0
        %3292 = vmatpush1.bf16.msra.mxu0 %v3235
        %3293 = vmatprep.subr.bf16.mxu0 0
        %3294 = vmatpush1.bf16.msra.mxu0 %v3234
        %3295 = vmatprep.subr.bf16.mxu0 0
        %3296 = vmatpush1.bf16.msra.mxu0 %v3233
        %3297 = vmatprep.subr.bf16.mxu0 0
        %3298 = vmatpush2.bf16.msra.mxu0 %v3248
        %3299 = vmatprep.subr.bf16.mxu0 0
        %3300 = vmatpush2.bf16.msra.mxu0 %v3247
        %3301 = vmatprep.subr.bf16.mxu0 0
        %3302 = vmatpush2.bf16.msra.mxu0 %v3246
        %3303 = vmatprep.subr.bf16.mxu0 0
        %3304 = vmatpush2.bf16.msra.mxu0 %v3245
        %3305 = vmatprep.subr.bf16.mxu0 0
        %3306 = vmatpush2.bf16.msra.mxu0 %v3244
        %3307 = vmatprep.subr.bf16.mxu0 0
        %3308 = vmatpush2.bf16.msra.mxu0 %v3243
        %3309 = vmatprep.subr.bf16.mxu0 0
        %3310 = vmatpush2.bf16.msra.mxu0 %v3242
        %3311 = vmatprep.subr.bf16.mxu0 0
        %3312 = vmatpush2.bf16.msra.mxu0 %v3241
        %3313 = vmatprep.mubr.bf16.mxu0 %v2160
        %3314 = vmatmul.mubr.bf16.gmra.mxu0 %v2107
        %v3315 = vpop.f32.mrf.mxu0
        %v3316 = vadd.f32 0.0, %v3315
        %v3317 = vpop.f32.mrf.mxu0
        %v3318 = vpop.f32.mrf.mxu0
        %v3319 = vadd.f32 0.0, %v3318
        %v3320 = vpop.f32.mrf.mxu0
        %3321 = vmatprep.mubr.bf16.mxu0 %v2172
        %3322 = vmatmul.mubr.bf16.gmra.mxu0 %v2108
        %v3323 = vpop.f32.mrf.mxu0
        %v3324 = vadd.f32 0.0, %v3323
        %v3325 = vpop.f32.mrf.mxu0
        %v3326 = vpop.f32.mrf.mxu0
        %v3327 = vadd.f32 0.0, %v3326
        %v3328 = vpop.f32.mrf.mxu0
        %3329 = vmatprep.mubr.bf16.mxu0 %v2184
        %3330 = vmatmul.mubr.bf16.gmra.mxu0 %v2109
        %v3331 = vpop.f32.mrf.mxu0
        %v3332 = vadd.f32 0.0, %v3331
        %v3333 = vpop.f32.mrf.mxu0
        %v3334 = vpop.f32.mrf.mxu0
        %v3335 = vadd.f32 0.0, %v3334
        %v3336 = vpop.f32.mrf.mxu0
        %3337 = vmatprep.mubr.bf16.mxu0 %v2196
        %3338 = vmatmul.mubr.bf16.gmra.mxu0 %v2110
        %v3339 = vpop.f32.mrf.mxu0
        %v3340 = vadd.f32 0.0, %v3339
        %v3341 = vpop.f32.mrf.mxu0
        %v3342 = vpop.f32.mrf.mxu0
        %v3343 = vadd.f32 0.0, %v3342
        %v3344 = vpop.f32.mrf.mxu0
        %3345 = vmatprep.mubr.bf16.mxu0 %v2208
        %3346 = vmatmul.mubr.bf16.gmra.mxu0 %v2111
        %v3347 = vpop.f32.mrf.mxu0
        %v3348 = vadd.f32 0.0, %v3347
        %v3349 = vpop.f32.mrf.mxu0
        %v3350 = vpop.f32.mrf.mxu0
        %v3351 = vadd.f32 0.0, %v3350
        %v3352 = vpop.f32.mrf.mxu0
        %3353 = vmatprep.mubr.bf16.mxu0 %v2220
        %3354 = vmatmul.mubr.bf16.gmra.mxu0 %v2112
        %v3355 = vpop.f32.mrf.mxu0
        %v3356 = vadd.f32 0.0, %v3355
        %v3357 = vpop.f32.mrf.mxu0
        %v3358 = vpop.f32.mrf.mxu0
        %v3359 = vadd.f32 0.0, %v3358
        %v3360 = vpop.f32.mrf.mxu0
        %3361 = vmatprep.mubr.bf16.mxu0 %v2232
        %3362 = vmatmul.mubr.bf16.gmra.mxu0 %v2113
        %v3363 = vpop.f32.mrf.mxu0
        %v3364 = vadd.f32 0.0, %v3363
        %v3365 = vpop.f32.mrf.mxu0
        %v3366 = vpop.f32.mrf.mxu0
        %v3367 = vadd.f32 0.0, %v3366
        %v3368 = vpop.f32.mrf.mxu0
        %3369 = vmatprep.mubr.bf16.mxu0 %v2244
        %3370 = vmatmul.mubr.bf16.gmra.mxu0 %v2114
        %v3371 = vpop.f32.mrf.mxu0
        %v3372 = vadd.f32 0.0, %v3371
        %v3373 = vpop.f32.mrf.mxu0
        %v3374 = vpop.f32.mrf.mxu0
        %v3375 = vadd.f32 0.0, %v3374
        %v3376 = vpop.f32.mrf.mxu0
        %3377 = vdwg.mxu0
        %3378 = vmatprep.subr.bf16.mxu0 0
        %3379 = vmatpush1.bf16.msra.mxu0 %v3256
        %3380 = vmatprep.subr.bf16.mxu0 0
        %3381 = vmatpush1.bf16.msra.mxu0 %v3255
        %3382 = vmatprep.subr.bf16.mxu0 0
        %3383 = vmatpush1.bf16.msra.mxu0 %v3254
        %3384 = vmatprep.subr.bf16.mxu0 0
        %3385 = vmatpush1.bf16.msra.mxu0 %v3253
        %3386 = vmatprep.subr.bf16.mxu0 0
        %3387 = vmatpush1.bf16.msra.mxu0 %v3252
        %3388 = vmatprep.subr.bf16.mxu0 0
        %3389 = vmatpush1.bf16.msra.mxu0 %v3251
        %3390 = vmatprep.subr.bf16.mxu0 0
        %3391 = vmatpush1.bf16.msra.mxu0 %v3250
        %3392 = vmatprep.subr.bf16.mxu0 0
        %3393 = vmatpush1.bf16.msra.mxu0 %v3249
        %3394 = vmatprep.subr.bf16.mxu0 0
        %3395 = vmatpush2.bf16.msra.mxu0 0
        %3396 = vmatprep.subr.bf16.mxu0 0
        %3397 = vmatpush2.bf16.msra.mxu0 0
        %3398 = vmatprep.subr.bf16.mxu0 0
        %3399 = vmatpush2.bf16.msra.mxu0 0
        %3400 = vmatprep.subr.bf16.mxu0 0
        %3401 = vmatpush2.bf16.msra.mxu0 0
        %3402 = vmatprep.subr.bf16.mxu0 0
        %3403 = vmatpush2.bf16.msra.mxu0 0
        %3404 = vmatprep.subr.bf16.mxu0 0
        %3405 = vmatpush2.bf16.msra.mxu0 0
        %3406 = vmatprep.subr.bf16.mxu0 0
        %3407 = vmatpush2.bf16.msra.mxu0 0
        %3408 = vmatprep.subr.bf16.mxu0 0
        %3409 = vmatpush2.bf16.msra.mxu0 0
        %3410 = vmatprep.mubr.bf16.mxu0 0
        %3411 = vmatmul.mubr.bf16.gmra.mxu0 %v2283
        %v3412 = vpop.f32.mrf.mxu0
        %v3413 = vadd.f32 %v3316, %v3412
        %v3414 = vpop.f32.mrf.mxu0
        %v3415 = vpop.f32.mrf.mxu0
        %v3416 = vadd.f32 %v3319, %v3415
        %v3417 = vpop.f32.mrf.mxu0
        %3418 = vmatprep.mubr.bf16.mxu0 0
        %3419 = vmatmul.mubr.bf16.gmra.mxu0 %v2286
        %v3420 = vpop.f32.mrf.mxu0
        %v3421 = vadd.f32 %v3324, %v3420
        %v3422 = vpop.f32.mrf.mxu0
        %v3423 = vpop.f32.mrf.mxu0
        %v3424 = vadd.f32 %v3327, %v3423
        %v3425 = vpop.f32.mrf.mxu0
        %3426 = vmatprep.mubr.bf16.mxu0 0
        %3427 = vmatmul.mubr.bf16.gmra.mxu0 %v2289
        %v3428 = vpop.f32.mrf.mxu0
        %v3429 = vadd.f32 %v3332, %v3428
        %v3430 = vpop.f32.mrf.mxu0
        %v3431 = vpop.f32.mrf.mxu0
        %v3432 = vadd.f32 %v3335, %v3431
        %v3433 = vpop.f32.mrf.mxu0
        %3434 = vmatprep.mubr.bf16.mxu0 0
        %3435 = vmatmul.mubr.bf16.gmra.mxu0 %v2292
        %v3436 = vpop.f32.mrf.mxu0
        %v3437 = vadd.f32 %v3340, %v3436
        %v3438 = vpop.f32.mrf.mxu0
        %v3439 = vpop.f32.mrf.mxu0
        %v3440 = vadd.f32 %v3343, %v3439
        %v3441 = vpop.f32.mrf.mxu0
        %3442 = vmatprep.mubr.bf16.mxu0 0
        %3443 = vmatmul.mubr.bf16.gmra.mxu0 %v2295
        %v3444 = vpop.f32.mrf.mxu0
        %v3445 = vadd.f32 %v3348, %v3444
        %v3446 = vpop.f32.mrf.mxu0
        %v3447 = vpop.f32.mrf.mxu0
        %v3448 = vadd.f32 %v3351, %v3447
        %v3449 = vpop.f32.mrf.mxu0
        %3450 = vmatprep.mubr.bf16.mxu0 0
        %3451 = vmatmul.mubr.bf16.gmra.mxu0 %v2298
        %v3452 = vpop.f32.mrf.mxu0
        %v3453 = vadd.f32 %v3356, %v3452
        %v3454 = vpop.f32.mrf.mxu0
        %v3455 = vpop.f32.mrf.mxu0
        %v3456 = vadd.f32 %v3359, %v3455
        %v3457 = vpop.f32.mrf.mxu0
        %3458 = vmatprep.mubr.bf16.mxu0 0
        %3459 = vmatmul.mubr.bf16.gmra.mxu0 %v2301
        %v3460 = vpop.f32.mrf.mxu0
        %v3461 = vadd.f32 %v3364, %v3460
        %v3462 = vpop.f32.mrf.mxu0
        %v3463 = vpop.f32.mrf.mxu0
        %v3464 = vadd.f32 %v3367, %v3463
        %v3465 = vpop.f32.mrf.mxu0
        %3466 = vmatprep.mubr.bf16.mxu0 0
        %3467 = vmatmul.mubr.bf16.gmra.mxu0 %v2304
        %v3468 = vpop.f32.mrf.mxu0
        %v3469 = vadd.f32 %v3372, %v3468
        %v3470 = vpop.f32.mrf.mxu0
        %v3471 = vpop.f32.mrf.mxu0
        %v3472 = vadd.f32 %v3375, %v3471
        %v3473 = vpop.f32.mrf.mxu0
        %3474 = vdwg.mxu0
        %v3475 = vadd.f32 %v3026, %v3413
        %v3476 = vadd.f32 %v3029, %v3416
        %v3477 = vadd.f32 %v3034, %v3421
        %v3478 = vadd.f32 %v3037, %v3424
        %v3479 = vadd.f32 %v3042, %v3429
        %v3480 = vadd.f32 %v3045, %v3432
        %v3481 = vadd.f32 %v3050, %v3437
        %v3482 = vadd.f32 %v3053, %v3440
        %v3483 = vadd.f32 %v3058, %v3445
        %v3484 = vadd.f32 %v3061, %v3448
        %v3485 = vadd.f32 %v3066, %v3453
        %v3486 = vadd.f32 %v3069, %v3456
        %v3487 = vadd.f32 %v3074, %v3461
        %v3488 = vadd.f32 %v3077, %v3464
        %v3489 = vadd.f32 %v3082, %v3469
        %v3490 = vadd.f32 %v3085, %v3472
        %v3491 = vld [vmem:[%s4] sm:$0x1]
        %v3493 = vlaneseq
        %v3494 = vshrl.u32 %v3493, 7
        %v3495 = vsub.s32 0, %v3494
        %v3496 = vrot.slane %v3491, %v3495
        %v3498 = vadd.f32 %v3475, %v3496
        %v3499 = vadd.f32 %v3476, %v3496
        %v3500 = vadd.f32 %v3477, %v3496
        %v3501 = vadd.f32 %v3478, %v3496
        %v3502 = vadd.f32 %v3479, %v3496
        %v3503 = vadd.f32 %v3480, %v3496
        %v3504 = vadd.f32 %v3481, %v3496
        %v3505 = vadd.f32 %v3482, %v3496
        %v3506 = vadd.f32 %v3483, %v3496
        %v3507 = vadd.f32 %v3484, %v3496
        %v3508 = vadd.f32 %v3485, %v3496
        %v3509 = vadd.f32 %v3486, %v3496
        %v3510 = vadd.f32 %v3487, %v3496
        %v3511 = vadd.f32 %v3488, %v3496
        %v3512 = vadd.f32 %v3489, %v3496
        %v3513 = vadd.f32 %v3490, %v3496
        %vm3514 = vsmask.f32 3328
        %vm3515 = vsmask.f32 7440
        %vm3516 = vmor %vm3514, %vm3515
        %v3518 = vshrl.u32 %v245, 16
        %v3520 = vrot.slane %v3518, 4
        %v3521 = vshll.u32 %v245, 16
        %v3523 = vrot.slane %v3521, 5
        %v3524 = vor.u32 %v3520, %v3523
        %v3525 = vrot.slane %v3524, 4
        %v3527 = vshll.u32 %v246, 16
        %v3529 = vrot.slane %v3527, 5
        %v3530 = vsel %vm3516, %v3525, %v3529
        %v3531 = vshrl.u32 %v246, 16
        %v3533 = vrot.slane %v3531, 4
        %v3534 = vor.u32 %v3533, %v3529
        %v3535 = vrot.slane %v3534, 4
        %v3537 = vshll.u32 %v247, 16
        %v3539 = vrot.slane %v3537, 5
        %v3540 = vsel %vm3516, %v3535, %v3539
        %v3542 = vshrl.u32 %v248, 16
        %v3544 = vrot.slane %v3542, 4
        %v3545 = vshll.u32 %v248, 16
        %v3547 = vrot.slane %v3545, 5
        %v3548 = vor.u32 %v3544, %v3547
        %v3549 = vrot.slane %v3548, 4
        %v3551 = vshll.u32 %v249, 16
        %v3553 = vrot.slane %v3551, 5
        %v3554 = vsel %vm3516, %v3549, %v3553
        %v3555 = vshrl.u32 %v249, 16
        %v3557 = vrot.slane %v3555, 4
        %v3558 = vor.u32 %v3557, %v3553
        %v3559 = vrot.slane %v3558, 4
        %v3561 = vshll.u32 %v250, 16
        %v3563 = vrot.slane %v3561, 5
        %v3564 = vsel %vm3516, %v3559, %v3563
        %v3566 = vshrl.u32 %v251, 16
        %v3568 = vrot.slane %v3566, 4
        %v3569 = vshll.u32 %v251, 16
        %v3571 = vrot.slane %v3569, 5
        %v3572 = vor.u32 %v3568, %v3571
        %v3573 = vrot.slane %v3572, 4
        %v3575 = vshll.u32 %v252, 16
        %v3577 = vrot.slane %v3575, 5
        %v3578 = vsel %vm3516, %v3573, %v3577
        %v3579 = vshrl.u32 %v252, 16
        %v3581 = vrot.slane %v3579, 4
        %v3582 = vor.u32 %v3581, %v3577
        %v3583 = vrot.slane %v3582, 4
        %v3585 = vshll.u32 %v253, 16
        %v3587 = vrot.slane %v3585, 5
        %v3588 = vsel %vm3516, %v3583, %v3587
        %v3590 = vshrl.u32 %v254, 16
        %v3592 = vrot.slane %v3590, 4
        %v3593 = vshll.u32 %v254, 16
        %v3595 = vrot.slane %v3593, 5
        %v3596 = vor.u32 %v3592, %v3595
        %v3597 = vrot.slane %v3596, 4
        %v3599 = vshll.u32 %v255, 16
        %v3601 = vrot.slane %v3599, 5
        %v3602 = vsel %vm3516, %v3597, %v3601
        %v3603 = vshrl.u32 %v255, 16
        %v3605 = vrot.slane %v3603, 4
        %v3606 = vor.u32 %v3605, %v3601
        %v3607 = vrot.slane %v3606, 4
        %v3609 = vshll.u32 %v256, 16
        %v3611 = vrot.slane %v3609, 5
        %v3612 = vsel %vm3516, %v3607, %v3611
        %v3614 = vshrl.u32 %v257, 16
        %v3616 = vrot.slane %v3614, 4
        %v3617 = vshll.u32 %v257, 16
        %v3619 = vrot.slane %v3617, 5
        %v3620 = vor.u32 %v3616, %v3619
        %v3621 = vrot.slane %v3620, 4
        %v3623 = vshll.u32 %v258, 16
        %v3625 = vrot.slane %v3623, 5
        %v3626 = vsel %vm3516, %v3621, %v3625
        %v3627 = vshrl.u32 %v258, 16
        %v3629 = vrot.slane %v3627, 4
        %v3630 = vor.u32 %v3629, %v3625
        %v3631 = vrot.slane %v3630, 4
        %v3633 = vshll.u32 %v259, 16
        %v3635 = vrot.slane %v3633, 5
        %v3636 = vsel %vm3516, %v3631, %v3635
        %v3638 = vshrl.u32 %v260, 16
        %v3640 = vrot.slane %v3638, 4
        %v3641 = vshll.u32 %v260, 16
        %v3643 = vrot.slane %v3641, 5
        %v3644 = vor.u32 %v3640, %v3643
        %v3645 = vrot.slane %v3644, 4
        %v3647 = vshll.u32 %v261, 16
        %v3649 = vrot.slane %v3647, 5
        %v3650 = vsel %vm3516, %v3645, %v3649
        %v3651 = vshrl.u32 %v261, 16
        %v3653 = vrot.slane %v3651, 4
        %v3654 = vor.u32 %v3653, %v3649
        %v3655 = vrot.slane %v3654, 4
        %v3657 = vshll.u32 %v262, 16
        %v3659 = vrot.slane %v3657, 5
        %v3660 = vsel %vm3516, %v3655, %v3659
        %v3662 = vshrl.u32 %v263, 16
        %v3664 = vrot.slane %v3662, 4
        %v3665 = vshll.u32 %v263, 16
        %v3667 = vrot.slane %v3665, 5
        %v3668 = vor.u32 %v3664, %v3667
        %v3669 = vrot.slane %v3668, 4
        %v3671 = vshll.u32 %v264, 16
        %v3673 = vrot.slane %v3671, 5
        %v3674 = vsel %vm3516, %v3669, %v3673
        %v3675 = vshrl.u32 %v264, 16
        %v3677 = vrot.slane %v3675, 4
        %v3678 = vor.u32 %v3677, %v3673
        %v3679 = vrot.slane %v3678, 4
        %v3681 = vshll.u32 %v265, 16
        %v3683 = vrot.slane %v3681, 5
        %v3684 = vsel %vm3516, %v3679, %v3683
        %v3686 = vshrl.u32 %v266, 16
        %v3688 = vrot.slane %v3686, 4
        %v3689 = vshll.u32 %v266, 16
        %v3691 = vrot.slane %v3689, 5
        %v3692 = vor.u32 %v3688, %v3691
        %v3693 = vrot.slane %v3692, 4
        %v3695 = vshll.u32 %v267, 16
        %v3697 = vrot.slane %v3695, 5
        %v3698 = vsel %vm3516, %v3693, %v3697
        %v3699 = vshrl.u32 %v267, 16
        %v3701 = vrot.slane %v3699, 4
        %v3702 = vor.u32 %v3701, %v3697
        %v3703 = vrot.slane %v3702, 4
        %v3705 = vshll.u32 %v268, 16
        %v3707 = vrot.slane %v3705, 5
        %v3708 = vsel %vm3516, %v3703, %v3707
        %v3725 = vunpack.c.l.bf16 %v3530
        %v3726 = vunpack.c.l.bf16 %v3540
        %v3727 = vunpack.c.l.bf16 %v3554
        %v3728 = vunpack.c.l.bf16 %v3564
        %v3729 = vunpack.c.l.bf16 %v3578
        %v3730 = vunpack.c.l.bf16 %v3588
        %v3731 = vunpack.c.l.bf16 %v3602
        %v3732 = vunpack.c.l.bf16 %v3612
        %v3733 = vunpack.c.l.bf16 %v3626
        %v3734 = vunpack.c.l.bf16 %v3636
        %v3735 = vunpack.c.l.bf16 %v3650
        %v3736 = vunpack.c.l.bf16 %v3660
        %v3737 = vunpack.c.l.bf16 %v3674
        %v3738 = vunpack.c.l.bf16 %v3684
        %v3739 = vunpack.c.l.bf16 %v3698
        %v3740 = vunpack.c.l.bf16 %v3708
        %v3741 = vadd.f32 %v3498, %v3725
        %v3742 = vadd.f32 %v3499, %v3726
        %v3743 = vadd.f32 %v3500, %v3727
        %v3744 = vadd.f32 %v3501, %v3728
        %v3745 = vadd.f32 %v3502, %v3729
        %v3746 = vadd.f32 %v3503, %v3730
        %v3747 = vadd.f32 %v3504, %v3731
        %v3748 = vadd.f32 %v3505, %v3732
        %v3749 = vadd.f32 %v3506, %v3733
        %v3750 = vadd.f32 %v3507, %v3734
        %v3751 = vadd.f32 %v3508, %v3735
        %v3752 = vadd.f32 %v3509, %v3736
        %v3753 = vadd.f32 %v3510, %v3737
        %v3754 = vadd.f32 %v3511, %v3738
        %v3755 = vadd.f32 %v3512, %v3739
        %v3756 = vadd.f32 %v3513, %v3740
        %v3757 = vmax.f32 %v3741, 0.0
        %v3758 = vmax.f32 %v3742, 0.0
        %v3759 = vmax.f32 %v3743, 0.0
        %v3760 = vmax.f32 %v3744, 0.0
        %v3761 = vmax.f32 %v3745, 0.0
        %v3762 = vmax.f32 %v3746, 0.0
        %v3763 = vmax.f32 %v3747, 0.0
        %v3764 = vmax.f32 %v3748, 0.0
        %v3765 = vmax.f32 %v3749, 0.0
        %v3766 = vmax.f32 %v3750, 0.0
        %v3767 = vmax.f32 %v3751, 0.0
        %v3768 = vmax.f32 %v3752, 0.0
        %v3769 = vmax.f32 %v3753, 0.0
        %v3770 = vmax.f32 %v3754, 0.0
        %v3771 = vmax.f32 %v3755, 0.0
        %v3772 = vmax.f32 %v3756, 0.0
        %v3773 = vpack.c.bf16 %v3758, %v3757
        %v3774 = vpack.c.bf16 %v3760, %v3759
        %v3775 = vpack.c.bf16 %v3762, %v3761
        %v3776 = vpack.c.bf16 %v3764, %v3763
        %v3777 = vpack.c.bf16 %v3766, %v3765
        %v3778 = vpack.c.bf16 %v3768, %v3767
        %v3779 = vpack.c.bf16 %v3770, %v3769
        %v3780 = vpack.c.bf16 %v3772, %v3771
        %v3789 = vunpack.c.l.b16 %v3773
        %v3790 = vunpack.c.h.b16 %v3773
        %v3791 = vunpack.c.l.b16 %v3774
        %v3792 = vunpack.c.h.b16 %v3774
        %v3793 = vunpack.c.l.b16 %v3775
        %v3794 = vunpack.c.h.b16 %v3775
        %v3795 = vunpack.c.l.b16 %v3776
        %v3796 = vunpack.c.h.b16 %v3776
        %v3797 = vunpack.c.l.b16 %v3777
        %v3798 = vunpack.c.h.b16 %v3777
        %v3799 = vunpack.c.l.b16 %v3778
        %v3800 = vunpack.c.h.b16 %v3778
        %v3801 = vunpack.c.l.b16 %v3779
        %v3802 = vunpack.c.h.b16 %v3779
        %v3803 = vunpack.c.l.b16 %v3780
        %v3804 = vunpack.c.h.b16 %v3780
        %v3805 = vpack.c.b16 %v3789, %v3789
        %v3806 = vpack.c.b16 %v3790, %v3790
        %v3807 = vpack.c.b16 %v3791, %v3791
        %v3808 = vpack.c.b16 %v3792, %v3792
        %v3809 = vpack.c.b16 %v3793, %v3793
        %v3810 = vpack.c.b16 %v3794, %v3794
        %v3811 = vpack.c.b16 %v3795, %v3795
        %v3812 = vpack.c.b16 %v3796, %v3796
        %v3813 = vpack.c.b16 %v3797, %v3797
        %v3814 = vpack.c.b16 %v3798, %v3798
        %v3815 = vpack.c.b16 %v3799, %v3799
        %v3816 = vpack.c.b16 %v3800, %v3800
        %v3817 = vpack.c.b16 %v3801, %v3801
        %v3818 = vpack.c.b16 %v3802, %v3802
        %v3819 = vpack.c.b16 %v3803, %v3803
        %v3820 = vpack.c.b16 %v3804, %v3804
        %3837 = vst [vmem:[%s232] sm:$0xf] %v3805
        %3838 = vst [vmem:[%s232 + $0x4] sm:$0xf] %v3806
        %3839 = vst [vmem:[%s232 + $0x8] sm:$0xf] %v3807
        %3840 = vst [vmem:[%s232 + $0xc] sm:$0xf] %v3808
        %3841 = vst [vmem:[%s232 + $0x10] sm:$0xf] %v3809
        %3842 = vst [vmem:[%s232 + $0x14] sm:$0xf] %v3810
        %3843 = vst [vmem:[%s232 + $0x18] sm:$0xf] %v3811
        %3844 = vst [vmem:[%s232 + $0x1c] sm:$0xf] %v3812
        %3845 = vst [vmem:[%s232 + $0x20] sm:$0xf] %v3813
        %3846 = vst [vmem:[%s232 + $0x24] sm:$0xf] %v3814
        %3847 = vst [vmem:[%s232 + $0x28] sm:$0xf] %v3815
        %3848 = vst [vmem:[%s232 + $0x2c] sm:$0xf] %v3816
        %3849 = vst [vmem:[%s232 + $0x30] sm:$0xf] %v3817
        %3850 = vst [vmem:[%s232 + $0x34] sm:$0xf] %v3818
        %3851 = vst [vmem:[%s232 + $0x38] sm:$0xf] %v3819
        %3852 = vst [vmem:[%s232 + $0x3c] sm:$0xf] %v3820
        %s3853 = sand.u32 %s138, 1
        %s3854 = scalar_lea.sflag [#allocation4], %s3853
        %s3855 = sand.u32 %s138, 1
        %s3856 = smul.addr %s3855, 64
        %s3857 = scalar_lea.vmem [#allocation5], %s3856
        // Predicated region
        $region45: #{tpu_custom_call.1} parent=39 // pred_check
          %p3858 = pneg %p148
        $region46: #{tpu_custom_call.1} parent=39 // pred_check_branch
          %3860 = sbr.rel (%p3858) target = $region48
        $region47: #{tpu_custom_call.1} parent=39 // pred_region
          %s3862 = ssub.s32 1024, 1024
          %3863 = vsyncadd %s3854, %s3862
          %s3864 = smul.addr %s20, 16
          %s3865 = smul.addr %s3864, 64
          %s3866 = scalar_lea.hbm %s5, %s3865
          %s3867 = sshll.u32 %s3857, 4
          %s3868 = int_to_ptr.vmem [resolvable:$true] %s3867
          %3873 = dma.vmem_to_hbm [thread:$0]  %s3868, 1024, %s3866, %s3854, 64, 64, 4
        $region48: #{tpu_custom_call.1} parent=39 // pred_fallthru
          _
      $region40: #{tpu_custom_call.1} parent=5 // pred_fallthru
        _
      %p3874 = scmp.le.s32.totalorder 2, %s15
      // Predicated region
      $region49: #{tpu_custom_call.1} parent=5 // pred_check
        %p3875 = pneg %p3874
      $region50: #{tpu_custom_call.1} parent=5 // pred_check_branch
        %3877 = sbr.rel (%p3875) target = $region52
      $region51: #{tpu_custom_call.1} parent=5 // pred_region
        %s3878 = ssub.s32 %s15, 2
        // Predicated region
        $region53: #{tpu_custom_call.1} parent=51 // pred_check
          %p3879 = pneg %p154
        $region54: #{tpu_custom_call.1} parent=51 // pred_check_branch
          %3881 = sbr.rel (%p3879) target = $region56
        $region55: #{tpu_custom_call.1} parent=51 // pred_region
          %s3882 = sand.u32 %s139, 1
          %s3883 = scalar_lea.sflag [#allocation4], %s3882
          %s3884 = sand.u32 %s139, 1
          %s3885 = smul.addr %s3884, 64
          %s3886 = scalar_lea.vmem [#allocation5], %s3885
          %3887 = dma.done %s3883, 1024
        $region56: #{tpu_custom_call.1} parent=51 // pred_fallthru
          _
      $region52: #{tpu_custom_call.1} parent=5 // pred_fallthru
        _
    $region6: #{tpu_custom_call.1} parent=1 // loop_footer
      %s19 = sadd.s32 1, %s15
    $region7: #{tpu_custom_call.1} parent=1 // loop_footer_branch
      %14 = sbr.rel target = $region3
    $region8: #{tpu_custom_call.1} parent=1 // loop_exit
      _
    %3888 = vsyncpa [#allocation3], 1
    %s3889 = scalar_lea.sflag [#allocation3], 1
    %3890 = vsyncpa %s3889, 1
    %3891 = vsyncpa [#allocation4], 1
    %s3892 = scalar_lea.sflag [#allocation4], 1
    %3893 = vsyncpa %s3892, 1

</llo_original>
